<compile_context>
chip_gen: v6e
topology: v6e:2x2x1
jax: 0.10.0
libtpu: 0.0.40
codegen_flags: <defaults>
</compile_context>

<pallas_src>
import functools

import jax
import jax.numpy as jnp
from jax.experimental import pallas as pl
from jax.experimental.pallas import tpu as pltpu


# ----------------------------------------------------------------------------
# 3x3 "same" convolution: one K=9*Cin MXU matmul per (batch, spatial-tile).
# ----------------------------------------------------------------------------
def _conv3x3_kernel(p_ref, w_ref, b_ref, o_ref):
    # p_ref: (1, TM, 9*Cin) collapsed shifted-tap patches
    # w_ref: (9*Cin, Cout)
    # b_ref: (1, Cout)
    # o_ref: (1, TM, Cout)
    o_ref[0] = (
        jnp.dot(p_ref[0], w_ref[...], preferred_element_type=jnp.float32)
        + b_ref[...]
    )


def conv3x3_same(x, w, b, *, tm=512):
    """x: (B,H,W,Cin) NHWC, w: (3,3,Cin,Cout) HWIO, b: (Cout,) -> (B,H,W,Cout)."""
    B, H, W, Cin = x.shape
    Cout = w.shape[-1]
    HW = H * W
    K = 9 * Cin

    # Collapsed im2col: (B, HW, 9*Cin), tap-major / Cin-minor, which matches
    # w.reshape(9*Cin, Cout).  This is the only materialized patch copy.
    xp = jnp.pad(x, ((0, 0), (1, 1), (1, 1), (0, 0)))
    taps = [xp[:, dy:dy + H, dx:dx + W, :] for dy in range(3) for dx in range(3)]
    patches = jnp.concatenate(taps, axis=-1).reshape(B, HW, K)
    wf = w.reshape(K, Cout)
    bf = b.reshape(1, Cout)

    tm = min(tm, HW)
    assert HW % tm == 0 and (tm % 8 == 0 or tm == HW), (HW, tm)
    grid = (B, HW // tm)

    out = pl.pallas_call(
        _conv3x3_kernel,
        out_shape=jax.ShapeDtypeStruct((B, HW, Cout), jnp.float32),
        grid=grid,
        in_specs=[
            pl.BlockSpec((1, tm, K), lambda i, j: (i, j, 0)),
            pl.BlockSpec((K, Cout), lambda i, j: (0, 0)),
            pl.BlockSpec((1, Cout), lambda i, j: (0, 0)),
        ],
        out_specs=pl.BlockSpec((1, tm, Cout), lambda i, j: (i, j, 0)),
        compiler_params=pltpu.CompilerParams(
            dimension_semantics=("parallel", "parallel"),
            vmem_limit_bytes=32 << 20,
        ),
    )(patches, wf, bf)
    return out.reshape(B, H, W, Cout)


# ----------------------------------------------------------------------------
# Distillation loss: sigmoid / channel-mean MSE / KL(softmax || log_softmax).
# Data layout (C, n_pos): channels on sublanes, positions lane-dense.
# Tiled reduction over positions, accumulated in the resident (1,1) output.
# ----------------------------------------------------------------------------
def _loss_kernel(s_ref, t_ref, o_ref, *, inv_temp, inv_n_pos):
    pid = pl.program_id(0)

    @pl.when(pid == 0)
    def _init():
        o_ref[...] = jnp.zeros_like(o_ref)

    c = s_ref.shape[0]
    inv_c = 1.0 / c

    # sigmoid(x / T) via EUP exp + approx reciprocal (frees VALU slots).
    ps = pl.reciprocal(1.0 + jnp.exp(-s_ref[...] * inv_temp), approx=True)
    pt = pl.reciprocal(1.0 + jnp.exp(-t_ref[...] * inv_temp), approx=True)

    # Channel reductions: unrolled adds/maxes over the small sublane axis.
    sum_s, sum_t = ps[0:1, :], pt[0:1, :]
    max_s, max_t = ps[0:1, :], pt[0:1, :]
    for i in range(1, c):
        sum_s = sum_s + ps[i:i + 1, :]
        sum_t = sum_t + pt[i:i + 1, :]
        max_s = jnp.maximum(max_s, ps[i:i + 1, :])
        max_t = jnp.maximum(max_t, pt[i:i + 1, :])

    # loss_AT partial: sum over this tile of (mean_c ps - mean_c pt)^2
    diff = (sum_s - sum_t) * inv_c
    at_part = jnp.sum(diff * diff, keepdims=True)                      # (1, 1)

    # log_softmax(ps) and softmax(pt) over channels (axis 0).
    zs = ps - max_s
    zt = pt - max_t
    es = jnp.exp(zs)
    et = jnp.exp(zt)
    sum_es, sum_et = es[0:1, :], et[0:1, :]
    for i in range(1, c):
        sum_es = sum_es + es[i:i + 1, :]
        sum_et = sum_et + et[i:i + 1, :]
    log_s = zs - jnp.log(sum_es)
    log_t = zt - jnp.log(sum_et)

    # KL per position: sum_c softmax(pt)_c * (log_t_c - log_s_c)
    #                = (1/sum_et) * sum_c et_c * (log_t_c - log_s_c)
    inner = et * (log_t - log_s)
    inner_sum = inner[0:1, :]
    for i in range(1, c):
        inner_sum = inner_sum + inner[i:i + 1, :]
    kl_part = jnp.sum(inner_sum * pl.reciprocal(sum_et, approx=True),
                      keepdims=True)                                   # (1, 1)

    o_ref[...] += at_part + kl_part

    @pl.when(pid == pl.num_programs(0) - 1)
    def _finalize():
        o_ref[...] = o_ref[...] * inv_n_pos


def distill_loss_pallas(cim_out, at, temperature, *, tile=2048):
    B, H, W, C = cim_out.shape
    n_pos = B * H * W
    # Lane-dense layout: channels on sublanes, positions on lanes.
    s = cim_out.reshape(n_pos, C).T                                    # (C, n_pos)
    t = at.reshape(n_pos, C).T                                         # (C, n_pos)

    tile = min(tile, n_pos)
    assert n_pos % tile == 0 and (tile % 128 == 0 or tile == n_pos), (n_pos, tile)

    kernel = functools.partial(
        _loss_kernel,
        inv_temp=1.0 / float(temperature),
        inv_n_pos=1.0 / float(n_pos),
    )
    out = pl.pallas_call(
        kernel,
        out_shape=jax.ShapeDtypeStruct((1, 1), jnp.float32),
        grid=(n_pos // tile,),
        in_specs=[
            pl.BlockSpec((C, tile), lambda i: (0, i)),
            pl.BlockSpec((C, tile), lambda i: (0, i)),
        ],
        out_specs=pl.BlockSpec((1, 1), lambda i: (0, 0)),
        compiler_params=pltpu.CompilerParams(
            dimension_semantics=("arbitrary",),
            vmem_limit_bytes=32 << 20,
        ),
    )(s, t)
    return out[0, 0]


# ----------------------------------------------------------------------------
# Bilinear x8 upsample (align_corners=True) as separable interpolation (glue).
# ----------------------------------------------------------------------------
def _interp_matrix(n_in, n_out, dtype=jnp.float32):
    if n_in == 1:
        return jnp.ones((n_out, 1), dtype)
    src = jnp.arange(n_out, dtype=jnp.float32) * (n_in - 1) / (n_out - 1)
    i0 = jnp.clip(jnp.floor(src).astype(jnp.int32), 0, n_in - 2)
    frac = src - i0.astype(jnp.float32)
    rows = jnp.arange(n_out)
    m = jnp.zeros((n_out, n_in), dtype)
    m = m.at[rows, i0].add(1.0 - frac)
    m = m.at[rows, i0 + 1].add(frac)
    return m


def upsample8_bilinear(x):
    """x: (B,H,W,C) -> (B,8H,8W,C), bilinear, align_corners=True (glue)."""
    B, H, W, C = x.shape
    mh = _interp_matrix(H, 8 * H)
    mw = _interp_matrix(W, 8 * W)
    return jnp.einsum('Hh,Ww,bhwc->bHWc', mh, mw, x)


# ----------------------------------------------------------------------------
# Module parameters + forward
# ----------------------------------------------------------------------------
def init_params(key, in_dim, out_dim):
    ks = jax.random.split(key, 8)

    def conv_init(kw, kb, cin, cout):
        w = 0.2 * jax.random.normal(kw, (3, 3, cin, cout), jnp.float32)
        b = 0.05 * jax.random.normal(kb, (cout,), jnp.float32)
        return w, b

    w_rgb, b_rgb = conv_init(ks[0], ks[1], in_dim, out_dim)
    w_dep, b_dep = conv_init(ks[2], ks[3], in_dim, out_dim)
    w_ful2, b_ful2 = conv_init(ks[4], ks[5], 2 * out_dim, out_dim)
    w_out, b_out = conv_init(ks[6], ks[7], out_dim, out_dim)
    return dict(w_rgb=w_rgb, b_rgb=b_rgb, w_dep=w_dep, b_dep=b_dep,
                w_ful2=w_ful2, b_ful2=b_ful2, w_out=w_out, b_out=b_out)


def distill_klml3_forward(params, rgb, dep, at, T):
    x_rgb = conv3x3_same(rgb, params['w_rgb'], params['b_rgb'])
    x_dep = conv3x3_same(dep, params['w_dep'], params['b_dep'])
    # torch.cat([up(x_dep), up(x_rgb)], dim=1) -> channel concat, dep first
    mm_cat2 = jnp.concatenate(
        [upsample8_bilinear(x_dep), upsample8_bilinear(x_rgb)], axis=-1)
    ful2 = conv3x3_same(mm_cat2, params['w_ful2'], params['b_ful2'])
    cim_out = conv3x3_same(ful2, params['w_out'], params['b_out'])
    return distill_loss_pallas(cim_out, at, T)


# ----------------------------------------------------------------------------
# Pure-JAX reference (for correctness check of the Pallas kernels)
# ----------------------------------------------------------------------------
def _conv3x3_ref(x, w, b):
    y = jax.lax.conv_general_dilated(
        x, w, window_strides=(1, 1), padding='SAME',
        dimension_numbers=('NHWC', 'HWIO', 'NHWC'))
    return y + b


def distill_klml3_ref(params, rgb, dep, at, T):
    x_rgb = _conv3x3_ref(rgb, params['w_rgb'], params['b_rgb'])
    x_dep = _conv3x3_ref(dep, params['w_dep'], params['b_dep'])
    mm_cat2 = jnp.concatenate(
        [upsample8_bilinear(x_dep), upsample8_bilinear(x_rgb)], axis=-1)
    cim_out = _conv3x3_ref(_conv3x3_ref(mm_cat2, params['w_ful2'],
                                        params['b_ful2']),
                           params['w_out'], params['b_out'])
    ps = jax.nn.sigmoid(cim_out / T)
    pt = jax.nn.sigmoid(at / T)
    loss_at = jnp.mean((ps.mean(axis=-1) - pt.mean(axis=-1)) ** 2)
    log_s = jax.nn.log_softmax(ps, axis=-1)
    soft_t = jax.nn.softmax(pt, axis=-1)
    kl = jnp.sum(soft_t * (jnp.log(soft_t) - log_s))
    n_pos = ps.size // ps.shape[-1]
    return loss_at + kl / n_pos


if __name__ == "__main__":
    key = jax.random.PRNGKey(0)
    T = 4.0
    in_dim, out_dim = 4, 4
    B, H, W = 2, 8, 8              # spatial 8 -> upsampled 64x64
    Ho, Wo = 8 * H, 8 * W

    k0, k1, k2, k3 = jax.random.split(key, 4)
    rgb = jax.random.normal(k0, (B, H, W, in_dim), jnp.float32)
    dep = jax.random.normal(k1, (B, H, W, in_dim), jnp.float32)
    at = jax.random.normal(k2, (B, Ho, Wo, out_dim), jnp.float32)
    params = init_params(k3, in_dim, out_dim)

    fwd = jax.jit(distill_klml3_forward, static_argnums=(4,))
    loss = fwd(params, rgb, dep, at, T)
    loss = jax.block_until_ready(loss)

    ref = distill_klml3_ref(params, rgb, dep, at, T)
    assert bool(jnp.isfinite(loss)), "loss is not finite"
    err = abs(float(loss) - float(ref))
    assert err <= 2e-3 * max(1.0, abs(float(ref))), \
        f"mismatch: pallas={float(loss)} ref={float(ref)}"
    print("KERNEL_OK")
</pallas_src>

<mosaic_0001>
module attributes {stable_mosaic.version = 11 : i64} {
  func.func private @main(%arg0: i32) attributes {dimension_semantics = [#tpu.dimension_semantics<core_parallel>], iteration_bounds = array<i64: 2>, tpu.core_type = #tpu.core_type<sc_scalar_subcore>, window_params = []} {
    return
  }
}

module attributes {stable_mosaic.version = 11 : i64} {
  func.func private @main(%arg0: i32) attributes {dimension_semantics = [#tpu.dimension_semantics<core_parallel>], iteration_bounds = array<i64: 2>, tpu.core_type = #tpu.core_type<sc_scalar_subcore>, window_params = []} {
    return
  }
}

module attributes {stable_mosaic.version = 11 : i64} {
  func.func @_conv3x3_kernel(%arg0: i32, %arg1: i32, %arg2: memref<1x64x36xf32, #tpu.memory_space<vmem>>, %arg3: memref<36x4xf32, #tpu.memory_space<vmem>>, %arg4: memref<1x4xf32, #tpu.memory_space<vmem>>, %arg5: memref<1x64x4xf32, #tpu.memory_space<vmem>>) attributes {dimension_semantics = [#tpu.dimension_semantics<parallel>, #tpu.dimension_semantics<parallel>], iteration_bounds = array<i64: 2, 1>, scalar_prefetch = 0 : i64, scratch_operands = 0 : i64, tpu.core_type = #tpu.core_type<tc>, window_params = [{transform_indices = @transform_0, window_bounds = array<i64: 1, 64, 36>}, {pipeline_mode = #tpu.pipeline_mode<synchronous>, transform_indices = @transform_1, window_bounds = array<i64: 36, 4>}, {pipeline_mode = #tpu.pipeline_mode<synchronous>, transform_indices = @transform_2, window_bounds = array<i64: 1, 4>}, {transform_indices = @transform_3, window_bounds = array<i64: 1, 64, 4>}]} {
    %c0 = arith.constant 0 : index
    %c0_0 = arith.constant 0 : index
    %c0_1 = arith.constant 0 : index
    %0 = vector.load %arg2[%c0, %c0_0, %c0_1] : memref<1x64x36xf32, #tpu.memory_space<vmem>>, vector<1x64x36xf32>
    %1 = vector.shape_cast %0 : vector<1x64x36xf32> to vector<64x36xf32>
    %c0_2 = arith.constant 0 : index
    %c0_3 = arith.constant 0 : index
    %2 = vector.load %arg3[%c0_2, %c0_3] : memref<36x4xf32, #tpu.memory_space<vmem>>, vector<36x4xf32>
    %cst = arith.constant dense<0.000000e+00> : vector<64x4xf32>
    %3 = tpu.matmul %1, %2, %cst {dimension_numbers = #tpu.dot_dimension_numbers<[1], [0], [0], [1], [0, 0, 1, 1], [], []>} : vector<64x36xf32>, vector<36x4xf32>, vector<64x4xf32> -> vector<64x4xf32>
    %c0_4 = arith.constant 0 : index
    %c0_5 = arith.constant 0 : index
    %4 = vector.load %arg4[%c0_4, %c0_5] : memref<1x4xf32, #tpu.memory_space<vmem>>, vector<1x4xf32>
    %5 = vector.broadcast %4 : vector<1x4xf32> to vector<64x4xf32>
    %6 = arith.addf %3, %5 : vector<64x4xf32>
    %c0_6 = arith.constant 0 : index
    %c0_7 = arith.constant 0 : index
    %c0_8 = arith.constant 0 : index
    %7 = vector.load %arg5[%c0_6, %c0_7, %c0_8] : memref<1x64x4xf32, #tpu.memory_space<vmem>>, vector<1x64x4xf32>
    %8 = vector.shape_cast %7 : vector<1x64x4xf32> to vector<64x4xf32>
    %9 = vector.shape_cast %6 : vector<64x4xf32> to vector<1x64x4xf32>
    tpu.vector_store %arg5[%c0_6, %c0_7, %c0_8], %9 {strides = array<i32>} : memref<1x64x4xf32, #tpu.memory_space<vmem>>, vector<1x64x4xf32>,
    return
  }
  func.func @transform_0(%arg0: i32, %arg1: i32) -> (i32, i32, i32) {
    %c0_i32 = arith.constant 0 : i32
    %c0_i32_0 = arith.constant 0 : i32
    return %arg0, %arg1, %c0_i32 : i32, i32, i32
  }
  func.func @transform_1(%arg0: i32, %arg1: i32) -> (i32, i32) {
    %c0_i32 = arith.constant 0 : i32
    %c0_i32_0 = arith.constant 0 : i32
    %c0_i32_1 = arith.constant 0 : i32
    return %c0_i32, %c0_i32_0 : i32, i32
  }
  func.func @transform_2(%arg0: i32, %arg1: i32) -> (i32, i32) {
    %c0_i32 = arith.constant 0 : i32
    %c0_i32_0 = arith.constant 0 : i32
    %c0_i32_1 = arith.constant 0 : i32
    return %c0_i32, %c0_i32_0 : i32, i32
  }
  func.func @transform_3(%arg0: i32, %arg1: i32) -> (i32, i32, i32) {
    %c0_i32 = arith.constant 0 : i32
    %c0_i32_0 = arith.constant 0 : i32
    return %arg0, %arg1, %c0_i32 : i32, i32, i32
  }
}

module attributes {stable_mosaic.version = 11 : i64} {
  func.func @_conv3x3_kernel(%arg0: i32, %arg1: i32, %arg2: memref<1x512x72xf32, #tpu.memory_space<vmem>>, %arg3: memref<72x4xf32, #tpu.memory_space<vmem>>, %arg4: memref<1x4xf32, #tpu.memory_space<vmem>>, %arg5: memref<1x512x4xf32, #tpu.memory_space<vmem>>) attributes {dimension_semantics = [#tpu.dimension_semantics<parallel>, #tpu.dimension_semantics<parallel>], iteration_bounds = array<i64: 2, 8>, scalar_prefetch = 0 : i64, scratch_operands = 0 : i64, tpu.core_type = #tpu.core_type<tc>, window_params = [{transform_indices = @transform_0, window_bounds = array<i64: 1, 512, 72>}, {pipeline_mode = #tpu.pipeline_mode<synchronous>, transform_indices = @transform_1, window_bounds = array<i64: 72, 4>}, {pipeline_mode = #tpu.pipeline_mode<synchronous>, transform_indices = @transform_2, window_bounds = array<i64: 1, 4>}, {transform_indices = @transform_3, window_bounds = array<i64: 1, 512, 4>}]} {
    %c0 = arith.constant 0 : index
    %c0_0 = arith.constant 0 : index
    %c0_1 = arith.constant 0 : index
    %0 = vector.load %arg2[%c0, %c0_0, %c0_1] : memref<1x512x72xf32, #tpu.memory_space<vmem>>, vector<1x512x72xf32>
    %1 = vector.shape_cast %0 : vector<1x512x72xf32> to vector<512x72xf32>
    %c0_2 = arith.constant 0 : index
    %c0_3 = arith.constant 0 : index
    %2 = vector.load %arg3[%c0_2, %c0_3] : memref<72x4xf32, #tpu.memory_space<vmem>>, vector<72x4xf32>
    %cst = arith.constant dense<0.000000e+00> : vector<512x4xf32>
    %3 = tpu.matmul %1, %2, %cst {dimension_numbers = #tpu.dot_dimension_numbers<[1], [0], [0], [1], [0, 0, 1, 1], [], []>} : vector<512x72xf32>, vector<72x4xf32>, vector<512x4xf32> -> vector<512x4xf32>
    %c0_4 = arith.constant 0 : index
    %c0_5 = arith.constant 0 : index
    %4 = vector.load %arg4[%c0_4, %c0_5] : memref<1x4xf32, #tpu.memory_space<vmem>>, vector<1x4xf32>
    %5 = vector.broadcast %4 : vector<1x4xf32> to vector<512x4xf32>
    %6 = arith.addf %3, %5 : vector<512x4xf32>
    %c0_6 = arith.constant 0 : index
    %c0_7 = arith.constant 0 : index
    %c0_8 = arith.constant 0 : index
    %7 = vector.load %arg5[%c0_6, %c0_7, %c0_8] : memref<1x512x4xf32, #tpu.memory_space<vmem>>, vector<1x512x4xf32>
    %8 = vector.shape_cast %7 : vector<1x512x4xf32> to vector<512x4xf32>
    %9 = vector.shape_cast %6 : vector<512x4xf32> to vector<1x512x4xf32>
    tpu.vector_store %arg5[%c0_6, %c0_7, %c0_8], %9 {strides = array<i32>} : memref<1x512x4xf32, #tpu.memory_space<vmem>>, vector<1x512x4xf32>,
    return
  }
  func.func @transform_0(%arg0: i32, %arg1: i32) -> (i32, i32, i32) {
    %c0_i32 = arith.constant 0 : i32
    %c0_i32_0 = arith.constant 0 : i32
    return %arg0, %arg1, %c0_i32 : i32, i32, i32
  }
  func.func @transform_1(%arg0: i32, %arg1: i32) -> (i32, i32) {
    %c0_i32 = arith.constant 0 : i32
    %c0_i32_0 = arith.constant 0 : i32
    %c0_i32_1 = arith.constant 0 : i32
    return %c0_i32, %c0_i32_0 : i32, i32
  }
  func.func @transform_2(%arg0: i32, %arg1: i32) -> (i32, i32) {
    %c0_i32 = arith.constant 0 : i32
    %c0_i32_0 = arith.constant 0 : i32
    %c0_i32_1 = arith.constant 0 : i32
    return %c0_i32, %c0_i32_0 : i32, i32
  }
  func.func @transform_3(%arg0: i32, %arg1: i32) -> (i32, i32, i32) {
    %c0_i32 = arith.constant 0 : i32
    %c0_i32_0 = arith.constant 0 : i32
    return %arg0, %arg1, %c0_i32 : i32, i32, i32
  }
}

module attributes {stable_mosaic.version = 11 : i64} {
  func.func @_conv3x3_kernel(%arg0: i32, %arg1: i32, %arg2: memref<1x512x36xf32, #tpu.memory_space<vmem>>, %arg3: memref<36x4xf32, #tpu.memory_space<vmem>>, %arg4: memref<1x4xf32, #tpu.memory_space<vmem>>, %arg5: memref<1x512x4xf32, #tpu.memory_space<vmem>>) attributes {dimension_semantics = [#tpu.dimension_semantics<parallel>, #tpu.dimension_semantics<parallel>], iteration_bounds = array<i64: 2, 8>, scalar_prefetch = 0 : i64, scratch_operands = 0 : i64, tpu.core_type = #tpu.core_type<tc>, window_params = [{transform_indices = @transform_0, window_bounds = array<i64: 1, 512, 36>}, {pipeline_mode = #tpu.pipeline_mode<synchronous>, transform_indices = @transform_1, window_bounds = array<i64: 36, 4>}, {pipeline_mode = #tpu.pipeline_mode<synchronous>, transform_indices = @transform_2, window_bounds = array<i64: 1, 4>}, {transform_indices = @transform_3, window_bounds = array<i64: 1, 512, 4>}]} {
    %c0 = arith.constant 0 : index
    %c0_0 = arith.constant 0 : index
    %c0_1 = arith.constant 0 : index
    %0 = vector.load %arg2[%c0, %c0_0, %c0_1] : memref<1x512x36xf32, #tpu.memory_space<vmem>>, vector<1x512x36xf32>
    %1 = vector.shape_cast %0 : vector<1x512x36xf32> to vector<512x36xf32>
    %c0_2 = arith.constant 0 : index
    %c0_3 = arith.constant 0 : index
    %2 = vector.load %arg3[%c0_2, %c0_3] : memref<36x4xf32, #tpu.memory_space<vmem>>, vector<36x4xf32>
    %cst = arith.constant dense<0.000000e+00> : vector<512x4xf32>
    %3 = tpu.matmul %1, %2, %cst {dimension_numbers = #tpu.dot_dimension_numbers<[1], [0], [0], [1], [0, 0, 1, 1], [], []>} : vector<512x36xf32>, vector<36x4xf32>, vector<512x4xf32> -> vector<512x4xf32>
    %c0_4 = arith.constant 0 : index
    %c0_5 = arith.constant 0 : index
    %4 = vector.load %arg4[%c0_4, %c0_5] : memref<1x4xf32, #tpu.memory_space<vmem>>, vector<1x4xf32>
    %5 = vector.broadcast %4 : vector<1x4xf32> to vector<512x4xf32>
    %6 = arith.addf %3, %5 : vector<512x4xf32>
    %c0_6 = arith.constant 0 : index
    %c0_7 = arith.constant 0 : index
    %c0_8 = arith.constant 0 : index
    %7 = vector.load %arg5[%c0_6, %c0_7, %c0_8] : memref<1x512x4xf32, #tpu.memory_space<vmem>>, vector<1x512x4xf32>
    %8 = vector.shape_cast %7 : vector<1x512x4xf32> to vector<512x4xf32>
    %9 = vector.shape_cast %6 : vector<512x4xf32> to vector<1x512x4xf32>
    tpu.vector_store %arg5[%c0_6, %c0_7, %c0_8], %9 {strides = array<i32>} : memref<1x512x4xf32, #tpu.memory_space<vmem>>, vector<1x512x4xf32>,
    return
  }
  func.func @transform_0(%arg0: i32, %arg1: i32) -> (i32, i32, i32) {
    %c0_i32 = arith.constant 0 : i32
    %c0_i32_0 = arith.constant 0 : i32
    return %arg0, %arg1, %c0_i32 : i32, i32, i32
  }
  func.func @transform_1(%arg0: i32, %arg1: i32) -> (i32, i32) {
    %c0_i32 = arith.constant 0 : i32
    %c0_i32_0 = arith.constant 0 : i32
    %c0_i32_1 = arith.constant 0 : i32
    return %c0_i32, %c0_i32_0 : i32, i32
  }
  func.func @transform_2(%arg0: i32, %arg1: i32) -> (i32, i32) {
    %c0_i32 = arith.constant 0 : i32
    %c0_i32_0 = arith.constant 0 : i32
    %c0_i32_1 = arith.constant 0 : i32
    return %c0_i32, %c0_i32_0 : i32, i32
  }
  func.func @transform_3(%arg0: i32, %arg1: i32) -> (i32, i32, i32) {
    %c0_i32 = arith.constant 0 : i32
    %c0_i32_0 = arith.constant 0 : i32
    return %arg0, %arg1, %c0_i32 : i32, i32, i32
  }
}

module attributes {stable_mosaic.version = 11 : i64} {
  func.func @_loss_kernel(%arg0: i32, %arg1: memref<4x2048xf32, #tpu.memory_space<vmem>>, %arg2: memref<4x2048xf32, #tpu.memory_space<vmem>>, %arg3: memref<1x1xf32, #tpu.memory_space<vmem>>) attributes {dimension_semantics = [#tpu.dimension_semantics<arbitrary>], iteration_bounds = array<i64: 4>, scalar_prefetch = 0 : i64, scratch_operands = 0 : i64, tpu.core_type = #tpu.core_type<tc>, window_params = [{transform_indices = @transform_0, window_bounds = array<i64: 4, 2048>}, {transform_indices = @transform_1, window_bounds = array<i64: 4, 2048>}, {pipeline_mode = #tpu.pipeline_mode<synchronous>, transform_indices = @transform_2, window_bounds = array<i64: 1, 1>}]} {
    %c0_i32 = arith.constant 0 : i32
    %0 = arith.cmpi eq, %arg0, %c0_i32 : i32
    %1 = arith.extui %0 : i1 to i32
    %c0_i32_0 = arith.constant 0 : i32
    %2 = arith.cmpi ne, %1, %c0_i32_0 : i32
    scf.if %2 {
      %cst_17 = arith.constant 0.000000e+00 : f32
      %107 = vector.broadcast %cst_17 : f32 to vector<1x1xf32>
      %c0_18 = arith.constant 0 : index
      %c0_19 = arith.constant 0 : index
      %108 = vector.load %arg3[%c0_18, %c0_19] : memref<1x1xf32, #tpu.memory_space<vmem>>, vector<1x1xf32>
      tpu.vector_store %arg3[%c0_18, %c0_19], %107 {strides = array<i32>} : memref<1x1xf32, #tpu.memory_space<vmem>>, vector<1x1xf32>,
    } else {
    }
    %c0 = arith.constant 0 : index
    %c0_1 = arith.constant 0 : index
    %3 = vector.load %arg1[%c0, %c0_1] : memref<4x2048xf32, #tpu.memory_space<vmem>>, vector<4x2048xf32>
    %cst = arith.constant 0.000000e+00 : f32
    %4 = vector.broadcast %cst : f32 to vector<4x2048xf32>
    %5 = arith.subf %4, %3 : vector<4x2048xf32>
    %cst_2 = arith.constant 2.500000e-01 : f32
    %6 = vector.broadcast %cst_2 : f32 to vector<4x2048xf32>
    %7 = arith.mulf %5, %6 : vector<4x2048xf32>
    %8 = math.exp %7 : vector<4x2048xf32>
    %cst_3 = arith.constant 1.000000e+00 : f32
    %9 = vector.broadcast %cst_3 : f32 to vector<4x2048xf32>
    %10 = arith.addf %9, %8 : vector<4x2048xf32>
    %11 = tpu.reciprocal %10 {approx = true} : vector<4x2048xf32> -> vector<4x2048xf32>
    %c0_4 = arith.constant 0 : index
    %c0_5 = arith.constant 0 : index
    %12 = vector.load %arg2[%c0_4, %c0_5] : memref<4x2048xf32, #tpu.memory_space<vmem>>, vector<4x2048xf32>
    %cst_6 = arith.constant 0.000000e+00 : f32
    %13 = vector.broadcast %cst_6 : f32 to vector<4x2048xf32>
    %14 = arith.subf %13, %12 : vector<4x2048xf32>
    %cst_7 = arith.constant 2.500000e-01 : f32
    %15 = vector.broadcast %cst_7 : f32 to vector<4x2048xf32>
    %16 = arith.mulf %14, %15 : vector<4x2048xf32>
    %17 = math.exp %16 : vector<4x2048xf32>
    %cst_8 = arith.constant 1.000000e+00 : f32
    %18 = vector.broadcast %cst_8 : f32 to vector<4x2048xf32>
    %19 = arith.addf %18, %17 : vector<4x2048xf32>
    %20 = tpu.reciprocal %19 {approx = true} : vector<4x2048xf32> -> vector<4x2048xf32>
    %21 = vector.extract_strided_slice %11 {offsets = [0, 0], sizes = [1, 2048], strides = [1, 1]} : vector<4x2048xf32> to vector<1x2048xf32>
    %22 = vector.extract_strided_slice %20 {offsets = [0, 0], sizes = [1, 2048], strides = [1, 1]} : vector<4x2048xf32> to vector<1x2048xf32>
    %23 = vector.extract_strided_slice %11 {offsets = [0, 0], sizes = [1, 2048], strides = [1, 1]} : vector<4x2048xf32> to vector<1x2048xf32>
    %24 = vector.extract_strided_slice %20 {offsets = [0, 0], sizes = [1, 2048], strides = [1, 1]} : vector<4x2048xf32> to vector<1x2048xf32>
    %25 = vector.extract_strided_slice %11 {offsets = [1, 0], sizes = [1, 2048], strides = [1, 1]} : vector<4x2048xf32> to vector<1x2048xf32>
    %26 = arith.addf %21, %25 : vector<1x2048xf32>
    %27 = vector.extract_strided_slice %20 {offsets = [1, 0], sizes = [1, 2048], strides = [1, 1]} : vector<4x2048xf32> to vector<1x2048xf32>
    %28 = arith.addf %22, %27 : vector<1x2048xf32>
    %29 = vector.extract_strided_slice %11 {offsets = [1, 0], sizes = [1, 2048], strides = [1, 1]} : vector<4x2048xf32> to vector<1x2048xf32>
    %30 = arith.maximumf %23, %29 : vector<1x2048xf32>
    %31 = vector.extract_strided_slice %20 {offsets = [1, 0], sizes = [1, 2048], strides = [1, 1]} : vector<4x2048xf32> to vector<1x2048xf32>
    %32 = arith.maximumf %24, %31 : vector<1x2048xf32>
    %33 = vector.extract_strided_slice %11 {offsets = [2, 0], sizes = [1, 2048], strides = [1, 1]} : vector<4x2048xf32> to vector<1x2048xf32>
    %34 = arith.addf %26, %33 : vector<1x2048xf32>
    %35 = vector.extract_strided_slice %20 {offsets = [2, 0], sizes = [1, 2048], strides = [1, 1]} : vector<4x2048xf32> to vector<1x2048xf32>
    %36 = arith.addf %28, %35 : vector<1x2048xf32>
    %37 = vector.extract_strided_slice %11 {offsets = [2, 0], sizes = [1, 2048], strides = [1, 1]} : vector<4x2048xf32> to vector<1x2048xf32>
    %38 = arith.maximumf %30, %37 : vector<1x2048xf32>
    %39 = vector.extract_strided_slice %20 {offsets = [2, 0], sizes = [1, 2048], strides = [1, 1]} : vector<4x2048xf32> to vector<1x2048xf32>
    %40 = arith.maximumf %32, %39 : vector<1x2048xf32>
    %41 = vector.extract_strided_slice %11 {offsets = [3, 0], sizes = [1, 2048], strides = [1, 1]} : vector<4x2048xf32> to vector<1x2048xf32>
    %42 = arith.addf %34, %41 : vector<1x2048xf32>
    %43 = vector.extract_strided_slice %20 {offsets = [3, 0], sizes = [1, 2048], strides = [1, 1]} : vector<4x2048xf32> to vector<1x2048xf32>
    %44 = arith.addf %36, %43 : vector<1x2048xf32>
    %45 = vector.extract_strided_slice %11 {offsets = [3, 0], sizes = [1, 2048], strides = [1, 1]} : vector<4x2048xf32> to vector<1x2048xf32>
    %46 = arith.maximumf %38, %45 : vector<1x2048xf32>
    %47 = vector.extract_strided_slice %20 {offsets = [3, 0], sizes = [1, 2048], strides = [1, 1]} : vector<4x2048xf32> to vector<1x2048xf32>
    %48 = arith.maximumf %40, %47 : vector<1x2048xf32>
    %49 = arith.subf %42, %44 : vector<1x2048xf32>
    %cst_9 = arith.constant 2.500000e-01 : f32
    %50 = vector.broadcast %cst_9 : f32 to vector<1x2048xf32>
    %51 = arith.mulf %49, %50 : vector<1x2048xf32>
    %52 = arith.mulf %51, %51 : vector<1x2048xf32>
    %53 = vector.shape_cast %52 : vector<1x2048xf32> to vector<1x1x2048xf32>
    %cst_10 = arith.constant dense<0.000000e+00> : vector<1xf32>
    %54 = vector.multi_reduction <add>, %53, %cst_10 [1, 2] : vector<1x1x2048xf32> to vector<1xf32>
    %55 = vector.shape_cast %54 : vector<1xf32> to vector<1x1x1xf32>
    %56 = vector.extract %55[0, 0, 0] : f32 from vector<1x1x1xf32>
    %57 = vector.broadcast %56 : f32 to vector<1x1xf32>
    %58 = vector.broadcast %46 : vector<1x2048xf32> to vector<4x2048xf32>
    %59 = arith.subf %11, %58 : vector<4x2048xf32>
    %60 = vector.broadcast %48 : vector<1x2048xf32> to vector<4x2048xf32>
    %61 = arith.subf %20, %60 : vector<4x2048xf32>
    %62 = math.exp %59 : vector<4x2048xf32>
    %63 = math.exp %61 : vector<4x2048xf32>
    %64 = vector.extract_strided_slice %62 {offsets = [0, 0], sizes = [1, 2048], strides = [1, 1]} : vector<4x2048xf32> to vector<1x2048xf32>
    %65 = vector.extract_strided_slice %63 {offsets = [0, 0], sizes = [1, 2048], strides = [1, 1]} : vector<4x2048xf32> to vector<1x2048xf32>
    %66 = vector.extract_strided_slice %62 {offsets = [1, 0], sizes = [1, 2048], strides = [1, 1]} : vector<4x2048xf32> to vector<1x2048xf32>
    %67 = arith.addf %64, %66 : vector<1x2048xf32>
    %68 = vector.extract_strided_slice %63 {offsets = [1, 0], sizes = [1, 2048], strides = [1, 1]} : vector<4x2048xf32> to vector<1x2048xf32>
    %69 = arith.addf %65, %68 : vector<1x2048xf32>
    %70 = vector.extract_strided_slice %62 {offsets = [2, 0], sizes = [1, 2048], strides = [1, 1]} : vector<4x2048xf32> to vector<1x2048xf32>
    %71 = arith.addf %67, %70 : vector<1x2048xf32>
    %72 = vector.extract_strided_slice %63 {offsets = [2, 0], sizes = [1, 2048], strides = [1, 1]} : vector<4x2048xf32> to vector<1x2048xf32>
    %73 = arith.addf %69, %72 : vector<1x2048xf32>
    %74 = vector.extract_strided_slice %62 {offsets = [3, 0], sizes = [1, 2048], strides = [1, 1]} : vector<4x2048xf32> to vector<1x2048xf32>
    %75 = arith.addf %71, %74 : vector<1x2048xf32>
    %76 = vector.extract_strided_slice %63 {offsets = [3, 0], sizes = [1, 2048], strides = [1, 1]} : vector<4x2048xf32> to vector<1x2048xf32>
    %77 = arith.addf %73, %76 : vector<1x2048xf32>
    %78 = math.log %75 : vector<1x2048xf32>
    %79 = vector.broadcast %78 : vector<1x2048xf32> to vector<4x2048xf32>
    %80 = arith.subf %59, %79 : vector<4x2048xf32>
    %81 = math.log %77 : vector<1x2048xf32>
    %82 = vector.broadcast %81 : vector<1x2048xf32> to vector<4x2048xf32>
    %83 = arith.subf %61, %82 : vector<4x2048xf32>
    %84 = arith.subf %83, %80 : vector<4x2048xf32>
    %85 = arith.mulf %63, %84 : vector<4x2048xf32>
    %86 = vector.extract_strided_slice %85 {offsets = [0, 0], sizes = [1, 2048], strides = [1, 1]} : vector<4x2048xf32> to vector<1x2048xf32>
    %87 = vector.extract_strided_slice %85 {offsets = [1, 0], sizes = [1, 2048], strides = [1, 1]} : vector<4x2048xf32> to vector<1x2048xf32>
    %88 = arith.addf %86, %87 : vector<1x2048xf32>
    %89 = vector.extract_strided_slice %85 {offsets = [2, 0], sizes = [1, 2048], strides = [1, 1]} : vector<4x2048xf32> to vector<1x2048xf32>
    %90 = arith.addf %88, %89 : vector<1x2048xf32>
    %91 = vector.extract_strided_slice %85 {offsets = [3, 0], sizes = [1, 2048], strides = [1, 1]} : vector<4x2048xf32> to vector<1x2048xf32>
    %92 = arith.addf %90, %91 : vector<1x2048xf32>
    %93 = tpu.reciprocal %77 {approx = true} : vector<1x2048xf32> -> vector<1x2048xf32>
    %94 = arith.mulf %92, %93 : vector<1x2048xf32>
    %95 = vector.shape_cast %94 : vector<1x2048xf32> to vector<1x1x2048xf32>
    %cst_11 = arith.constant dense<0.000000e+00> : vector<1xf32>
    %96 = vector.multi_reduction <add>, %95, %cst_11 [1, 2] : vector<1x1x2048xf32> to vector<1xf32>
    %97 = vector.shape_cast %96 : vector<1xf32> to vector<1x1x1xf32>
    %98 = vector.extract %97[0, 0, 0] : f32 from vector<1x1x1xf32>
    %99 = vector.broadcast %98 : f32 to vector<1x1xf32>
    %c0_12 = arith.constant 0 : index
    %c0_13 = arith.constant 0 : index
    %100 = vector.load %arg3[%c0_12, %c0_13] : memref<1x1xf32, #tpu.memory_space<vmem>>, vector<1x1xf32>
    %101 = arith.addf %57, %99 : vector<1x1xf32>
    %102 = arith.addf %100, %101 : vector<1x1xf32>
    %c0_14 = arith.constant 0 : index
    %c0_15 = arith.constant 0 : index
    %103 = vector.load %arg3[%c0_14, %c0_15] : memref<1x1xf32, #tpu.memory_space<vmem>>, vector<1x1xf32>
    tpu.vector_store %arg3[%c0_14, %c0_15], %102 {strides = array<i32>} : memref<1x1xf32, #tpu.memory_space<vmem>>, vector<1x1xf32>,
    %c3_i32 = arith.constant 3 : i32
    %104 = arith.cmpi eq, %arg0, %c3_i32 : i32
    %105 = arith.extui %104 : i1 to i32
    %c0_i32_16 = arith.constant 0 : i32
    %106 = arith.cmpi ne, %105, %c0_i32_16 : i32
    scf.if %106 {
      %c0_17 = arith.constant 0 : index
      %c0_18 = arith.constant 0 : index
      %107 = vector.load %arg3[%c0_17, %c0_18] : memref<1x1xf32, #tpu.memory_space<vmem>>, vector<1x1xf32>
      %cst_19 = arith.constant 1.22070313E-4 : f32
      %108 = vector.broadcast %cst_19 : f32 to vector<1x1xf32>
      %109 = arith.mulf %107, %108 : vector<1x1xf32>
      %c0_20 = arith.constant 0 : index
      %c0_21 = arith.constant 0 : index
      %110 = vector.load %arg3[%c0_20, %c0_21] : memref<1x1xf32, #tpu.memory_space<vmem>>, vector<1x1xf32>
      tpu.vector_store %arg3[%c0_20, %c0_21], %109 {strides = array<i32>} : memref<1x1xf32, #tpu.memory_space<vmem>>, vector<1x1xf32>,
    } else {
    }
    return
  }
  func.func @transform_0(%arg0: i32) -> (i32, i32) {
    %c0_i32 = arith.constant 0 : i32
    %c0_i32_0 = arith.constant 0 : i32
    return %c0_i32, %arg0 : i32, i32
  }
  func.func @transform_1(%arg0: i32) -> (i32, i32) {
    %c0_i32 = arith.constant 0 : i32
    %c0_i32_0 = arith.constant 0 : i32
    return %c0_i32, %arg0 : i32, i32
  }
  func.func @transform_2(%arg0: i32) -> (i32, i32) {
    %c0_i32 = arith.constant 0 : i32
    %c0_i32_0 = arith.constant 0 : i32
    %c0_i32_1 = arith.constant 0 : i32
    return %c0_i32, %c0_i32_0 : i32, i32
  }
}

</mosaic_0001>

<llo_original>
// kernel: distill_klml3_forward.6
$region0: #{distill_klml3_forward.6}
  #allocation0 [shape = 'u32[]', space=smem, size = 0x4, offset = 0x4, fixed_abs, tag = 'smem constant byte address 0x4 - core index']
  #allocation1 [shape = 'u32[144,128]{1,0:T(1,128)}', space=vmem, size = 0x12000, scoped, tag = 'internal scratch']
  %s0 = inlined_call_operand.vmem [shape: f32[2,64,36], index: 0, kind: input, shape index: {}]
  %s1 = inlined_call_operand.vmem [shape: f32[36,4], index: 1, kind: input, shape index: {}]
  %s2 = inlined_call_operand.hbm [shape: f32[1,4], index: 2, kind: input, shape index: {}]
  %s3 = inlined_call_operand.vmem [shape: f32[2,64,4], index: 3, kind: output, shape index: {}]
  %s4 = sld [smem:[#allocation0]]
  $region49: #{distill_klml3_forward.6} parent=0
    _
  %s6 = ssub.s32 1, %s4
  %s7 = scalar_select 0, %s6, %s4
  $region1: #{distill_klml3_forward.6} parent=0
    #allocation2 [shape = 'u8[512]{0}', space=vmem, size = 0x400, scoped, tag = 'input window, operand 2, single buffered']
    #allocation3 [shape = 's32[2]{0}', space=sflag, size = 0x8, scoped, tag = 'scoped memory for distill_klml3_forward.6']
    %8 = vsyncpa [#allocation3], 0
    loop: start=0, step=1, limit=4
    $region2: #{distill_klml3_forward.6} parent=1 // loop_pre_header
      _
    $region3: #{distill_klml3_forward.6} parent=1 // loop_header
      %s10 = sphi 0, %s14
      %p11 = scmp.ge.s32.totalorder %s10, 4
      %s17 = sphi 0, %s29
      %s18 = sphi 0, %s25
      %s19 = sphi 0, %s17
      %s20 = sphi 0, %s18
      %s21 = sphi 0, %s19
      %s22 = sphi 0, %s20
      %s34 = sphi 0, %s36
      %s37 = sphi 0, %s34
      %s38 = sphi 0, %s37
      %s54 = sphi 0, %s38
      %s58 = sphi 0, %s58
      %s60 = sphi 0, %s58
      %s61 = sphi 0, %s60
      %s75 = sphi 0, %s61
      %s79 = sphi 0, %s79
      %s81 = sphi 0, %s79
      %s82 = sphi 0, %s81
      %s96 = sphi 0, %s82
      %s104 = sphi 0, %s106
      %s107 = sphi 0, %s104
      %s108 = sphi 0, %s107
      %s124 = sphi 0, %s108
    $region4: #{distill_klml3_forward.6} parent=1 // loop_header_branch
      %13 = sbr.rel (%p11) target = $region8
    $region5: #{distill_klml3_forward.6} parent=1 // loop_body
      %s15 = ssub.s32 %s10, 1
      %s16 = ssub.s32 %s10, 2
      %s23 = sadd.s32 1, %s18
      %p24 = scmp.ge.s32.totalorder %s23, 1
      %s25 = scalar_select %p24, 0, %s23
      %s26 = sadd.s32 1, %s17
      %s27 = scalar_select %p24, %s26, %s17
      %p28 = scmp.ge.s32.totalorder %s27, 2
      %s29 = scalar_select %p28, 0, %s27
      %s30 = ssub.s32 %s17, %s29
      %s31 = ssub.s32 %s18, %s25
      %s32 = sor.u32 %s30, %s31
      %p33 = scmp.eq.s32.totalorder %s32, 0
      %s35 = sadd.s32 %s34, 1
      %s36 = scalar_select %p33, %s34, %s35
      %p39 = pneg %p33
      %p40 = scmp.eq.s32.totalorder %s10, 1
      %p41 = por %p39, %p40
      %p42 = scmp.ne.s32.totalorder %s34, %s37
      %p43 = scmp.eq.s32.totalorder %s10, 0
      %p44 = por %p42, %p43
      %p45 = scmp.ne.s32.totalorder %s34, %s37
      %p46 = scmp.eq.s32.totalorder %s15, 1
      %p47 = por %p45, %p46
      %p48 = scmp.ne.s32.totalorder %s37, %s38
      %p49 = scmp.eq.s32.totalorder %s15, 0
      %p50 = por %p48, %p49
      %p51 = scmp.ne.s32.totalorder %s37, %s38
      %p52 = scmp.eq.s32.totalorder %s16, 1
      %p53 = por %p51, %p52
      %p55 = scmp.ne.s32.totalorder %s38, %s54
      %p56 = scmp.eq.s32.totalorder %s16, 0
      %p57 = por %p55, %p56
      %s59 = sadd.s32 %s58, 1
      %p62 = scmp.eq.s32.totalorder %s10, 1
      %p63 = scmp.ne.s32.totalorder %s58, %s60
      %p64 = scmp.eq.s32.totalorder %s10, 0
      %p65 = por %p63, %p64
      %p66 = scmp.ne.s32.totalorder %s58, %s60
      %p67 = scmp.eq.s32.totalorder %s15, 1
      %p68 = por %p66, %p67
      %p69 = scmp.ne.s32.totalorder %s60, %s61
      %p70 = scmp.eq.s32.totalorder %s15, 0
      %p71 = por %p69, %p70
      %p72 = scmp.ne.s32.totalorder %s60, %s61
      %p73 = scmp.eq.s32.totalorder %s16, 1
      %p74 = por %p72, %p73
      %p76 = scmp.ne.s32.totalorder %s61, %s75
      %p77 = scmp.eq.s32.totalorder %s16, 0
      %p78 = por %p76, %p77
      %s80 = sadd.s32 %s79, 1
      %p83 = scmp.eq.s32.totalorder %s10, 1
      %p84 = scmp.ne.s32.totalorder %s79, %s81
      %p85 = scmp.eq.s32.totalorder %s10, 0
      %p86 = por %p84, %p85
      %p87 = scmp.ne.s32.totalorder %s79, %s81
      %p88 = scmp.eq.s32.totalorder %s15, 1
      %p89 = por %p87, %p88
      %p90 = scmp.ne.s32.totalorder %s81, %s82
      %p91 = scmp.eq.s32.totalorder %s15, 0
      %p92 = por %p90, %p91
      %p93 = scmp.ne.s32.totalorder %s81, %s82
      %p94 = scmp.eq.s32.totalorder %s16, 1
      %p95 = por %p93, %p94
      %p97 = scmp.ne.s32.totalorder %s82, %s96
      %p98 = scmp.eq.s32.totalorder %s16, 0
      %p99 = por %p97, %p98
      %s100 = ssub.s32 %s17, %s29
      %s101 = ssub.s32 %s18, %s25
      %s102 = sor.u32 %s100, %s101
      %p103 = scmp.eq.s32.totalorder %s102, 0
      %s105 = sadd.s32 %s104, 1
      %s106 = scalar_select %p103, %s104, %s105
      %p109 = pneg %p103
      %p110 = scmp.eq.s32.totalorder %s10, 1
      %p111 = por %p109, %p110
      %p112 = scmp.ne.s32.totalorder %s104, %s107
      %p113 = scmp.eq.s32.totalorder %s10, 0
      %p114 = por %p112, %p113
      %p115 = scmp.ne.s32.totalorder %s104, %s107
      %p116 = scmp.eq.s32.totalorder %s15, 1
      %p117 = por %p115, %p116
      %p118 = scmp.ne.s32.totalorder %s107, %s108
      %p119 = scmp.eq.s32.totalorder %s15, 0
      %p120 = por %p118, %p119
      %p121 = scmp.ne.s32.totalorder %s107, %s108
      %p122 = scmp.eq.s32.totalorder %s16, 1
      %p123 = por %p121, %p122
      %p125 = scmp.ne.s32.totalorder %s108, %s124
      %p126 = scmp.eq.s32.totalorder %s16, 0
      %p127 = por %p125, %p126
      %p128 = scmp.le.s32.totalorder 1, %s10
      %p129 = scmp.lt.s32.totalorder %s10, 3
      %p130 = pnand %p128, %p129
      %p131 = pneg %p130
      // Predicated region
      $region9: #{distill_klml3_forward.6} parent=5 // pred_check
        _
      $region10: #{distill_klml3_forward.6} parent=5 // pred_check_branch
        %133 = sbr.rel (%p130) target = $region12
      $region11: #{distill_klml3_forward.6} parent=5 // pred_region
        %s134 = ssub.s32 %s10, 1
        // Predicated region
        $region13: #{distill_klml3_forward.6} parent=11 // pred_check
          %p135 = pneg %p71
        $region14: #{distill_klml3_forward.6} parent=11 // pred_check_branch
          %137 = sbr.rel (%p135) target = $region16
        $region15: #{distill_klml3_forward.6} parent=11 // pred_region
          _
        $region16: #{distill_klml3_forward.6} parent=11 // pred_fallthru
          _
        // Predicated region
        $region17: #{distill_klml3_forward.6} parent=11 // pred_check
          %p138 = pneg %p92
        $region18: #{distill_klml3_forward.6} parent=11 // pred_check_branch
          %140 = sbr.rel (%p138) target = $region20
        $region19: #{distill_klml3_forward.6} parent=11 // pred_region
          %s142 = ssub.s32 16, 16
          %143 = vsyncadd [#allocation3], %s142
          %s145 = sshll.u32 [#allocation2], 4
          %s146 = int_to_ptr.vmem [resolvable:$true] %s145
          %148 = dma.hbm_to_vmem [thread:$0]  %s2, 16, %s146, [#allocation3]
        $region20: #{distill_klml3_forward.6} parent=11 // pred_fallthru
          _
      $region12: #{distill_klml3_forward.6} parent=5 // pred_fallthru
        _
      %p149 = scmp.lt.s32.totalorder %s10, 2
      // Predicated region
      $region21: #{distill_klml3_forward.6} parent=5 // pred_check
        %p150 = pneg %p149
      $region22: #{distill_klml3_forward.6} parent=5 // pred_check_branch
        %152 = sbr.rel (%p150) target = $region24
      $region23: #{distill_klml3_forward.6} parent=5 // pred_region
        // Predicated region
        $region25: #{distill_klml3_forward.6} parent=23 // pred_check
          %p153 = pneg %p44
        $region26: #{distill_klml3_forward.6} parent=23 // pred_check_branch
          %155 = sbr.rel (%p153) target = $region28
        $region27: #{distill_klml3_forward.6} parent=23 // pred_region
          %s156 = smul.u32 8, %s18
          %p157 = scmp.lt.s32.totalorder %s17, 1
          %s158 = scalar_select %p157, %s17, 1
          %p159 = scmp.lt.s32.totalorder %s156, 7
          %s160 = scalar_select %p159, %s156, 7
          %s161 = smul.addr %s158, 8
          %s162 = sadd.s32 %s160, %s161
          %s163 = smul.addr %s162, 8
          %s164 = scalar_lea.vmem %s0, %s163
          %s165 = smul.u32 8, %s18
        $region28: #{distill_klml3_forward.6} parent=23 // pred_fallthru
          _
      $region24: #{distill_klml3_forward.6} parent=5 // pred_fallthru
        _
      %p166 = scmp.le.s32.totalorder 1, %s10
      %p167 = scmp.lt.s32.totalorder %s10, 3
      %p168 = pnand %p166, %p167
      %p169 = pneg %p168
      // Predicated region
      $region29: #{distill_klml3_forward.6} parent=5 // pred_check
        _
      $region30: #{distill_klml3_forward.6} parent=5 // pred_check_branch
        %171 = sbr.rel (%p168) target = $region32
      $region31: #{distill_klml3_forward.6} parent=5 // pred_region
        %s172 = ssub.s32 %s10, 1
        // Predicated region
        $region33: #{distill_klml3_forward.6} parent=31 // pred_check
          %p173 = pneg %p92
        $region34: #{distill_klml3_forward.6} parent=31 // pred_check_branch
          %175 = sbr.rel (%p173) target = $region36
        $region35: #{distill_klml3_forward.6} parent=31 // pred_region
          %176 = dma.done [#allocation3], 16
        $region36: #{distill_klml3_forward.6} parent=31 // pred_fallthru
          _
        %s177 = smul.u32 8, %s20
        %p178 = scmp.lt.s32.totalorder %s19, 1
        %s179 = scalar_select %p178, %s19, 1
        %p180 = scmp.lt.s32.totalorder %s177, 7
        %s181 = scalar_select %p180, %s177, 7
        %s182 = smul.addr %s179, 8
        %s183 = sadd.s32 %s181, %s182
        %s184 = smul.addr %s183, 8
        %s185 = scalar_lea.vmem %s0, %s184
        %p186 = pneg %p50
        %p187 = pneg %p47
        %p188 = pneg %p71
        %p189 = pneg %p68
        %p190 = pneg %p92
        %p191 = pneg %p89
        %p192 = pneg %p120
        %p193 = pneg %p117
        %s194 = smul.u32 8, %s20
        %p195 = scmp.lt.s32.totalorder %s19, 1
        %s196 = scalar_select %p195, %s19, 1
        %p197 = scmp.lt.s32.totalorder %s194, 7
        %s198 = scalar_select %p197, %s194, 7
        %s199 = smul.addr %s196, 8
        %s200 = sadd.s32 %s198, %s199
        %s201 = smul.addr %s200, 8
        %s202 = scalar_lea.vmem %s3, %s201
        %s203 = smul.u32 8, %s20
        %p204 = scmp.lt.s32.totalorder %s19, 1
        %s205 = scalar_select %p204, %s19, 1
        %p206 = scmp.lt.s32.totalorder %s203, 7
        %s207 = scalar_select %p206, %s203, 7
        %s208 = smul.addr %s205, 8
        %s209 = sadd.s32 %s207, %s208
        %s210 = smul.addr %s209, 8
        %s211 = scalar_lea.vmem %s0, %s210
        %s212 = smul.u32 8, %s20
        %s213 = smul.u32 8, %s20
        %p214 = scmp.lt.s32.totalorder %s19, 1
        %s215 = scalar_select %p214, %s19, 1
        %p216 = scmp.lt.s32.totalorder %s213, 7
        %s217 = scalar_select %p216, %s213, 7
        %s218 = smul.addr %s215, 8
        %s219 = sadd.s32 %s217, %s218
        %s220 = smul.addr %s219, 8
        %s221 = scalar_lea.vmem %s3, %s220
        %s222 = smul.u32 8, %s20
        %v223 = vld [vmem:[%s211] sm:$0xff]
        %v224 = vld [vmem:[%s211 + $0x8] sm:$0xff]
        %v225 = vld [vmem:[%s211 + $0x10] sm:$0xff]
        %v226 = vld [vmem:[%s211 + $0x18] sm:$0xff]
        %v227 = vld [vmem:[%s211 + $0x20] sm:$0xff]
        %v228 = vld [vmem:[%s211 + $0x28] sm:$0xff]
        %v229 = vld [vmem:[%s211 + $0x30] sm:$0xff]
        %v230 = vld [vmem:[%s211 + $0x38] sm:$0xff]
        %v231 = vld [vmem:[%s1] sm:$0xff]
        %v232 = vld [vmem:[%s1 + $0x8] sm:$0xff]
        %v233 = vld [vmem:[%s1 + $0x10] sm:$0xff]
        %v234 = vld [vmem:[%s1 + $0x18] sm:$0xff]
        %v235 = vld [vmem:[%s1 + $0x20] sm:$0xf]
        %v236 = vld [vmem:[#allocation2] sm:$0x1]
        %v238 = vlaneseq
        %v239 = vshrl.u32 %v238, 7
        %v240 = vsub.s32 0, %v239
        %v241 = vrot.slane %v236, %v240
        %vm243 = vcmask 293888
        %v245 = vsel %vm243, %v223, 0
        %v248 = vsel %vm243, %v224, 0
        %v251 = vsel %vm243, %v225, 0
        %v254 = vsel %vm243, %v226, 0
        %v257 = vsel %vm243, %v227, 0
        %v260 = vsel %vm243, %v228, 0
        %v263 = vsel %vm243, %v229, 0
        %v266 = vsel %vm243, %v230, 0
        %vm268 = vcmask 1043456
        %v270 = vsel %vm268, %v235, 0
        %272 = vmatprep.subr.mxu0 0.0
        %273 = vmatpush1.msra.mxu0 0.0
        %274 = vmatprep.subr.mxu0 0.0
        %275 = vmatpush1.msra.mxu0 0.0
        %276 = vmatprep.subr.mxu0 0.0
        %277 = vmatpush1.msra.mxu0 0.0
        %278 = vmatprep.subr.mxu0 0.0
        %279 = vmatpush1.msra.mxu0 0.0
        %280 = vmatprep.subr.mxu0 0.0
        %281 = vmatpush1.msra.mxu0 0.0
        %282 = vmatprep.subr.mxu0 0.0
        %283 = vmatpush1.msra.mxu0 0.0
        %284 = vmatprep.subr.mxu0 0.0
        %285 = vmatpush1.msra.mxu0 0.0
        %286 = vmatprep.subr.mxu0 0.0
        %287 = vmatpush1.msra.mxu0 0.0
        %288 = vmatprep.subr.mxu0 0.0
        %289 = vmatpush1.msra.mxu0 0.0
        %290 = vmatprep.subr.mxu0 0.0
        %291 = vmatpush1.msra.mxu0 0.0
        %292 = vmatprep.subr.mxu0 0.0
        %293 = vmatpush1.msra.mxu0 0.0
        %294 = vmatprep.subr.mxu0 0.0
        %295 = vmatpush1.msra.mxu0 %v270
        %296 = vmatprep.subr.mxu0 0.0
        %297 = vmatpush1.msra.mxu0 %v234
        %298 = vmatprep.subr.mxu0 0.0
        %299 = vmatpush1.msra.mxu0 %v233
        %300 = vmatprep.subr.mxu0 0.0
        %301 = vmatpush1.msra.mxu0 %v232
        %302 = vmatprep.subr.mxu0 0.0
        %303 = vmatpush1.msra.mxu0 %v231
        %304 = vmatprep.subr.mxu0 0.0
        %305 = vmatpush2.msra.mxu0 0.0
        %306 = vmatprep.subr.mxu0 0.0
        %307 = vmatpush2.msra.mxu0 0.0
        %308 = vmatprep.subr.mxu0 0.0
        %309 = vmatpush2.msra.mxu0 0.0
        %310 = vmatprep.subr.mxu0 0.0
        %311 = vmatpush2.msra.mxu0 0.0
        %312 = vmatprep.subr.mxu0 0.0
        %313 = vmatpush2.msra.mxu0 0.0
        %314 = vmatprep.subr.mxu0 0.0
        %315 = vmatpush2.msra.mxu0 0.0
        %316 = vmatprep.subr.mxu0 0.0
        %317 = vmatpush2.msra.mxu0 0.0
        %318 = vmatprep.subr.mxu0 0.0
        %319 = vmatpush2.msra.mxu0 0.0
        %320 = vmatprep.subr.mxu0 0.0
        %321 = vmatpush2.msra.mxu0 0.0
        %322 = vmatprep.subr.mxu0 0.0
        %323 = vmatpush2.msra.mxu0 0.0
        %324 = vmatprep.subr.mxu0 0.0
        %325 = vmatpush2.msra.mxu0 0.0
        %326 = vmatprep.subr.mxu0 0.0
        %327 = vmatpush2.msra.mxu0 0.0
        %328 = vmatprep.subr.mxu0 0.0
        %329 = vmatpush2.msra.mxu0 0.0
        %330 = vmatprep.subr.mxu0 0.0
        %331 = vmatpush2.msra.mxu0 0.0
        %332 = vmatprep.subr.mxu0 0.0
        %333 = vmatpush2.msra.mxu0 0.0
        %334 = vmatprep.subr.mxu0 0.0
        %335 = vmatpush2.msra.mxu0 0.0
        %336 = vmatprep.mubr.f32.mxu0 0.0
        %337 = vmatmul.mubr.f32.gmra.mxu0 %v245
        %v338 = vpop.f32.mrf.mxu0
        %v339 = vadd.f32 %v241, %v338
        %v340 = vpop.f32.mrf.mxu0
        %341 = vmatprep.mubr.f32.mxu0 0.0
        %342 = vmatmul.mubr.f32.gmra.mxu0 %v248
        %v343 = vpop.f32.mrf.mxu0
        %v344 = vadd.f32 %v241, %v343
        %v345 = vpop.f32.mrf.mxu0
        %346 = vmatprep.mubr.f32.mxu0 0.0
        %347 = vmatmul.mubr.f32.gmra.mxu0 %v251
        %v348 = vpop.f32.mrf.mxu0
        %v349 = vadd.f32 %v241, %v348
        %v350 = vpop.f32.mrf.mxu0
        %351 = vmatprep.mubr.f32.mxu0 0.0
        %352 = vmatmul.mubr.f32.gmra.mxu0 %v254
        %v353 = vpop.f32.mrf.mxu0
        %v354 = vadd.f32 %v241, %v353
        %v355 = vpop.f32.mrf.mxu0
        %356 = vmatprep.mubr.f32.mxu0 0.0
        %357 = vmatmul.mubr.f32.gmra.mxu0 %v257
        %v358 = vpop.f32.mrf.mxu0
        %v359 = vadd.f32 %v241, %v358
        %v360 = vpop.f32.mrf.mxu0
        %361 = vmatprep.mubr.f32.mxu0 0.0
        %362 = vmatmul.mubr.f32.gmra.mxu0 %v260
        %v363 = vpop.f32.mrf.mxu0
        %v364 = vadd.f32 %v241, %v363
        %v365 = vpop.f32.mrf.mxu0
        %366 = vmatprep.mubr.f32.mxu0 0.0
        %367 = vmatmul.mubr.f32.gmra.mxu0 %v263
        %v368 = vpop.f32.mrf.mxu0
        %v369 = vadd.f32 %v241, %v368
        %v370 = vpop.f32.mrf.mxu0
        %371 = vmatprep.mubr.f32.mxu0 0.0
        %372 = vmatmul.mubr.f32.gmra.mxu0 %v266
        %v373 = vpop.f32.mrf.mxu0
        %v374 = vadd.f32 %v241, %v373
        %v375 = vpop.f32.mrf.mxu0
        %376 = vdwg.mxu0
        %vm377 = vcmask 31744
        %378 = vst.msk [vmem:[%s221] sm:$0xff] %vm377, %v339
        %379 = vst.msk [vmem:[%s221 + $0x8] sm:$0xff] %vm377, %v344
        %380 = vst.msk [vmem:[%s221 + $0x10] sm:$0xff] %vm377, %v349
        %381 = vst.msk [vmem:[%s221 + $0x18] sm:$0xff] %vm377, %v354
        %382 = vst.msk [vmem:[%s221 + $0x20] sm:$0xff] %vm377, %v359
        %383 = vst.msk [vmem:[%s221 + $0x28] sm:$0xff] %vm377, %v364
        %384 = vst.msk [vmem:[%s221 + $0x30] sm:$0xff] %vm377, %v369
        %385 = vst.msk [vmem:[%s221 + $0x38] sm:$0xff] %vm377, %v374
        %s386 = smul.u32 8, %s20
        %p387 = scmp.lt.s32.totalorder %s19, 1
        %s388 = scalar_select %p387, %s19, 1
        %p389 = scmp.lt.s32.totalorder %s386, 7
        %s390 = scalar_select %p389, %s386, 7
        %s391 = smul.addr %s388, 8
        %s392 = sadd.s32 %s390, %s391
        %s393 = smul.addr %s392, 8
        %s394 = scalar_lea.vmem %s3, %s393
        // Predicated region
        $region37: #{distill_klml3_forward.6} parent=31 // pred_check
          %p395 = pneg %p117
        $region38: #{distill_klml3_forward.6} parent=31 // pred_check_branch
          %397 = sbr.rel (%p395) target = $region40
        $region39: #{distill_klml3_forward.6} parent=31 // pred_region
          %s398 = smul.u32 8, %s20
        $region40: #{distill_klml3_forward.6} parent=31 // pred_fallthru
          _
      $region32: #{distill_klml3_forward.6} parent=5 // pred_fallthru
        _
      %p399 = scmp.le.s32.totalorder 2, %s10
      // Predicated region
      $region41: #{distill_klml3_forward.6} parent=5 // pred_check
        %p400 = pneg %p399
      $region42: #{distill_klml3_forward.6} parent=5 // pred_check_branch
        %402 = sbr.rel (%p400) target = $region44
      $region43: #{distill_klml3_forward.6} parent=5 // pred_region
        %s403 = ssub.s32 %s10, 2
        // Predicated region
        $region45: #{distill_klml3_forward.6} parent=43 // pred_check
          %p404 = pneg %p123
        $region46: #{distill_klml3_forward.6} parent=43 // pred_check_branch
          %406 = sbr.rel (%p404) target = $region48
        $region47: #{distill_klml3_forward.6} parent=43 // pred_region
          %s407 = smul.u32 8, %s22
          %p408 = scmp.lt.s32.totalorder %s21, 1
          %s409 = scalar_select %p408, %s21, 1
          %p410 = scmp.lt.s32.totalorder %s407, 7
          %s411 = scalar_select %p410, %s407, 7
          %s412 = smul.addr %s409, 8
          %s413 = sadd.s32 %s411, %s412
          %s414 = smul.addr %s413, 8
          %s415 = scalar_lea.vmem %s3, %s414
        $region48: #{distill_klml3_forward.6} parent=43 // pred_fallthru
          _
      $region44: #{distill_klml3_forward.6} parent=5 // pred_fallthru
        _
    $region6: #{distill_klml3_forward.6} parent=1 // loop_footer
      %s14 = sadd.s32 1, %s10
    $region7: #{distill_klml3_forward.6} parent=1 // loop_footer_branch
      %9 = sbr.rel target = $region3
    $region8: #{distill_klml3_forward.6} parent=1 // loop_exit
      _
    %416 = vsyncpa [#allocation3], 1
    %s417 = scalar_lea.sflag [#allocation3], 1
    %418 = vsyncpa %s417, 1

// kernel: distill_klml3_forward.7
$region0: #{distill_klml3_forward.7}
  #allocation0 [shape = 'u32[]', space=smem, size = 0x4, offset = 0x4, fixed_abs, tag = 'smem constant byte address 0x4 - core index']
  #allocation1 [shape = 'u32[144,128]{1,0:T(1,128)}', space=vmem, size = 0x12000, scoped, tag = 'internal scratch']
  %s0 = inlined_call_operand.vmem [shape: f32[2,4096,72], index: 0, kind: input, shape index: {}]
  %s1 = inlined_call_operand.vmem [shape: f32[72,4], index: 1, kind: input, shape index: {}]
  %s2 = inlined_call_operand.vmem [shape: f32[1,4], index: 2, kind: input, shape index: {}]
  %s3 = inlined_call_operand.vmem [shape: f32[2,4096,4], index: 3, kind: output, shape index: {}]
  %s4 = sld [smem:[#allocation0]]
  $region45: #{distill_klml3_forward.7} parent=0
    _
  %s6 = ssub.s32 1, %s4
  %s7 = scalar_select 0, %s6, %s4
  loop: start=0, step=1, limit=18
  $region2: #{distill_klml3_forward.7} parent=0 // loop_pre_header
    _
  $region3: #{distill_klml3_forward.7} parent=0 // loop_header
    %s9 = sphi 0, %s13
    %p10 = scmp.ge.s32.totalorder %s9, 18
    %s16 = sphi 0, %s28
    %s17 = sphi 0, %s24
    %s18 = sphi 0, %s16
    %s19 = sphi 0, %s17
    %s20 = sphi 0, %s18
    %s21 = sphi 0, %s19
    %s33 = sphi 0, %s35
    %s36 = sphi 0, %s33
    %s37 = sphi 0, %s36
    %s53 = sphi 0, %s37
    %s57 = sphi 0, %s57
    %s59 = sphi 0, %s57
    %s60 = sphi 0, %s59
    %s74 = sphi 0, %s60
    %s78 = sphi 0, %s78
    %s80 = sphi 0, %s78
    %s81 = sphi 0, %s80
    %s95 = sphi 0, %s81
    %s103 = sphi 0, %s105
    %s106 = sphi 0, %s103
    %s107 = sphi 0, %s106
    %s123 = sphi 0, %s107
  $region4: #{distill_klml3_forward.7} parent=0 // loop_header_branch
    %12 = sbr.rel (%p10) target = $region8
  $region5: #{distill_klml3_forward.7} parent=0 // loop_body
    %s14 = ssub.s32 %s9, 1
    %s15 = ssub.s32 %s9, 2
    %s22 = sadd.s32 1, %s17
    %p23 = scmp.ge.s32.totalorder %s22, 8
    %s24 = scalar_select %p23, 0, %s22
    %s25 = sadd.s32 1, %s16
    %s26 = scalar_select %p23, %s25, %s16
    %p27 = scmp.ge.s32.totalorder %s26, 2
    %s28 = scalar_select %p27, 0, %s26
    %s29 = ssub.s32 %s16, %s28
    %s30 = ssub.s32 %s17, %s24
    %s31 = sor.u32 %s29, %s30
    %p32 = scmp.eq.s32.totalorder %s31, 0
    %s34 = sadd.s32 %s33, 1
    %s35 = scalar_select %p32, %s33, %s34
    %p38 = pneg %p32
    %p39 = scmp.eq.s32.totalorder %s9, 15
    %p40 = por %p38, %p39
    %p41 = scmp.ne.s32.totalorder %s33, %s36
    %p42 = scmp.eq.s32.totalorder %s9, 0
    %p43 = por %p41, %p42
    %p44 = scmp.ne.s32.totalorder %s33, %s36
    %p45 = scmp.eq.s32.totalorder %s14, 15
    %p46 = por %p44, %p45
    %p47 = scmp.ne.s32.totalorder %s36, %s37
    %p48 = scmp.eq.s32.totalorder %s14, 0
    %p49 = por %p47, %p48
    %p50 = scmp.ne.s32.totalorder %s36, %s37
    %p51 = scmp.eq.s32.totalorder %s15, 15
    %p52 = por %p50, %p51
    %p54 = scmp.ne.s32.totalorder %s37, %s53
    %p55 = scmp.eq.s32.totalorder %s15, 0
    %p56 = por %p54, %p55
    %s58 = sadd.s32 %s57, 1
    %p61 = scmp.eq.s32.totalorder %s9, 15
    %p62 = scmp.ne.s32.totalorder %s57, %s59
    %p63 = scmp.eq.s32.totalorder %s9, 0
    %p64 = por %p62, %p63
    %p65 = scmp.ne.s32.totalorder %s57, %s59
    %p66 = scmp.eq.s32.totalorder %s14, 15
    %p67 = por %p65, %p66
    %p68 = scmp.ne.s32.totalorder %s59, %s60
    %p69 = scmp.eq.s32.totalorder %s14, 0
    %p70 = por %p68, %p69
    %p71 = scmp.ne.s32.totalorder %s59, %s60
    %p72 = scmp.eq.s32.totalorder %s15, 15
    %p73 = por %p71, %p72
    %p75 = scmp.ne.s32.totalorder %s60, %s74
    %p76 = scmp.eq.s32.totalorder %s15, 0
    %p77 = por %p75, %p76
    %s79 = sadd.s32 %s78, 1
    %p82 = scmp.eq.s32.totalorder %s9, 15
    %p83 = scmp.ne.s32.totalorder %s78, %s80
    %p84 = scmp.eq.s32.totalorder %s9, 0
    %p85 = por %p83, %p84
    %p86 = scmp.ne.s32.totalorder %s78, %s80
    %p87 = scmp.eq.s32.totalorder %s14, 15
    %p88 = por %p86, %p87
    %p89 = scmp.ne.s32.totalorder %s80, %s81
    %p90 = scmp.eq.s32.totalorder %s14, 0
    %p91 = por %p89, %p90
    %p92 = scmp.ne.s32.totalorder %s80, %s81
    %p93 = scmp.eq.s32.totalorder %s15, 15
    %p94 = por %p92, %p93
    %p96 = scmp.ne.s32.totalorder %s81, %s95
    %p97 = scmp.eq.s32.totalorder %s15, 0
    %p98 = por %p96, %p97
    %s99 = ssub.s32 %s16, %s28
    %s100 = ssub.s32 %s17, %s24
    %s101 = sor.u32 %s99, %s100
    %p102 = scmp.eq.s32.totalorder %s101, 0
    %s104 = sadd.s32 %s103, 1
    %s105 = scalar_select %p102, %s103, %s104
    %p108 = pneg %p102
    %p109 = scmp.eq.s32.totalorder %s9, 15
    %p110 = por %p108, %p109
    %p111 = scmp.ne.s32.totalorder %s103, %s106
    %p112 = scmp.eq.s32.totalorder %s9, 0
    %p113 = por %p111, %p112
    %p114 = scmp.ne.s32.totalorder %s103, %s106
    %p115 = scmp.eq.s32.totalorder %s14, 15
    %p116 = por %p114, %p115
    %p117 = scmp.ne.s32.totalorder %s106, %s107
    %p118 = scmp.eq.s32.totalorder %s14, 0
    %p119 = por %p117, %p118
    %p120 = scmp.ne.s32.totalorder %s106, %s107
    %p121 = scmp.eq.s32.totalorder %s15, 15
    %p122 = por %p120, %p121
    %p124 = scmp.ne.s32.totalorder %s107, %s123
    %p125 = scmp.eq.s32.totalorder %s15, 0
    %p126 = por %p124, %p125
    %p127 = scmp.le.s32.totalorder 1, %s9
    %p128 = scmp.lt.s32.totalorder %s9, 17
    %p129 = pnand %p127, %p128
    %p130 = pneg %p129
    // Predicated region
    $region9: #{distill_klml3_forward.7} parent=5 // pred_check
      _
    $region10: #{distill_klml3_forward.7} parent=5 // pred_check_branch
      %132 = sbr.rel (%p129) target = $region12
    $region11: #{distill_klml3_forward.7} parent=5 // pred_region
      %s133 = ssub.s32 %s9, 1
      // Predicated region
      $region13: #{distill_klml3_forward.7} parent=11 // pred_check
        %p134 = pneg %p70
      $region14: #{distill_klml3_forward.7} parent=11 // pred_check_branch
        %136 = sbr.rel (%p134) target = $region16
      $region15: #{distill_klml3_forward.7} parent=11 // pred_region
        _
      $region16: #{distill_klml3_forward.7} parent=11 // pred_fallthru
        _
      // Predicated region
      $region17: #{distill_klml3_forward.7} parent=11 // pred_check
        %p137 = pneg %p91
      $region18: #{distill_klml3_forward.7} parent=11 // pred_check_branch
        %139 = sbr.rel (%p137) target = $region20
      $region19: #{distill_klml3_forward.7} parent=11 // pred_region
        _
      $region20: #{distill_klml3_forward.7} parent=11 // pred_fallthru
        _
    $region12: #{distill_klml3_forward.7} parent=5 // pred_fallthru
      _
    %p140 = scmp.lt.s32.totalorder %s9, 16
    // Predicated region
    $region21: #{distill_klml3_forward.7} parent=5 // pred_check
      %p141 = pneg %p140
    $region22: #{distill_klml3_forward.7} parent=5 // pred_check_branch
      %143 = sbr.rel (%p141) target = $region24
    $region23: #{distill_klml3_forward.7} parent=5 // pred_region
      // Predicated region
      $region25: #{distill_klml3_forward.7} parent=23 // pred_check
        %p144 = pneg %p43
      $region26: #{distill_klml3_forward.7} parent=23 // pred_check_branch
        %146 = sbr.rel (%p144) target = $region28
      $region27: #{distill_klml3_forward.7} parent=23 // pred_region
        %s147 = smul.u32 64, %s17
        %p148 = scmp.lt.s32.totalorder %s16, 1
        %s149 = scalar_select %p148, %s16, 1
        %p150 = scmp.lt.s32.totalorder %s147, 511
        %s151 = scalar_select %p150, %s147, 511
        %s152 = smul.addr %s149, 512
        %s153 = sadd.s32 %s151, %s152
        %s154 = smul.addr %s153, 8
        %s155 = scalar_lea.vmem %s0, %s154
        %s156 = smul.u32 64, %s17
      $region28: #{distill_klml3_forward.7} parent=23 // pred_fallthru
        _
    $region24: #{distill_klml3_forward.7} parent=5 // pred_fallthru
      _
    %p157 = scmp.le.s32.totalorder 1, %s9
    %p158 = scmp.lt.s32.totalorder %s9, 17
    %p159 = pnand %p157, %p158
    %p160 = pneg %p159
    // Predicated region
    $region29: #{distill_klml3_forward.7} parent=5 // pred_check
      _
    $region30: #{distill_klml3_forward.7} parent=5 // pred_check_branch
      %162 = sbr.rel (%p159) target = $region32
    $region31: #{distill_klml3_forward.7} parent=5 // pred_region
      %s163 = ssub.s32 %s9, 1
      %s164 = smul.u32 64, %s19
      %p165 = scmp.lt.s32.totalorder %s18, 1
      %s166 = scalar_select %p165, %s18, 1
      %p167 = scmp.lt.s32.totalorder %s164, 511
      %s168 = scalar_select %p167, %s164, 511
      %s169 = smul.addr %s166, 512
      %s170 = sadd.s32 %s168, %s169
      %s171 = smul.addr %s170, 8
      %s172 = scalar_lea.vmem %s0, %s171
      %p173 = pneg %p49
      %p174 = pneg %p46
      %p175 = pneg %p70
      %p176 = pneg %p67
      %p177 = pneg %p91
      %p178 = pneg %p88
      %p179 = pneg %p119
      %p180 = pneg %p116
      %s181 = smul.u32 64, %s19
      %p182 = scmp.lt.s32.totalorder %s18, 1
      %s183 = scalar_select %p182, %s18, 1
      %p184 = scmp.lt.s32.totalorder %s181, 511
      %s185 = scalar_select %p184, %s181, 511
      %s186 = smul.addr %s183, 512
      %s187 = sadd.s32 %s185, %s186
      %s188 = smul.addr %s187, 8
      %s189 = scalar_lea.vmem %s3, %s188
      %s190 = smul.u32 64, %s19
      %p191 = scmp.lt.s32.totalorder %s18, 1
      %s192 = scalar_select %p191, %s18, 1
      %p193 = scmp.lt.s32.totalorder %s190, 511
      %s194 = scalar_select %p193, %s190, 511
      %s195 = smul.addr %s192, 512
      %s196 = sadd.s32 %s194, %s195
      %s197 = smul.addr %s196, 8
      %s198 = scalar_lea.vmem %s0, %s197
      %s199 = smul.u32 64, %s19
      %s200 = smul.u32 64, %s19
      %p201 = scmp.lt.s32.totalorder %s18, 1
      %s202 = scalar_select %p201, %s18, 1
      %p203 = scmp.lt.s32.totalorder %s200, 511
      %s204 = scalar_select %p203, %s200, 511
      %s205 = smul.addr %s202, 512
      %s206 = sadd.s32 %s204, %s205
      %s207 = smul.addr %s206, 8
      %s208 = scalar_lea.vmem %s3, %s207
      %s209 = smul.u32 64, %s19
      %v210 = vld [vmem:[%s198] sm:$0xff]
      %v211 = vld [vmem:[%s198 + $0x8] sm:$0xff]
      %v212 = vld [vmem:[%s198 + $0x10] sm:$0xff]
      %v213 = vld [vmem:[%s198 + $0x18] sm:$0xff]
      %v214 = vld [vmem:[%s198 + $0x20] sm:$0xff]
      %v215 = vld [vmem:[%s198 + $0x28] sm:$0xff]
      %v216 = vld [vmem:[%s198 + $0x30] sm:$0xff]
      %v217 = vld [vmem:[%s198 + $0x38] sm:$0xff]
      %v218 = vld [vmem:[%s198 + $0x40] sm:$0xff]
      %v219 = vld [vmem:[%s198 + $0x48] sm:$0xff]
      %v220 = vld [vmem:[%s198 + $0x50] sm:$0xff]
      %v221 = vld [vmem:[%s198 + $0x58] sm:$0xff]
      %v222 = vld [vmem:[%s198 + $0x60] sm:$0xff]
      %v223 = vld [vmem:[%s198 + $0x68] sm:$0xff]
      %v224 = vld [vmem:[%s198 + $0x70] sm:$0xff]
      %v225 = vld [vmem:[%s198 + $0x78] sm:$0xff]
      %v226 = vld [vmem:[%s198 + $0x80] sm:$0xff]
      %v227 = vld [vmem:[%s198 + $0x88] sm:$0xff]
      %v228 = vld [vmem:[%s198 + $0x90] sm:$0xff]
      %v229 = vld [vmem:[%s198 + $0x98] sm:$0xff]
      %v230 = vld [vmem:[%s198 + $0xa0] sm:$0xff]
      %v231 = vld [vmem:[%s198 + $0xa8] sm:$0xff]
      %v232 = vld [vmem:[%s198 + $0xb0] sm:$0xff]
      %v233 = vld [vmem:[%s198 + $0xb8] sm:$0xff]
      %v234 = vld [vmem:[%s198 + $0xc0] sm:$0xff]
      %v235 = vld [vmem:[%s198 + $0xc8] sm:$0xff]
      %v236 = vld [vmem:[%s198 + $0xd0] sm:$0xff]
      %v237 = vld [vmem:[%s198 + $0xd8] sm:$0xff]
      %v238 = vld [vmem:[%s198 + $0xe0] sm:$0xff]
      %v239 = vld [vmem:[%s198 + $0xe8] sm:$0xff]
      %v240 = vld [vmem:[%s198 + $0xf0] sm:$0xff]
      %v241 = vld [vmem:[%s198 + $0xf8] sm:$0xff]
      %v242 = vld [vmem:[%s198 + $0x100] sm:$0xff]
      %v243 = vld [vmem:[%s198 + $0x108] sm:$0xff]
      %v244 = vld [vmem:[%s198 + $0x110] sm:$0xff]
      %v245 = vld [vmem:[%s198 + $0x118] sm:$0xff]
      %v246 = vld [vmem:[%s198 + $0x120] sm:$0xff]
      %v247 = vld [vmem:[%s198 + $0x128] sm:$0xff]
      %v248 = vld [vmem:[%s198 + $0x130] sm:$0xff]
      %v249 = vld [vmem:[%s198 + $0x138] sm:$0xff]
      %v250 = vld [vmem:[%s198 + $0x140] sm:$0xff]
      %v251 = vld [vmem:[%s198 + $0x148] sm:$0xff]
      %v252 = vld [vmem:[%s198 + $0x150] sm:$0xff]
      %v253 = vld [vmem:[%s198 + $0x158] sm:$0xff]
      %v254 = vld [vmem:[%s198 + $0x160] sm:$0xff]
      %v255 = vld [vmem:[%s198 + $0x168] sm:$0xff]
      %v256 = vld [vmem:[%s198 + $0x170] sm:$0xff]
      %v257 = vld [vmem:[%s198 + $0x178] sm:$0xff]
      %v258 = vld [vmem:[%s198 + $0x180] sm:$0xff]
      %v259 = vld [vmem:[%s198 + $0x188] sm:$0xff]
      %v260 = vld [vmem:[%s198 + $0x190] sm:$0xff]
      %v261 = vld [vmem:[%s198 + $0x198] sm:$0xff]
      %v262 = vld [vmem:[%s198 + $0x1a0] sm:$0xff]
      %v263 = vld [vmem:[%s198 + $0x1a8] sm:$0xff]
      %v264 = vld [vmem:[%s198 + $0x1b0] sm:$0xff]
      %v265 = vld [vmem:[%s198 + $0x1b8] sm:$0xff]
      %v266 = vld [vmem:[%s198 + $0x1c0] sm:$0xff]
      %v267 = vld [vmem:[%s198 + $0x1c8] sm:$0xff]
      %v268 = vld [vmem:[%s198 + $0x1d0] sm:$0xff]
      %v269 = vld [vmem:[%s198 + $0x1d8] sm:$0xff]
      %v270 = vld [vmem:[%s198 + $0x1e0] sm:$0xff]
      %v271 = vld [vmem:[%s198 + $0x1e8] sm:$0xff]
      %v272 = vld [vmem:[%s198 + $0x1f0] sm:$0xff]
      %v273 = vld [vmem:[%s198 + $0x1f8] sm:$0xff]
      %v274 = vld [vmem:[%s1] sm:$0xff]
      %v275 = vld [vmem:[%s1 + $0x8] sm:$0xff]
      %v276 = vld [vmem:[%s1 + $0x10] sm:$0xff]
      %v277 = vld [vmem:[%s1 + $0x18] sm:$0xff]
      %v278 = vld [vmem:[%s1 + $0x20] sm:$0xff]
      %v279 = vld [vmem:[%s1 + $0x28] sm:$0xff]
      %v280 = vld [vmem:[%s1 + $0x30] sm:$0xff]
      %v281 = vld [vmem:[%s1 + $0x38] sm:$0xff]
      %v282 = vld [vmem:[%s1 + $0x40] sm:$0xff]
      %v283 = vld [vmem:[%s2] sm:$0x1]
      %v285 = vlaneseq
      %v286 = vshrl.u32 %v285, 7
      %v287 = vsub.s32 0, %v286
      %v288 = vrot.slane %v283, %v287
      %vm290 = vcmask 588800
      %v292 = vsel %vm290, %v210, 0
      %v295 = vsel %vm290, %v211, 0
      %v298 = vsel %vm290, %v212, 0
      %v301 = vsel %vm290, %v213, 0
      %v304 = vsel %vm290, %v214, 0
      %v307 = vsel %vm290, %v215, 0
      %v310 = vsel %vm290, %v216, 0
      %v313 = vsel %vm290, %v217, 0
      %v316 = vsel %vm290, %v218, 0
      %v319 = vsel %vm290, %v219, 0
      %v322 = vsel %vm290, %v220, 0
      %v325 = vsel %vm290, %v221, 0
      %v328 = vsel %vm290, %v222, 0
      %v331 = vsel %vm290, %v223, 0
      %v334 = vsel %vm290, %v224, 0
      %v337 = vsel %vm290, %v225, 0
      %v340 = vsel %vm290, %v226, 0
      %v343 = vsel %vm290, %v227, 0
      %v346 = vsel %vm290, %v228, 0
      %v349 = vsel %vm290, %v229, 0
      %v352 = vsel %vm290, %v230, 0
      %v355 = vsel %vm290, %v231, 0
      %v358 = vsel %vm290, %v232, 0
      %v361 = vsel %vm290, %v233, 0
      %v364 = vsel %vm290, %v234, 0
      %v367 = vsel %vm290, %v235, 0
      %v370 = vsel %vm290, %v236, 0
      %v373 = vsel %vm290, %v237, 0
      %v376 = vsel %vm290, %v238, 0
      %v379 = vsel %vm290, %v239, 0
      %v382 = vsel %vm290, %v240, 0
      %v385 = vsel %vm290, %v241, 0
      %v388 = vsel %vm290, %v242, 0
      %v391 = vsel %vm290, %v243, 0
      %v394 = vsel %vm290, %v244, 0
      %v397 = vsel %vm290, %v245, 0
      %v400 = vsel %vm290, %v246, 0
      %v403 = vsel %vm290, %v247, 0
      %v406 = vsel %vm290, %v248, 0
      %v409 = vsel %vm290, %v249, 0
      %v412 = vsel %vm290, %v250, 0
      %v415 = vsel %vm290, %v251, 0
      %v418 = vsel %vm290, %v252, 0
      %v421 = vsel %vm290, %v253, 0
      %v424 = vsel %vm290, %v254, 0
      %v427 = vsel %vm290, %v255, 0
      %v430 = vsel %vm290, %v256, 0
      %v433 = vsel %vm290, %v257, 0
      %v436 = vsel %vm290, %v258, 0
      %v439 = vsel %vm290, %v259, 0
      %v442 = vsel %vm290, %v260, 0
      %v445 = vsel %vm290, %v261, 0
      %v448 = vsel %vm290, %v262, 0
      %v451 = vsel %vm290, %v263, 0
      %v454 = vsel %vm290, %v264, 0
      %v457 = vsel %vm290, %v265, 0
      %v460 = vsel %vm290, %v266, 0
      %v463 = vsel %vm290, %v267, 0
      %v466 = vsel %vm290, %v268, 0
      %v469 = vsel %vm290, %v269, 0
      %v472 = vsel %vm290, %v270, 0
      %v475 = vsel %vm290, %v271, 0
      %v478 = vsel %vm290, %v272, 0
      %v481 = vsel %vm290, %v273, 0
      %483 = vmatprep.subr.mxu0 0.0
      %484 = vmatpush1.msra.mxu0 0.0
      %485 = vmatprep.subr.mxu0 0.0
      %486 = vmatpush1.msra.mxu0 0.0
      %487 = vmatprep.subr.mxu0 0.0
      %488 = vmatpush1.msra.mxu0 0.0
      %489 = vmatprep.subr.mxu0 0.0
      %490 = vmatpush1.msra.mxu0 0.0
      %491 = vmatprep.subr.mxu0 0.0
      %492 = vmatpush1.msra.mxu0 0.0
      %493 = vmatprep.subr.mxu0 0.0
      %494 = vmatpush1.msra.mxu0 0.0
      %495 = vmatprep.subr.mxu0 0.0
      %496 = vmatpush1.msra.mxu0 0.0
      %497 = vmatprep.subr.mxu0 0.0
      %498 = vmatpush1.msra.mxu0 %v282
      %499 = vmatprep.subr.mxu0 0.0
      %500 = vmatpush1.msra.mxu0 %v281
      %501 = vmatprep.subr.mxu0 0.0
      %502 = vmatpush1.msra.mxu0 %v280
      %503 = vmatprep.subr.mxu0 0.0
      %504 = vmatpush1.msra.mxu0 %v279
      %505 = vmatprep.subr.mxu0 0.0
      %506 = vmatpush1.msra.mxu0 %v278
      %507 = vmatprep.subr.mxu0 0.0
      %508 = vmatpush1.msra.mxu0 %v277
      %509 = vmatprep.subr.mxu0 0.0
      %510 = vmatpush1.msra.mxu0 %v276
      %511 = vmatprep.subr.mxu0 0.0
      %512 = vmatpush1.msra.mxu0 %v275
      %513 = vmatprep.subr.mxu0 0.0
      %514 = vmatpush1.msra.mxu0 %v274
      %515 = vmatprep.subr.mxu0 0.0
      %516 = vmatpush2.msra.mxu0 0.0
      %517 = vmatprep.subr.mxu0 0.0
      %518 = vmatpush2.msra.mxu0 0.0
      %519 = vmatprep.subr.mxu0 0.0
      %520 = vmatpush2.msra.mxu0 0.0
      %521 = vmatprep.subr.mxu0 0.0
      %522 = vmatpush2.msra.mxu0 0.0
      %523 = vmatprep.subr.mxu0 0.0
      %524 = vmatpush2.msra.mxu0 0.0
      %525 = vmatprep.subr.mxu0 0.0
      %526 = vmatpush2.msra.mxu0 0.0
      %527 = vmatprep.subr.mxu0 0.0
      %528 = vmatpush2.msra.mxu0 0.0
      %529 = vmatprep.subr.mxu0 0.0
      %530 = vmatpush2.msra.mxu0 0.0
      %531 = vmatprep.subr.mxu0 0.0
      %532 = vmatpush2.msra.mxu0 0.0
      %533 = vmatprep.subr.mxu0 0.0
      %534 = vmatpush2.msra.mxu0 0.0
      %535 = vmatprep.subr.mxu0 0.0
      %536 = vmatpush2.msra.mxu0 0.0
      %537 = vmatprep.subr.mxu0 0.0
      %538 = vmatpush2.msra.mxu0 0.0
      %539 = vmatprep.subr.mxu0 0.0
      %540 = vmatpush2.msra.mxu0 0.0
      %541 = vmatprep.subr.mxu0 0.0
      %542 = vmatpush2.msra.mxu0 0.0
      %543 = vmatprep.subr.mxu0 0.0
      %544 = vmatpush2.msra.mxu0 0.0
      %545 = vmatprep.subr.mxu0 0.0
      %546 = vmatpush2.msra.mxu0 0.0
      %547 = vmatprep.mubr.f32.mxu0 0.0
      %548 = vmatmul.mubr.f32.gmra.mxu0 %v292
      %v549 = vpop.f32.mrf.mxu0
      %v550 = vadd.f32 %v288, %v549
      %v551 = vpop.f32.mrf.mxu0
      %552 = vmatprep.mubr.f32.mxu0 0.0
      %553 = vmatmul.mubr.f32.gmra.mxu0 %v295
      %v554 = vpop.f32.mrf.mxu0
      %v555 = vadd.f32 %v288, %v554
      %v556 = vpop.f32.mrf.mxu0
      %557 = vmatprep.mubr.f32.mxu0 0.0
      %558 = vmatmul.mubr.f32.gmra.mxu0 %v298
      %v559 = vpop.f32.mrf.mxu0
      %v560 = vadd.f32 %v288, %v559
      %v561 = vpop.f32.mrf.mxu0
      %562 = vmatprep.mubr.f32.mxu0 0.0
      %563 = vmatmul.mubr.f32.gmra.mxu0 %v301
      %v564 = vpop.f32.mrf.mxu0
      %v565 = vadd.f32 %v288, %v564
      %v566 = vpop.f32.mrf.mxu0
      %567 = vmatprep.mubr.f32.mxu0 0.0
      %568 = vmatmul.mubr.f32.gmra.mxu0 %v304
      %v569 = vpop.f32.mrf.mxu0
      %v570 = vadd.f32 %v288, %v569
      %v571 = vpop.f32.mrf.mxu0
      %572 = vmatprep.mubr.f32.mxu0 0.0
      %573 = vmatmul.mubr.f32.gmra.mxu0 %v307
      %v574 = vpop.f32.mrf.mxu0
      %v575 = vadd.f32 %v288, %v574
      %v576 = vpop.f32.mrf.mxu0
      %577 = vmatprep.mubr.f32.mxu0 0.0
      %578 = vmatmul.mubr.f32.gmra.mxu0 %v310
      %v579 = vpop.f32.mrf.mxu0
      %v580 = vadd.f32 %v288, %v579
      %v581 = vpop.f32.mrf.mxu0
      %582 = vmatprep.mubr.f32.mxu0 0.0
      %583 = vmatmul.mubr.f32.gmra.mxu0 %v313
      %v584 = vpop.f32.mrf.mxu0
      %v585 = vadd.f32 %v288, %v584
      %v586 = vpop.f32.mrf.mxu0
      %587 = vmatprep.mubr.f32.mxu0 0.0
      %588 = vmatmul.mubr.f32.gmra.mxu0 %v316
      %v589 = vpop.f32.mrf.mxu0
      %v590 = vadd.f32 %v288, %v589
      %v591 = vpop.f32.mrf.mxu0
      %592 = vmatprep.mubr.f32.mxu0 0.0
      %593 = vmatmul.mubr.f32.gmra.mxu0 %v319
      %v594 = vpop.f32.mrf.mxu0
      %v595 = vadd.f32 %v288, %v594
      %v596 = vpop.f32.mrf.mxu0
      %597 = vmatprep.mubr.f32.mxu0 0.0
      %598 = vmatmul.mubr.f32.gmra.mxu0 %v322
      %v599 = vpop.f32.mrf.mxu0
      %v600 = vadd.f32 %v288, %v599
      %v601 = vpop.f32.mrf.mxu0
      %602 = vmatprep.mubr.f32.mxu0 0.0
      %603 = vmatmul.mubr.f32.gmra.mxu0 %v325
      %v604 = vpop.f32.mrf.mxu0
      %v605 = vadd.f32 %v288, %v604
      %v606 = vpop.f32.mrf.mxu0
      %607 = vmatprep.mubr.f32.mxu0 0.0
      %608 = vmatmul.mubr.f32.gmra.mxu0 %v328
      %v609 = vpop.f32.mrf.mxu0
      %v610 = vadd.f32 %v288, %v609
      %v611 = vpop.f32.mrf.mxu0
      %612 = vmatprep.mubr.f32.mxu0 0.0
      %613 = vmatmul.mubr.f32.gmra.mxu0 %v331
      %v614 = vpop.f32.mrf.mxu0
      %v615 = vadd.f32 %v288, %v614
      %v616 = vpop.f32.mrf.mxu0
      %617 = vmatprep.mubr.f32.mxu0 0.0
      %618 = vmatmul.mubr.f32.gmra.mxu0 %v334
      %v619 = vpop.f32.mrf.mxu0
      %v620 = vadd.f32 %v288, %v619
      %v621 = vpop.f32.mrf.mxu0
      %622 = vmatprep.mubr.f32.mxu0 0.0
      %623 = vmatmul.mubr.f32.gmra.mxu0 %v337
      %v624 = vpop.f32.mrf.mxu0
      %v625 = vadd.f32 %v288, %v624
      %v626 = vpop.f32.mrf.mxu0
      %627 = vmatprep.mubr.f32.mxu0 0.0
      %628 = vmatmul.mubr.f32.gmra.mxu0 %v340
      %v629 = vpop.f32.mrf.mxu0
      %v630 = vadd.f32 %v288, %v629
      %v631 = vpop.f32.mrf.mxu0
      %632 = vmatprep.mubr.f32.mxu0 0.0
      %633 = vmatmul.mubr.f32.gmra.mxu0 %v343
      %v634 = vpop.f32.mrf.mxu0
      %v635 = vadd.f32 %v288, %v634
      %v636 = vpop.f32.mrf.mxu0
      %637 = vmatprep.mubr.f32.mxu0 0.0
      %638 = vmatmul.mubr.f32.gmra.mxu0 %v346
      %v639 = vpop.f32.mrf.mxu0
      %v640 = vadd.f32 %v288, %v639
      %v641 = vpop.f32.mrf.mxu0
      %642 = vmatprep.mubr.f32.mxu0 0.0
      %643 = vmatmul.mubr.f32.gmra.mxu0 %v349
      %v644 = vpop.f32.mrf.mxu0
      %v645 = vadd.f32 %v288, %v644
      %v646 = vpop.f32.mrf.mxu0
      %647 = vmatprep.mubr.f32.mxu0 0.0
      %648 = vmatmul.mubr.f32.gmra.mxu0 %v352
      %v649 = vpop.f32.mrf.mxu0
      %v650 = vadd.f32 %v288, %v649
      %v651 = vpop.f32.mrf.mxu0
      %652 = vmatprep.mubr.f32.mxu0 0.0
      %653 = vmatmul.mubr.f32.gmra.mxu0 %v355
      %v654 = vpop.f32.mrf.mxu0
      %v655 = vadd.f32 %v288, %v654
      %v656 = vpop.f32.mrf.mxu0
      %657 = vmatprep.mubr.f32.mxu0 0.0
      %658 = vmatmul.mubr.f32.gmra.mxu0 %v358
      %v659 = vpop.f32.mrf.mxu0
      %v660 = vadd.f32 %v288, %v659
      %v661 = vpop.f32.mrf.mxu0
      %662 = vmatprep.mubr.f32.mxu0 0.0
      %663 = vmatmul.mubr.f32.gmra.mxu0 %v361
      %v664 = vpop.f32.mrf.mxu0
      %v665 = vadd.f32 %v288, %v664
      %v666 = vpop.f32.mrf.mxu0
      %667 = vmatprep.mubr.f32.mxu0 0.0
      %668 = vmatmul.mubr.f32.gmra.mxu0 %v364
      %v669 = vpop.f32.mrf.mxu0
      %v670 = vadd.f32 %v288, %v669
      %v671 = vpop.f32.mrf.mxu0
      %672 = vmatprep.mubr.f32.mxu0 0.0
      %673 = vmatmul.mubr.f32.gmra.mxu0 %v367
      %v674 = vpop.f32.mrf.mxu0
      %v675 = vadd.f32 %v288, %v674
      %v676 = vpop.f32.mrf.mxu0
      %677 = vmatprep.mubr.f32.mxu0 0.0
      %678 = vmatmul.mubr.f32.gmra.mxu0 %v370
      %v679 = vpop.f32.mrf.mxu0
      %v680 = vadd.f32 %v288, %v679
      %v681 = vpop.f32.mrf.mxu0
      %682 = vmatprep.mubr.f32.mxu0 0.0
      %683 = vmatmul.mubr.f32.gmra.mxu0 %v373
      %v684 = vpop.f32.mrf.mxu0
      %v685 = vadd.f32 %v288, %v684
      %v686 = vpop.f32.mrf.mxu0
      %687 = vmatprep.mubr.f32.mxu0 0.0
      %688 = vmatmul.mubr.f32.gmra.mxu0 %v376
      %v689 = vpop.f32.mrf.mxu0
      %v690 = vadd.f32 %v288, %v689
      %v691 = vpop.f32.mrf.mxu0
      %692 = vmatprep.mubr.f32.mxu0 0.0
      %693 = vmatmul.mubr.f32.gmra.mxu0 %v379
      %v694 = vpop.f32.mrf.mxu0
      %v695 = vadd.f32 %v288, %v694
      %v696 = vpop.f32.mrf.mxu0
      %697 = vmatprep.mubr.f32.mxu0 0.0
      %698 = vmatmul.mubr.f32.gmra.mxu0 %v382
      %v699 = vpop.f32.mrf.mxu0
      %v700 = vadd.f32 %v288, %v699
      %v701 = vpop.f32.mrf.mxu0
      %702 = vmatprep.mubr.f32.mxu0 0.0
      %703 = vmatmul.mubr.f32.gmra.mxu0 %v385
      %v704 = vpop.f32.mrf.mxu0
      %v705 = vadd.f32 %v288, %v704
      %v706 = vpop.f32.mrf.mxu0
      %707 = vmatprep.mubr.f32.mxu0 0.0
      %708 = vmatmul.mubr.f32.gmra.mxu0 %v388
      %v709 = vpop.f32.mrf.mxu0
      %v710 = vadd.f32 %v288, %v709
      %v711 = vpop.f32.mrf.mxu0
      %712 = vmatprep.mubr.f32.mxu0 0.0
      %713 = vmatmul.mubr.f32.gmra.mxu0 %v391
      %v714 = vpop.f32.mrf.mxu0
      %v715 = vadd.f32 %v288, %v714
      %v716 = vpop.f32.mrf.mxu0
      %717 = vmatprep.mubr.f32.mxu0 0.0
      %718 = vmatmul.mubr.f32.gmra.mxu0 %v394
      %v719 = vpop.f32.mrf.mxu0
      %v720 = vadd.f32 %v288, %v719
      %v721 = vpop.f32.mrf.mxu0
      %722 = vmatprep.mubr.f32.mxu0 0.0
      %723 = vmatmul.mubr.f32.gmra.mxu0 %v397
      %v724 = vpop.f32.mrf.mxu0
      %v725 = vadd.f32 %v288, %v724
      %v726 = vpop.f32.mrf.mxu0
      %727 = vmatprep.mubr.f32.mxu0 0.0
      %728 = vmatmul.mubr.f32.gmra.mxu0 %v400
      %v729 = vpop.f32.mrf.mxu0
      %v730 = vadd.f32 %v288, %v729
      %v731 = vpop.f32.mrf.mxu0
      %732 = vmatprep.mubr.f32.mxu0 0.0
      %733 = vmatmul.mubr.f32.gmra.mxu0 %v403
      %v734 = vpop.f32.mrf.mxu0
      %v735 = vadd.f32 %v288, %v734
      %v736 = vpop.f32.mrf.mxu0
      %737 = vmatprep.mubr.f32.mxu0 0.0
      %738 = vmatmul.mubr.f32.gmra.mxu0 %v406
      %v739 = vpop.f32.mrf.mxu0
      %v740 = vadd.f32 %v288, %v739
      %v741 = vpop.f32.mrf.mxu0
      %742 = vmatprep.mubr.f32.mxu0 0.0
      %743 = vmatmul.mubr.f32.gmra.mxu0 %v409
      %v744 = vpop.f32.mrf.mxu0
      %v745 = vadd.f32 %v288, %v744
      %v746 = vpop.f32.mrf.mxu0
      %747 = vmatprep.mubr.f32.mxu0 0.0
      %748 = vmatmul.mubr.f32.gmra.mxu0 %v412
      %v749 = vpop.f32.mrf.mxu0
      %v750 = vadd.f32 %v288, %v749
      %v751 = vpop.f32.mrf.mxu0
      %752 = vmatprep.mubr.f32.mxu0 0.0
      %753 = vmatmul.mubr.f32.gmra.mxu0 %v415
      %v754 = vpop.f32.mrf.mxu0
      %v755 = vadd.f32 %v288, %v754
      %v756 = vpop.f32.mrf.mxu0
      %757 = vmatprep.mubr.f32.mxu0 0.0
      %758 = vmatmul.mubr.f32.gmra.mxu0 %v418
      %v759 = vpop.f32.mrf.mxu0
      %v760 = vadd.f32 %v288, %v759
      %v761 = vpop.f32.mrf.mxu0
      %762 = vmatprep.mubr.f32.mxu0 0.0
      %763 = vmatmul.mubr.f32.gmra.mxu0 %v421
      %v764 = vpop.f32.mrf.mxu0
      %v765 = vadd.f32 %v288, %v764
      %v766 = vpop.f32.mrf.mxu0
      %767 = vmatprep.mubr.f32.mxu0 0.0
      %768 = vmatmul.mubr.f32.gmra.mxu0 %v424
      %v769 = vpop.f32.mrf.mxu0
      %v770 = vadd.f32 %v288, %v769
      %v771 = vpop.f32.mrf.mxu0
      %772 = vmatprep.mubr.f32.mxu0 0.0
      %773 = vmatmul.mubr.f32.gmra.mxu0 %v427
      %v774 = vpop.f32.mrf.mxu0
      %v775 = vadd.f32 %v288, %v774
      %v776 = vpop.f32.mrf.mxu0
      %777 = vmatprep.mubr.f32.mxu0 0.0
      %778 = vmatmul.mubr.f32.gmra.mxu0 %v430
      %v779 = vpop.f32.mrf.mxu0
      %v780 = vadd.f32 %v288, %v779
      %v781 = vpop.f32.mrf.mxu0
      %782 = vmatprep.mubr.f32.mxu0 0.0
      %783 = vmatmul.mubr.f32.gmra.mxu0 %v433
      %v784 = vpop.f32.mrf.mxu0
      %v785 = vadd.f32 %v288, %v784
      %v786 = vpop.f32.mrf.mxu0
      %787 = vmatprep.mubr.f32.mxu0 0.0
      %788 = vmatmul.mubr.f32.gmra.mxu0 %v436
      %v789 = vpop.f32.mrf.mxu0
      %v790 = vadd.f32 %v288, %v789
      %v791 = vpop.f32.mrf.mxu0
      %792 = vmatprep.mubr.f32.mxu0 0.0
      %793 = vmatmul.mubr.f32.gmra.mxu0 %v439
      %v794 = vpop.f32.mrf.mxu0
      %v795 = vadd.f32 %v288, %v794
      %v796 = vpop.f32.mrf.mxu0
      %797 = vmatprep.mubr.f32.mxu0 0.0
      %798 = vmatmul.mubr.f32.gmra.mxu0 %v442
      %v799 = vpop.f32.mrf.mxu0
      %v800 = vadd.f32 %v288, %v799
      %v801 = vpop.f32.mrf.mxu0
      %802 = vmatprep.mubr.f32.mxu0 0.0
      %803 = vmatmul.mubr.f32.gmra.mxu0 %v445
      %v804 = vpop.f32.mrf.mxu0
      %v805 = vadd.f32 %v288, %v804
      %v806 = vpop.f32.mrf.mxu0
      %807 = vmatprep.mubr.f32.mxu0 0.0
      %808 = vmatmul.mubr.f32.gmra.mxu0 %v448
      %v809 = vpop.f32.mrf.mxu0
      %v810 = vadd.f32 %v288, %v809
      %v811 = vpop.f32.mrf.mxu0
      %812 = vmatprep.mubr.f32.mxu0 0.0
      %813 = vmatmul.mubr.f32.gmra.mxu0 %v451
      %v814 = vpop.f32.mrf.mxu0
      %v815 = vadd.f32 %v288, %v814
      %v816 = vpop.f32.mrf.mxu0
      %817 = vmatprep.mubr.f32.mxu0 0.0
      %818 = vmatmul.mubr.f32.gmra.mxu0 %v454
      %v819 = vpop.f32.mrf.mxu0
      %v820 = vadd.f32 %v288, %v819
      %v821 = vpop.f32.mrf.mxu0
      %822 = vmatprep.mubr.f32.mxu0 0.0
      %823 = vmatmul.mubr.f32.gmra.mxu0 %v457
      %v824 = vpop.f32.mrf.mxu0
      %v825 = vadd.f32 %v288, %v824
      %v826 = vpop.f32.mrf.mxu0
      %827 = vmatprep.mubr.f32.mxu0 0.0
      %828 = vmatmul.mubr.f32.gmra.mxu0 %v460
      %v829 = vpop.f32.mrf.mxu0
      %v830 = vadd.f32 %v288, %v829
      %v831 = vpop.f32.mrf.mxu0
      %832 = vmatprep.mubr.f32.mxu0 0.0
      %833 = vmatmul.mubr.f32.gmra.mxu0 %v463
      %v834 = vpop.f32.mrf.mxu0
      %v835 = vadd.f32 %v288, %v834
      %v836 = vpop.f32.mrf.mxu0
      %837 = vmatprep.mubr.f32.mxu0 0.0
      %838 = vmatmul.mubr.f32.gmra.mxu0 %v466
      %v839 = vpop.f32.mrf.mxu0
      %v840 = vadd.f32 %v288, %v839
      %v841 = vpop.f32.mrf.mxu0
      %842 = vmatprep.mubr.f32.mxu0 0.0
      %843 = vmatmul.mubr.f32.gmra.mxu0 %v469
      %v844 = vpop.f32.mrf.mxu0
      %v845 = vadd.f32 %v288, %v844
      %v846 = vpop.f32.mrf.mxu0
      %847 = vmatprep.mubr.f32.mxu0 0.0
      %848 = vmatmul.mubr.f32.gmra.mxu0 %v472
      %v849 = vpop.f32.mrf.mxu0
      %v850 = vadd.f32 %v288, %v849
      %v851 = vpop.f32.mrf.mxu0
      %852 = vmatprep.mubr.f32.mxu0 0.0
      %853 = vmatmul.mubr.f32.gmra.mxu0 %v475
      %v854 = vpop.f32.mrf.mxu0
      %v855 = vadd.f32 %v288, %v854
      %v856 = vpop.f32.mrf.mxu0
      %857 = vmatprep.mubr.f32.mxu0 0.0
      %858 = vmatmul.mubr.f32.gmra.mxu0 %v478
      %v859 = vpop.f32.mrf.mxu0
      %v860 = vadd.f32 %v288, %v859
      %v861 = vpop.f32.mrf.mxu0
      %862 = vmatprep.mubr.f32.mxu0 0.0
      %863 = vmatmul.mubr.f32.gmra.mxu0 %v481
      %v864 = vpop.f32.mrf.mxu0
      %v865 = vadd.f32 %v288, %v864
      %v866 = vpop.f32.mrf.mxu0
      %867 = vdwg.mxu0
      %vm868 = vcmask 31744
      %869 = vst.msk [vmem:[%s208] sm:$0xff] %vm868, %v550
      %870 = vst.msk [vmem:[%s208 + $0x8] sm:$0xff] %vm868, %v555
      %871 = vst.msk [vmem:[%s208 + $0x10] sm:$0xff] %vm868, %v560
      %872 = vst.msk [vmem:[%s208 + $0x18] sm:$0xff] %vm868, %v565
      %873 = vst.msk [vmem:[%s208 + $0x20] sm:$0xff] %vm868, %v570
      %874 = vst.msk [vmem:[%s208 + $0x28] sm:$0xff] %vm868, %v575
      %875 = vst.msk [vmem:[%s208 + $0x30] sm:$0xff] %vm868, %v580
      %876 = vst.msk [vmem:[%s208 + $0x38] sm:$0xff] %vm868, %v585
      %877 = vst.msk [vmem:[%s208 + $0x40] sm:$0xff] %vm868, %v590
      %878 = vst.msk [vmem:[%s208 + $0x48] sm:$0xff] %vm868, %v595
      %879 = vst.msk [vmem:[%s208 + $0x50] sm:$0xff] %vm868, %v600
      %880 = vst.msk [vmem:[%s208 + $0x58] sm:$0xff] %vm868, %v605
      %881 = vst.msk [vmem:[%s208 + $0x60] sm:$0xff] %vm868, %v610
      %882 = vst.msk [vmem:[%s208 + $0x68] sm:$0xff] %vm868, %v615
      %883 = vst.msk [vmem:[%s208 + $0x70] sm:$0xff] %vm868, %v620
      %884 = vst.msk [vmem:[%s208 + $0x78] sm:$0xff] %vm868, %v625
      %885 = vst.msk [vmem:[%s208 + $0x80] sm:$0xff] %vm868, %v630
      %886 = vst.msk [vmem:[%s208 + $0x88] sm:$0xff] %vm868, %v635
      %887 = vst.msk [vmem:[%s208 + $0x90] sm:$0xff] %vm868, %v640
      %888 = vst.msk [vmem:[%s208 + $0x98] sm:$0xff] %vm868, %v645
      %889 = vst.msk [vmem:[%s208 + $0xa0] sm:$0xff] %vm868, %v650
      %890 = vst.msk [vmem:[%s208 + $0xa8] sm:$0xff] %vm868, %v655
      %891 = vst.msk [vmem:[%s208 + $0xb0] sm:$0xff] %vm868, %v660
      %892 = vst.msk [vmem:[%s208 + $0xb8] sm:$0xff] %vm868, %v665
      %893 = vst.msk [vmem:[%s208 + $0xc0] sm:$0xff] %vm868, %v670
      %894 = vst.msk [vmem:[%s208 + $0xc8] sm:$0xff] %vm868, %v675
      %895 = vst.msk [vmem:[%s208 + $0xd0] sm:$0xff] %vm868, %v680
      %896 = vst.msk [vmem:[%s208 + $0xd8] sm:$0xff] %vm868, %v685
      %897 = vst.msk [vmem:[%s208 + $0xe0] sm:$0xff] %vm868, %v690
      %898 = vst.msk [vmem:[%s208 + $0xe8] sm:$0xff] %vm868, %v695
      %899 = vst.msk [vmem:[%s208 + $0xf0] sm:$0xff] %vm868, %v700
      %900 = vst.msk [vmem:[%s208 + $0xf8] sm:$0xff] %vm868, %v705
      %901 = vst.msk [vmem:[%s208 + $0x100] sm:$0xff] %vm868, %v710
      %902 = vst.msk [vmem:[%s208 + $0x108] sm:$0xff] %vm868, %v715
      %903 = vst.msk [vmem:[%s208 + $0x110] sm:$0xff] %vm868, %v720
      %904 = vst.msk [vmem:[%s208 + $0x118] sm:$0xff] %vm868, %v725
      %905 = vst.msk [vmem:[%s208 + $0x120] sm:$0xff] %vm868, %v730
      %906 = vst.msk [vmem:[%s208 + $0x128] sm:$0xff] %vm868, %v735
      %907 = vst.msk [vmem:[%s208 + $0x130] sm:$0xff] %vm868, %v740
      %908 = vst.msk [vmem:[%s208 + $0x138] sm:$0xff] %vm868, %v745
      %909 = vst.msk [vmem:[%s208 + $0x140] sm:$0xff] %vm868, %v750
      %910 = vst.msk [vmem:[%s208 + $0x148] sm:$0xff] %vm868, %v755
      %911 = vst.msk [vmem:[%s208 + $0x150] sm:$0xff] %vm868, %v760
      %912 = vst.msk [vmem:[%s208 + $0x158] sm:$0xff] %vm868, %v765
      %913 = vst.msk [vmem:[%s208 + $0x160] sm:$0xff] %vm868, %v770
      %914 = vst.msk [vmem:[%s208 + $0x168] sm:$0xff] %vm868, %v775
      %915 = vst.msk [vmem:[%s208 + $0x170] sm:$0xff] %vm868, %v780
      %916 = vst.msk [vmem:[%s208 + $0x178] sm:$0xff] %vm868, %v785
      %917 = vst.msk [vmem:[%s208 + $0x180] sm:$0xff] %vm868, %v790
      %918 = vst.msk [vmem:[%s208 + $0x188] sm:$0xff] %vm868, %v795
      %919 = vst.msk [vmem:[%s208 + $0x190] sm:$0xff] %vm868, %v800
      %920 = vst.msk [vmem:[%s208 + $0x198] sm:$0xff] %vm868, %v805
      %921 = vst.msk [vmem:[%s208 + $0x1a0] sm:$0xff] %vm868, %v810
      %922 = vst.msk [vmem:[%s208 + $0x1a8] sm:$0xff] %vm868, %v815
      %923 = vst.msk [vmem:[%s208 + $0x1b0] sm:$0xff] %vm868, %v820
      %924 = vst.msk [vmem:[%s208 + $0x1b8] sm:$0xff] %vm868, %v825
      %925 = vst.msk [vmem:[%s208 + $0x1c0] sm:$0xff] %vm868, %v830
      %926 = vst.msk [vmem:[%s208 + $0x1c8] sm:$0xff] %vm868, %v835
      %927 = vst.msk [vmem:[%s208 + $0x1d0] sm:$0xff] %vm868, %v840
      %928 = vst.msk [vmem:[%s208 + $0x1d8] sm:$0xff] %vm868, %v845
      %929 = vst.msk [vmem:[%s208 + $0x1e0] sm:$0xff] %vm868, %v850
      %930 = vst.msk [vmem:[%s208 + $0x1e8] sm:$0xff] %vm868, %v855
      %931 = vst.msk [vmem:[%s208 + $0x1f0] sm:$0xff] %vm868, %v860
      %932 = vst.msk [vmem:[%s208 + $0x1f8] sm:$0xff] %vm868, %v865
      %s933 = smul.u32 64, %s19
      %p934 = scmp.lt.s32.totalorder %s18, 1
      %s935 = scalar_select %p934, %s18, 1
      %p936 = scmp.lt.s32.totalorder %s933, 511
      %s937 = scalar_select %p936, %s933, 511
      %s938 = smul.addr %s935, 512
      %s939 = sadd.s32 %s937, %s938
      %s940 = smul.addr %s939, 8
      %s941 = scalar_lea.vmem %s3, %s940
      // Predicated region
      $region33: #{distill_klml3_forward.7} parent=31 // pred_check
        %p942 = pneg %p116
      $region34: #{distill_klml3_forward.7} parent=31 // pred_check_branch
        %944 = sbr.rel (%p942) target = $region36
      $region35: #{distill_klml3_forward.7} parent=31 // pred_region
        %s945 = smul.u32 64, %s19
      $region36: #{distill_klml3_forward.7} parent=31 // pred_fallthru
        _
    $region32: #{distill_klml3_forward.7} parent=5 // pred_fallthru
      _
    %p946 = scmp.le.s32.totalorder 2, %s9
    // Predicated region
    $region37: #{distill_klml3_forward.7} parent=5 // pred_check
      %p947 = pneg %p946
    $region38: #{distill_klml3_forward.7} parent=5 // pred_check_branch
      %949 = sbr.rel (%p947) target = $region40
    $region39: #{distill_klml3_forward.7} parent=5 // pred_region
      %s950 = ssub.s32 %s9, 2
      // Predicated region
      $region41: #{distill_klml3_forward.7} parent=39 // pred_check
        %p951 = pneg %p122
      $region42: #{distill_klml3_forward.7} parent=39 // pred_check_branch
        %953 = sbr.rel (%p951) target = $region44
      $region43: #{distill_klml3_forward.7} parent=39 // pred_region
        %s954 = smul.u32 64, %s21
        %p955 = scmp.lt.s32.totalorder %s20, 1
        %s956 = scalar_select %p955, %s20, 1
        %p957 = scmp.lt.s32.totalorder %s954, 511
        %s958 = scalar_select %p957, %s954, 511
        %s959 = smul.addr %s956, 512
        %s960 = sadd.s32 %s958, %s959
        %s961 = smul.addr %s960, 8
        %s962 = scalar_lea.vmem %s3, %s961
      $region44: #{distill_klml3_forward.7} parent=39 // pred_fallthru
        _
    $region40: #{distill_klml3_forward.7} parent=5 // pred_fallthru
      _
  $region6: #{distill_klml3_forward.7} parent=0 // loop_footer
    %s13 = sadd.s32 1, %s9
  $region7: #{distill_klml3_forward.7} parent=0 // loop_footer_branch
    %8 = sbr.rel target = $region3
  $region8: #{distill_klml3_forward.7} parent=0 // loop_exit
    _

// kernel: distill_klml3_forward.8
$region0: #{distill_klml3_forward.8}
  #allocation0 [shape = 'u32[]', space=smem, size = 0x4, offset = 0x4, fixed_abs, tag = 'smem constant byte address 0x4 - core index']
  #allocation1 [shape = 'u32[144,128]{1,0:T(1,128)}', space=vmem, size = 0x12000, scoped, tag = 'internal scratch']
  %s0 = inlined_call_operand.vmem [shape: f32[2,4096,36], index: 0, kind: input, shape index: {}]
  %s1 = inlined_call_operand.vmem [shape: f32[36,4], index: 1, kind: input, shape index: {}]
  %s2 = inlined_call_operand.vmem [shape: f32[1,4], index: 2, kind: input, shape index: {}]
  %s3 = inlined_call_operand.vmem [shape: f32[2,4096,4], index: 3, kind: output, shape index: {}]
  %s4 = sld [smem:[#allocation0]]
  $region45: #{distill_klml3_forward.8} parent=0
    _
  %s6 = ssub.s32 1, %s4
  %s7 = scalar_select 0, %s6, %s4
  loop: start=0, step=1, limit=18
  $region2: #{distill_klml3_forward.8} parent=0 // loop_pre_header
    _
  $region3: #{distill_klml3_forward.8} parent=0 // loop_header
    %s9 = sphi 0, %s13
    %p10 = scmp.ge.s32.totalorder %s9, 18
    %s16 = sphi 0, %s28
    %s17 = sphi 0, %s24
    %s18 = sphi 0, %s16
    %s19 = sphi 0, %s17
    %s20 = sphi 0, %s18
    %s21 = sphi 0, %s19
    %s33 = sphi 0, %s35
    %s36 = sphi 0, %s33
    %s37 = sphi 0, %s36
    %s53 = sphi 0, %s37
    %s57 = sphi 0, %s57
    %s59 = sphi 0, %s57
    %s60 = sphi 0, %s59
    %s74 = sphi 0, %s60
    %s78 = sphi 0, %s78
    %s80 = sphi 0, %s78
    %s81 = sphi 0, %s80
    %s95 = sphi 0, %s81
    %s103 = sphi 0, %s105
    %s106 = sphi 0, %s103
    %s107 = sphi 0, %s106
    %s123 = sphi 0, %s107
  $region4: #{distill_klml3_forward.8} parent=0 // loop_header_branch
    %12 = sbr.rel (%p10) target = $region8
  $region5: #{distill_klml3_forward.8} parent=0 // loop_body
    %s14 = ssub.s32 %s9, 1
    %s15 = ssub.s32 %s9, 2
    %s22 = sadd.s32 1, %s17
    %p23 = scmp.ge.s32.totalorder %s22, 8
    %s24 = scalar_select %p23, 0, %s22
    %s25 = sadd.s32 1, %s16
    %s26 = scalar_select %p23, %s25, %s16
    %p27 = scmp.ge.s32.totalorder %s26, 2
    %s28 = scalar_select %p27, 0, %s26
    %s29 = ssub.s32 %s16, %s28
    %s30 = ssub.s32 %s17, %s24
    %s31 = sor.u32 %s29, %s30
    %p32 = scmp.eq.s32.totalorder %s31, 0
    %s34 = sadd.s32 %s33, 1
    %s35 = scalar_select %p32, %s33, %s34
    %p38 = pneg %p32
    %p39 = scmp.eq.s32.totalorder %s9, 15
    %p40 = por %p38, %p39
    %p41 = scmp.ne.s32.totalorder %s33, %s36
    %p42 = scmp.eq.s32.totalorder %s9, 0
    %p43 = por %p41, %p42
    %p44 = scmp.ne.s32.totalorder %s33, %s36
    %p45 = scmp.eq.s32.totalorder %s14, 15
    %p46 = por %p44, %p45
    %p47 = scmp.ne.s32.totalorder %s36, %s37
    %p48 = scmp.eq.s32.totalorder %s14, 0
    %p49 = por %p47, %p48
    %p50 = scmp.ne.s32.totalorder %s36, %s37
    %p51 = scmp.eq.s32.totalorder %s15, 15
    %p52 = por %p50, %p51
    %p54 = scmp.ne.s32.totalorder %s37, %s53
    %p55 = scmp.eq.s32.totalorder %s15, 0
    %p56 = por %p54, %p55
    %s58 = sadd.s32 %s57, 1
    %p61 = scmp.eq.s32.totalorder %s9, 15
    %p62 = scmp.ne.s32.totalorder %s57, %s59
    %p63 = scmp.eq.s32.totalorder %s9, 0
    %p64 = por %p62, %p63
    %p65 = scmp.ne.s32.totalorder %s57, %s59
    %p66 = scmp.eq.s32.totalorder %s14, 15
    %p67 = por %p65, %p66
    %p68 = scmp.ne.s32.totalorder %s59, %s60
    %p69 = scmp.eq.s32.totalorder %s14, 0
    %p70 = por %p68, %p69
    %p71 = scmp.ne.s32.totalorder %s59, %s60
    %p72 = scmp.eq.s32.totalorder %s15, 15
    %p73 = por %p71, %p72
    %p75 = scmp.ne.s32.totalorder %s60, %s74
    %p76 = scmp.eq.s32.totalorder %s15, 0
    %p77 = por %p75, %p76
    %s79 = sadd.s32 %s78, 1
    %p82 = scmp.eq.s32.totalorder %s9, 15
    %p83 = scmp.ne.s32.totalorder %s78, %s80
    %p84 = scmp.eq.s32.totalorder %s9, 0
    %p85 = por %p83, %p84
    %p86 = scmp.ne.s32.totalorder %s78, %s80
    %p87 = scmp.eq.s32.totalorder %s14, 15
    %p88 = por %p86, %p87
    %p89 = scmp.ne.s32.totalorder %s80, %s81
    %p90 = scmp.eq.s32.totalorder %s14, 0
    %p91 = por %p89, %p90
    %p92 = scmp.ne.s32.totalorder %s80, %s81
    %p93 = scmp.eq.s32.totalorder %s15, 15
    %p94 = por %p92, %p93
    %p96 = scmp.ne.s32.totalorder %s81, %s95
    %p97 = scmp.eq.s32.totalorder %s15, 0
    %p98 = por %p96, %p97
    %s99 = ssub.s32 %s16, %s28
    %s100 = ssub.s32 %s17, %s24
    %s101 = sor.u32 %s99, %s100
    %p102 = scmp.eq.s32.totalorder %s101, 0
    %s104 = sadd.s32 %s103, 1
    %s105 = scalar_select %p102, %s103, %s104
    %p108 = pneg %p102
    %p109 = scmp.eq.s32.totalorder %s9, 15
    %p110 = por %p108, %p109
    %p111 = scmp.ne.s32.totalorder %s103, %s106
    %p112 = scmp.eq.s32.totalorder %s9, 0
    %p113 = por %p111, %p112
    %p114 = scmp.ne.s32.totalorder %s103, %s106
    %p115 = scmp.eq.s32.totalorder %s14, 15
    %p116 = por %p114, %p115
    %p117 = scmp.ne.s32.totalorder %s106, %s107
    %p118 = scmp.eq.s32.totalorder %s14, 0
    %p119 = por %p117, %p118
    %p120 = scmp.ne.s32.totalorder %s106, %s107
    %p121 = scmp.eq.s32.totalorder %s15, 15
    %p122 = por %p120, %p121
    %p124 = scmp.ne.s32.totalorder %s107, %s123
    %p125 = scmp.eq.s32.totalorder %s15, 0
    %p126 = por %p124, %p125
    %p127 = scmp.le.s32.totalorder 1, %s9
    %p128 = scmp.lt.s32.totalorder %s9, 17
    %p129 = pnand %p127, %p128
    %p130 = pneg %p129
    // Predicated region
    $region9: #{distill_klml3_forward.8} parent=5 // pred_check
      _
    $region10: #{distill_klml3_forward.8} parent=5 // pred_check_branch
      %132 = sbr.rel (%p129) target = $region12
    $region11: #{distill_klml3_forward.8} parent=5 // pred_region
      %s133 = ssub.s32 %s9, 1
      // Predicated region
      $region13: #{distill_klml3_forward.8} parent=11 // pred_check
        %p134 = pneg %p70
      $region14: #{distill_klml3_forward.8} parent=11 // pred_check_branch
        %136 = sbr.rel (%p134) target = $region16
      $region15: #{distill_klml3_forward.8} parent=11 // pred_region
        _
      $region16: #{distill_klml3_forward.8} parent=11 // pred_fallthru
        _
      // Predicated region
      $region17: #{distill_klml3_forward.8} parent=11 // pred_check
        %p137 = pneg %p91
      $region18: #{distill_klml3_forward.8} parent=11 // pred_check_branch
        %139 = sbr.rel (%p137) target = $region20
      $region19: #{distill_klml3_forward.8} parent=11 // pred_region
        _
      $region20: #{distill_klml3_forward.8} parent=11 // pred_fallthru
        _
    $region12: #{distill_klml3_forward.8} parent=5 // pred_fallthru
      _
    %p140 = scmp.lt.s32.totalorder %s9, 16
    // Predicated region
    $region21: #{distill_klml3_forward.8} parent=5 // pred_check
      %p141 = pneg %p140
    $region22: #{distill_klml3_forward.8} parent=5 // pred_check_branch
      %143 = sbr.rel (%p141) target = $region24
    $region23: #{distill_klml3_forward.8} parent=5 // pred_region
      // Predicated region
      $region25: #{distill_klml3_forward.8} parent=23 // pred_check
        %p144 = pneg %p43
      $region26: #{distill_klml3_forward.8} parent=23 // pred_check_branch
        %146 = sbr.rel (%p144) target = $region28
      $region27: #{distill_klml3_forward.8} parent=23 // pred_region
        %s147 = smul.u32 64, %s17
        %p148 = scmp.lt.s32.totalorder %s16, 1
        %s149 = scalar_select %p148, %s16, 1
        %p150 = scmp.lt.s32.totalorder %s147, 511
        %s151 = scalar_select %p150, %s147, 511
        %s152 = smul.addr %s149, 512
        %s153 = sadd.s32 %s151, %s152
        %s154 = smul.addr %s153, 8
        %s155 = scalar_lea.vmem %s0, %s154
        %s156 = smul.u32 64, %s17
      $region28: #{distill_klml3_forward.8} parent=23 // pred_fallthru
        _
    $region24: #{distill_klml3_forward.8} parent=5 // pred_fallthru
      _
    %p157 = scmp.le.s32.totalorder 1, %s9
    %p158 = scmp.lt.s32.totalorder %s9, 17
    %p159 = pnand %p157, %p158
    %p160 = pneg %p159
    // Predicated region
    $region29: #{distill_klml3_forward.8} parent=5 // pred_check
      _
    $region30: #{distill_klml3_forward.8} parent=5 // pred_check_branch
      %162 = sbr.rel (%p159) target = $region32
    $region31: #{distill_klml3_forward.8} parent=5 // pred_region
      %s163 = ssub.s32 %s9, 1
      %s164 = smul.u32 64, %s19
      %p165 = scmp.lt.s32.totalorder %s18, 1
      %s166 = scalar_select %p165, %s18, 1
      %p167 = scmp.lt.s32.totalorder %s164, 511
      %s168 = scalar_select %p167, %s164, 511
      %s169 = smul.addr %s166, 512
      %s170 = sadd.s32 %s168, %s169
      %s171 = smul.addr %s170, 8
      %s172 = scalar_lea.vmem %s0, %s171
      %p173 = pneg %p49
      %p174 = pneg %p46
      %p175 = pneg %p70
      %p176 = pneg %p67
      %p177 = pneg %p91
      %p178 = pneg %p88
      %p179 = pneg %p119
      %p180 = pneg %p116
      %s181 = smul.u32 64, %s19
      %p182 = scmp.lt.s32.totalorder %s18, 1
      %s183 = scalar_select %p182, %s18, 1
      %p184 = scmp.lt.s32.totalorder %s181, 511
      %s185 = scalar_select %p184, %s181, 511
      %s186 = smul.addr %s183, 512
      %s187 = sadd.s32 %s185, %s186
      %s188 = smul.addr %s187, 8
      %s189 = scalar_lea.vmem %s3, %s188
      %s190 = smul.u32 64, %s19
      %p191 = scmp.lt.s32.totalorder %s18, 1
      %s192 = scalar_select %p191, %s18, 1
      %p193 = scmp.lt.s32.totalorder %s190, 511
      %s194 = scalar_select %p193, %s190, 511
      %s195 = smul.addr %s192, 512
      %s196 = sadd.s32 %s194, %s195
      %s197 = smul.addr %s196, 8
      %s198 = scalar_lea.vmem %s0, %s197
      %s199 = smul.u32 64, %s19
      %s200 = smul.u32 64, %s19
      %p201 = scmp.lt.s32.totalorder %s18, 1
      %s202 = scalar_select %p201, %s18, 1
      %p203 = scmp.lt.s32.totalorder %s200, 511
      %s204 = scalar_select %p203, %s200, 511
      %s205 = smul.addr %s202, 512
      %s206 = sadd.s32 %s204, %s205
      %s207 = smul.addr %s206, 8
      %s208 = scalar_lea.vmem %s3, %s207
      %s209 = smul.u32 64, %s19
      %v210 = vld [vmem:[%s198] sm:$0xff]
      %v211 = vld [vmem:[%s198 + $0x8] sm:$0xff]
      %v212 = vld [vmem:[%s198 + $0x10] sm:$0xff]
      %v213 = vld [vmem:[%s198 + $0x18] sm:$0xff]
      %v214 = vld [vmem:[%s198 + $0x20] sm:$0xff]
      %v215 = vld [vmem:[%s198 + $0x28] sm:$0xff]
      %v216 = vld [vmem:[%s198 + $0x30] sm:$0xff]
      %v217 = vld [vmem:[%s198 + $0x38] sm:$0xff]
      %v218 = vld [vmem:[%s198 + $0x40] sm:$0xff]
      %v219 = vld [vmem:[%s198 + $0x48] sm:$0xff]
      %v220 = vld [vmem:[%s198 + $0x50] sm:$0xff]
      %v221 = vld [vmem:[%s198 + $0x58] sm:$0xff]
      %v222 = vld [vmem:[%s198 + $0x60] sm:$0xff]
      %v223 = vld [vmem:[%s198 + $0x68] sm:$0xff]
      %v224 = vld [vmem:[%s198 + $0x70] sm:$0xff]
      %v225 = vld [vmem:[%s198 + $0x78] sm:$0xff]
      %v226 = vld [vmem:[%s198 + $0x80] sm:$0xff]
      %v227 = vld [vmem:[%s198 + $0x88] sm:$0xff]
      %v228 = vld [vmem:[%s198 + $0x90] sm:$0xff]
      %v229 = vld [vmem:[%s198 + $0x98] sm:$0xff]
      %v230 = vld [vmem:[%s198 + $0xa0] sm:$0xff]
      %v231 = vld [vmem:[%s198 + $0xa8] sm:$0xff]
      %v232 = vld [vmem:[%s198 + $0xb0] sm:$0xff]
      %v233 = vld [vmem:[%s198 + $0xb8] sm:$0xff]
      %v234 = vld [vmem:[%s198 + $0xc0] sm:$0xff]
      %v235 = vld [vmem:[%s198 + $0xc8] sm:$0xff]
      %v236 = vld [vmem:[%s198 + $0xd0] sm:$0xff]
      %v237 = vld [vmem:[%s198 + $0xd8] sm:$0xff]
      %v238 = vld [vmem:[%s198 + $0xe0] sm:$0xff]
      %v239 = vld [vmem:[%s198 + $0xe8] sm:$0xff]
      %v240 = vld [vmem:[%s198 + $0xf0] sm:$0xff]
      %v241 = vld [vmem:[%s198 + $0xf8] sm:$0xff]
      %v242 = vld [vmem:[%s198 + $0x100] sm:$0xff]
      %v243 = vld [vmem:[%s198 + $0x108] sm:$0xff]
      %v244 = vld [vmem:[%s198 + $0x110] sm:$0xff]
      %v245 = vld [vmem:[%s198 + $0x118] sm:$0xff]
      %v246 = vld [vmem:[%s198 + $0x120] sm:$0xff]
      %v247 = vld [vmem:[%s198 + $0x128] sm:$0xff]
      %v248 = vld [vmem:[%s198 + $0x130] sm:$0xff]
      %v249 = vld [vmem:[%s198 + $0x138] sm:$0xff]
      %v250 = vld [vmem:[%s198 + $0x140] sm:$0xff]
      %v251 = vld [vmem:[%s198 + $0x148] sm:$0xff]
      %v252 = vld [vmem:[%s198 + $0x150] sm:$0xff]
      %v253 = vld [vmem:[%s198 + $0x158] sm:$0xff]
      %v254 = vld [vmem:[%s198 + $0x160] sm:$0xff]
      %v255 = vld [vmem:[%s198 + $0x168] sm:$0xff]
      %v256 = vld [vmem:[%s198 + $0x170] sm:$0xff]
      %v257 = vld [vmem:[%s198 + $0x178] sm:$0xff]
      %v258 = vld [vmem:[%s198 + $0x180] sm:$0xff]
      %v259 = vld [vmem:[%s198 + $0x188] sm:$0xff]
      %v260 = vld [vmem:[%s198 + $0x190] sm:$0xff]
      %v261 = vld [vmem:[%s198 + $0x198] sm:$0xff]
      %v262 = vld [vmem:[%s198 + $0x1a0] sm:$0xff]
      %v263 = vld [vmem:[%s198 + $0x1a8] sm:$0xff]
      %v264 = vld [vmem:[%s198 + $0x1b0] sm:$0xff]
      %v265 = vld [vmem:[%s198 + $0x1b8] sm:$0xff]
      %v266 = vld [vmem:[%s198 + $0x1c0] sm:$0xff]
      %v267 = vld [vmem:[%s198 + $0x1c8] sm:$0xff]
      %v268 = vld [vmem:[%s198 + $0x1d0] sm:$0xff]
      %v269 = vld [vmem:[%s198 + $0x1d8] sm:$0xff]
      %v270 = vld [vmem:[%s198 + $0x1e0] sm:$0xff]
      %v271 = vld [vmem:[%s198 + $0x1e8] sm:$0xff]
      %v272 = vld [vmem:[%s198 + $0x1f0] sm:$0xff]
      %v273 = vld [vmem:[%s198 + $0x1f8] sm:$0xff]
      %v274 = vld [vmem:[%s1] sm:$0xff]
      %v275 = vld [vmem:[%s1 + $0x8] sm:$0xff]
      %v276 = vld [vmem:[%s1 + $0x10] sm:$0xff]
      %v277 = vld [vmem:[%s1 + $0x18] sm:$0xff]
      %v278 = vld [vmem:[%s1 + $0x20] sm:$0xf]
      %v279 = vld [vmem:[%s2] sm:$0x1]
      %v281 = vlaneseq
      %v282 = vshrl.u32 %v281, 7
      %v283 = vsub.s32 0, %v282
      %v284 = vrot.slane %v279, %v283
      %vm286 = vcmask 293888
      %v288 = vsel %vm286, %v210, 0
      %v291 = vsel %vm286, %v211, 0
      %v294 = vsel %vm286, %v212, 0
      %v297 = vsel %vm286, %v213, 0
      %v300 = vsel %vm286, %v214, 0
      %v303 = vsel %vm286, %v215, 0
      %v306 = vsel %vm286, %v216, 0
      %v309 = vsel %vm286, %v217, 0
      %v312 = vsel %vm286, %v218, 0
      %v315 = vsel %vm286, %v219, 0
      %v318 = vsel %vm286, %v220, 0
      %v321 = vsel %vm286, %v221, 0
      %v324 = vsel %vm286, %v222, 0
      %v327 = vsel %vm286, %v223, 0
      %v330 = vsel %vm286, %v224, 0
      %v333 = vsel %vm286, %v225, 0
      %v336 = vsel %vm286, %v226, 0
      %v339 = vsel %vm286, %v227, 0
      %v342 = vsel %vm286, %v228, 0
      %v345 = vsel %vm286, %v229, 0
      %v348 = vsel %vm286, %v230, 0
      %v351 = vsel %vm286, %v231, 0
      %v354 = vsel %vm286, %v232, 0
      %v357 = vsel %vm286, %v233, 0
      %v360 = vsel %vm286, %v234, 0
      %v363 = vsel %vm286, %v235, 0
      %v366 = vsel %vm286, %v236, 0
      %v369 = vsel %vm286, %v237, 0
      %v372 = vsel %vm286, %v238, 0
      %v375 = vsel %vm286, %v239, 0
      %v378 = vsel %vm286, %v240, 0
      %v381 = vsel %vm286, %v241, 0
      %v384 = vsel %vm286, %v242, 0
      %v387 = vsel %vm286, %v243, 0
      %v390 = vsel %vm286, %v244, 0
      %v393 = vsel %vm286, %v245, 0
      %v396 = vsel %vm286, %v246, 0
      %v399 = vsel %vm286, %v247, 0
      %v402 = vsel %vm286, %v248, 0
      %v405 = vsel %vm286, %v249, 0
      %v408 = vsel %vm286, %v250, 0
      %v411 = vsel %vm286, %v251, 0
      %v414 = vsel %vm286, %v252, 0
      %v417 = vsel %vm286, %v253, 0
      %v420 = vsel %vm286, %v254, 0
      %v423 = vsel %vm286, %v255, 0
      %v426 = vsel %vm286, %v256, 0
      %v429 = vsel %vm286, %v257, 0
      %v432 = vsel %vm286, %v258, 0
      %v435 = vsel %vm286, %v259, 0
      %v438 = vsel %vm286, %v260, 0
      %v441 = vsel %vm286, %v261, 0
      %v444 = vsel %vm286, %v262, 0
      %v447 = vsel %vm286, %v263, 0
      %v450 = vsel %vm286, %v264, 0
      %v453 = vsel %vm286, %v265, 0
      %v456 = vsel %vm286, %v266, 0
      %v459 = vsel %vm286, %v267, 0
      %v462 = vsel %vm286, %v268, 0
      %v465 = vsel %vm286, %v269, 0
      %v468 = vsel %vm286, %v270, 0
      %v471 = vsel %vm286, %v271, 0
      %v474 = vsel %vm286, %v272, 0
      %v477 = vsel %vm286, %v273, 0
      %vm479 = vcmask 1043456
      %v481 = vsel %vm479, %v278, 0
      %483 = vmatprep.subr.mxu0 0.0
      %484 = vmatpush1.msra.mxu0 0.0
      %485 = vmatprep.subr.mxu0 0.0
      %486 = vmatpush1.msra.mxu0 0.0
      %487 = vmatprep.subr.mxu0 0.0
      %488 = vmatpush1.msra.mxu0 0.0
      %489 = vmatprep.subr.mxu0 0.0
      %490 = vmatpush1.msra.mxu0 0.0
      %491 = vmatprep.subr.mxu0 0.0
      %492 = vmatpush1.msra.mxu0 0.0
      %493 = vmatprep.subr.mxu0 0.0
      %494 = vmatpush1.msra.mxu0 0.0
      %495 = vmatprep.subr.mxu0 0.0
      %496 = vmatpush1.msra.mxu0 0.0
      %497 = vmatprep.subr.mxu0 0.0
      %498 = vmatpush1.msra.mxu0 0.0
      %499 = vmatprep.subr.mxu0 0.0
      %500 = vmatpush1.msra.mxu0 0.0
      %501 = vmatprep.subr.mxu0 0.0
      %502 = vmatpush1.msra.mxu0 0.0
      %503 = vmatprep.subr.mxu0 0.0
      %504 = vmatpush1.msra.mxu0 0.0
      %505 = vmatprep.subr.mxu0 0.0
      %506 = vmatpush1.msra.mxu0 %v481
      %507 = vmatprep.subr.mxu0 0.0
      %508 = vmatpush1.msra.mxu0 %v277
      %509 = vmatprep.subr.mxu0 0.0
      %510 = vmatpush1.msra.mxu0 %v276
      %511 = vmatprep.subr.mxu0 0.0
      %512 = vmatpush1.msra.mxu0 %v275
      %513 = vmatprep.subr.mxu0 0.0
      %514 = vmatpush1.msra.mxu0 %v274
      %515 = vmatprep.subr.mxu0 0.0
      %516 = vmatpush2.msra.mxu0 0.0
      %517 = vmatprep.subr.mxu0 0.0
      %518 = vmatpush2.msra.mxu0 0.0
      %519 = vmatprep.subr.mxu0 0.0
      %520 = vmatpush2.msra.mxu0 0.0
      %521 = vmatprep.subr.mxu0 0.0
      %522 = vmatpush2.msra.mxu0 0.0
      %523 = vmatprep.subr.mxu0 0.0
      %524 = vmatpush2.msra.mxu0 0.0
      %525 = vmatprep.subr.mxu0 0.0
      %526 = vmatpush2.msra.mxu0 0.0
      %527 = vmatprep.subr.mxu0 0.0
      %528 = vmatpush2.msra.mxu0 0.0
      %529 = vmatprep.subr.mxu0 0.0
      %530 = vmatpush2.msra.mxu0 0.0
      %531 = vmatprep.subr.mxu0 0.0
      %532 = vmatpush2.msra.mxu0 0.0
      %533 = vmatprep.subr.mxu0 0.0
      %534 = vmatpush2.msra.mxu0 0.0
      %535 = vmatprep.subr.mxu0 0.0
      %536 = vmatpush2.msra.mxu0 0.0
      %537 = vmatprep.subr.mxu0 0.0
      %538 = vmatpush2.msra.mxu0 0.0
      %539 = vmatprep.subr.mxu0 0.0
      %540 = vmatpush2.msra.mxu0 0.0
      %541 = vmatprep.subr.mxu0 0.0
      %542 = vmatpush2.msra.mxu0 0.0
      %543 = vmatprep.subr.mxu0 0.0
      %544 = vmatpush2.msra.mxu0 0.0
      %545 = vmatprep.subr.mxu0 0.0
      %546 = vmatpush2.msra.mxu0 0.0
      %547 = vmatprep.mubr.f32.mxu0 0.0
      %548 = vmatmul.mubr.f32.gmra.mxu0 %v288
      %v549 = vpop.f32.mrf.mxu0
      %v550 = vadd.f32 %v284, %v549
      %v551 = vpop.f32.mrf.mxu0
      %552 = vmatprep.mubr.f32.mxu0 0.0
      %553 = vmatmul.mubr.f32.gmra.mxu0 %v291
      %v554 = vpop.f32.mrf.mxu0
      %v555 = vadd.f32 %v284, %v554
      %v556 = vpop.f32.mrf.mxu0
      %557 = vmatprep.mubr.f32.mxu0 0.0
      %558 = vmatmul.mubr.f32.gmra.mxu0 %v294
      %v559 = vpop.f32.mrf.mxu0
      %v560 = vadd.f32 %v284, %v559
      %v561 = vpop.f32.mrf.mxu0
      %562 = vmatprep.mubr.f32.mxu0 0.0
      %563 = vmatmul.mubr.f32.gmra.mxu0 %v297
      %v564 = vpop.f32.mrf.mxu0
      %v565 = vadd.f32 %v284, %v564
      %v566 = vpop.f32.mrf.mxu0
      %567 = vmatprep.mubr.f32.mxu0 0.0
      %568 = vmatmul.mubr.f32.gmra.mxu0 %v300
      %v569 = vpop.f32.mrf.mxu0
      %v570 = vadd.f32 %v284, %v569
      %v571 = vpop.f32.mrf.mxu0
      %572 = vmatprep.mubr.f32.mxu0 0.0
      %573 = vmatmul.mubr.f32.gmra.mxu0 %v303
      %v574 = vpop.f32.mrf.mxu0
      %v575 = vadd.f32 %v284, %v574
      %v576 = vpop.f32.mrf.mxu0
      %577 = vmatprep.mubr.f32.mxu0 0.0
      %578 = vmatmul.mubr.f32.gmra.mxu0 %v306
      %v579 = vpop.f32.mrf.mxu0
      %v580 = vadd.f32 %v284, %v579
      %v581 = vpop.f32.mrf.mxu0
      %582 = vmatprep.mubr.f32.mxu0 0.0
      %583 = vmatmul.mubr.f32.gmra.mxu0 %v309
      %v584 = vpop.f32.mrf.mxu0
      %v585 = vadd.f32 %v284, %v584
      %v586 = vpop.f32.mrf.mxu0
      %587 = vmatprep.mubr.f32.mxu0 0.0
      %588 = vmatmul.mubr.f32.gmra.mxu0 %v312
      %v589 = vpop.f32.mrf.mxu0
      %v590 = vadd.f32 %v284, %v589
      %v591 = vpop.f32.mrf.mxu0
      %592 = vmatprep.mubr.f32.mxu0 0.0
      %593 = vmatmul.mubr.f32.gmra.mxu0 %v315
      %v594 = vpop.f32.mrf.mxu0
      %v595 = vadd.f32 %v284, %v594
      %v596 = vpop.f32.mrf.mxu0
      %597 = vmatprep.mubr.f32.mxu0 0.0
      %598 = vmatmul.mubr.f32.gmra.mxu0 %v318
      %v599 = vpop.f32.mrf.mxu0
      %v600 = vadd.f32 %v284, %v599
      %v601 = vpop.f32.mrf.mxu0
      %602 = vmatprep.mubr.f32.mxu0 0.0
      %603 = vmatmul.mubr.f32.gmra.mxu0 %v321
      %v604 = vpop.f32.mrf.mxu0
      %v605 = vadd.f32 %v284, %v604
      %v606 = vpop.f32.mrf.mxu0
      %607 = vmatprep.mubr.f32.mxu0 0.0
      %608 = vmatmul.mubr.f32.gmra.mxu0 %v324
      %v609 = vpop.f32.mrf.mxu0
      %v610 = vadd.f32 %v284, %v609
      %v611 = vpop.f32.mrf.mxu0
      %612 = vmatprep.mubr.f32.mxu0 0.0
      %613 = vmatmul.mubr.f32.gmra.mxu0 %v327
      %v614 = vpop.f32.mrf.mxu0
      %v615 = vadd.f32 %v284, %v614
      %v616 = vpop.f32.mrf.mxu0
      %617 = vmatprep.mubr.f32.mxu0 0.0
      %618 = vmatmul.mubr.f32.gmra.mxu0 %v330
      %v619 = vpop.f32.mrf.mxu0
      %v620 = vadd.f32 %v284, %v619
      %v621 = vpop.f32.mrf.mxu0
      %622 = vmatprep.mubr.f32.mxu0 0.0
      %623 = vmatmul.mubr.f32.gmra.mxu0 %v333
      %v624 = vpop.f32.mrf.mxu0
      %v625 = vadd.f32 %v284, %v624
      %v626 = vpop.f32.mrf.mxu0
      %627 = vmatprep.mubr.f32.mxu0 0.0
      %628 = vmatmul.mubr.f32.gmra.mxu0 %v336
      %v629 = vpop.f32.mrf.mxu0
      %v630 = vadd.f32 %v284, %v629
      %v631 = vpop.f32.mrf.mxu0
      %632 = vmatprep.mubr.f32.mxu0 0.0
      %633 = vmatmul.mubr.f32.gmra.mxu0 %v339
      %v634 = vpop.f32.mrf.mxu0
      %v635 = vadd.f32 %v284, %v634
      %v636 = vpop.f32.mrf.mxu0
      %637 = vmatprep.mubr.f32.mxu0 0.0
      %638 = vmatmul.mubr.f32.gmra.mxu0 %v342
      %v639 = vpop.f32.mrf.mxu0
      %v640 = vadd.f32 %v284, %v639
      %v641 = vpop.f32.mrf.mxu0
      %642 = vmatprep.mubr.f32.mxu0 0.0
      %643 = vmatmul.mubr.f32.gmra.mxu0 %v345
      %v644 = vpop.f32.mrf.mxu0
      %v645 = vadd.f32 %v284, %v644
      %v646 = vpop.f32.mrf.mxu0
      %647 = vmatprep.mubr.f32.mxu0 0.0
      %648 = vmatmul.mubr.f32.gmra.mxu0 %v348
      %v649 = vpop.f32.mrf.mxu0
      %v650 = vadd.f32 %v284, %v649
      %v651 = vpop.f32.mrf.mxu0
      %652 = vmatprep.mubr.f32.mxu0 0.0
      %653 = vmatmul.mubr.f32.gmra.mxu0 %v351
      %v654 = vpop.f32.mrf.mxu0
      %v655 = vadd.f32 %v284, %v654
      %v656 = vpop.f32.mrf.mxu0
      %657 = vmatprep.mubr.f32.mxu0 0.0
      %658 = vmatmul.mubr.f32.gmra.mxu0 %v354
      %v659 = vpop.f32.mrf.mxu0
      %v660 = vadd.f32 %v284, %v659
      %v661 = vpop.f32.mrf.mxu0
      %662 = vmatprep.mubr.f32.mxu0 0.0
      %663 = vmatmul.mubr.f32.gmra.mxu0 %v357
      %v664 = vpop.f32.mrf.mxu0
      %v665 = vadd.f32 %v284, %v664
      %v666 = vpop.f32.mrf.mxu0
      %667 = vmatprep.mubr.f32.mxu0 0.0
      %668 = vmatmul.mubr.f32.gmra.mxu0 %v360
      %v669 = vpop.f32.mrf.mxu0
      %v670 = vadd.f32 %v284, %v669
      %v671 = vpop.f32.mrf.mxu0
      %672 = vmatprep.mubr.f32.mxu0 0.0
      %673 = vmatmul.mubr.f32.gmra.mxu0 %v363
      %v674 = vpop.f32.mrf.mxu0
      %v675 = vadd.f32 %v284, %v674
      %v676 = vpop.f32.mrf.mxu0
      %677 = vmatprep.mubr.f32.mxu0 0.0
      %678 = vmatmul.mubr.f32.gmra.mxu0 %v366
      %v679 = vpop.f32.mrf.mxu0
      %v680 = vadd.f32 %v284, %v679
      %v681 = vpop.f32.mrf.mxu0
      %682 = vmatprep.mubr.f32.mxu0 0.0
      %683 = vmatmul.mubr.f32.gmra.mxu0 %v369
      %v684 = vpop.f32.mrf.mxu0
      %v685 = vadd.f32 %v284, %v684
      %v686 = vpop.f32.mrf.mxu0
      %687 = vmatprep.mubr.f32.mxu0 0.0
      %688 = vmatmul.mubr.f32.gmra.mxu0 %v372
      %v689 = vpop.f32.mrf.mxu0
      %v690 = vadd.f32 %v284, %v689
      %v691 = vpop.f32.mrf.mxu0
      %692 = vmatprep.mubr.f32.mxu0 0.0
      %693 = vmatmul.mubr.f32.gmra.mxu0 %v375
      %v694 = vpop.f32.mrf.mxu0
      %v695 = vadd.f32 %v284, %v694
      %v696 = vpop.f32.mrf.mxu0
      %697 = vmatprep.mubr.f32.mxu0 0.0
      %698 = vmatmul.mubr.f32.gmra.mxu0 %v378
      %v699 = vpop.f32.mrf.mxu0
      %v700 = vadd.f32 %v284, %v699
      %v701 = vpop.f32.mrf.mxu0
      %702 = vmatprep.mubr.f32.mxu0 0.0
      %703 = vmatmul.mubr.f32.gmra.mxu0 %v381
      %v704 = vpop.f32.mrf.mxu0
      %v705 = vadd.f32 %v284, %v704
      %v706 = vpop.f32.mrf.mxu0
      %707 = vmatprep.mubr.f32.mxu0 0.0
      %708 = vmatmul.mubr.f32.gmra.mxu0 %v384
      %v709 = vpop.f32.mrf.mxu0
      %v710 = vadd.f32 %v284, %v709
      %v711 = vpop.f32.mrf.mxu0
      %712 = vmatprep.mubr.f32.mxu0 0.0
      %713 = vmatmul.mubr.f32.gmra.mxu0 %v387
      %v714 = vpop.f32.mrf.mxu0
      %v715 = vadd.f32 %v284, %v714
      %v716 = vpop.f32.mrf.mxu0
      %717 = vmatprep.mubr.f32.mxu0 0.0
      %718 = vmatmul.mubr.f32.gmra.mxu0 %v390
      %v719 = vpop.f32.mrf.mxu0
      %v720 = vadd.f32 %v284, %v719
      %v721 = vpop.f32.mrf.mxu0
      %722 = vmatprep.mubr.f32.mxu0 0.0
      %723 = vmatmul.mubr.f32.gmra.mxu0 %v393
      %v724 = vpop.f32.mrf.mxu0
      %v725 = vadd.f32 %v284, %v724
      %v726 = vpop.f32.mrf.mxu0
      %727 = vmatprep.mubr.f32.mxu0 0.0
      %728 = vmatmul.mubr.f32.gmra.mxu0 %v396
      %v729 = vpop.f32.mrf.mxu0
      %v730 = vadd.f32 %v284, %v729
      %v731 = vpop.f32.mrf.mxu0
      %732 = vmatprep.mubr.f32.mxu0 0.0
      %733 = vmatmul.mubr.f32.gmra.mxu0 %v399
      %v734 = vpop.f32.mrf.mxu0
      %v735 = vadd.f32 %v284, %v734
      %v736 = vpop.f32.mrf.mxu0
      %737 = vmatprep.mubr.f32.mxu0 0.0
      %738 = vmatmul.mubr.f32.gmra.mxu0 %v402
      %v739 = vpop.f32.mrf.mxu0
      %v740 = vadd.f32 %v284, %v739
      %v741 = vpop.f32.mrf.mxu0
      %742 = vmatprep.mubr.f32.mxu0 0.0
      %743 = vmatmul.mubr.f32.gmra.mxu0 %v405
      %v744 = vpop.f32.mrf.mxu0
      %v745 = vadd.f32 %v284, %v744
      %v746 = vpop.f32.mrf.mxu0
      %747 = vmatprep.mubr.f32.mxu0 0.0
      %748 = vmatmul.mubr.f32.gmra.mxu0 %v408
      %v749 = vpop.f32.mrf.mxu0
      %v750 = vadd.f32 %v284, %v749
      %v751 = vpop.f32.mrf.mxu0
      %752 = vmatprep.mubr.f32.mxu0 0.0
      %753 = vmatmul.mubr.f32.gmra.mxu0 %v411
      %v754 = vpop.f32.mrf.mxu0
      %v755 = vadd.f32 %v284, %v754
      %v756 = vpop.f32.mrf.mxu0
      %757 = vmatprep.mubr.f32.mxu0 0.0
      %758 = vmatmul.mubr.f32.gmra.mxu0 %v414
      %v759 = vpop.f32.mrf.mxu0
      %v760 = vadd.f32 %v284, %v759
      %v761 = vpop.f32.mrf.mxu0
      %762 = vmatprep.mubr.f32.mxu0 0.0
      %763 = vmatmul.mubr.f32.gmra.mxu0 %v417
      %v764 = vpop.f32.mrf.mxu0
      %v765 = vadd.f32 %v284, %v764
      %v766 = vpop.f32.mrf.mxu0
      %767 = vmatprep.mubr.f32.mxu0 0.0
      %768 = vmatmul.mubr.f32.gmra.mxu0 %v420
      %v769 = vpop.f32.mrf.mxu0
      %v770 = vadd.f32 %v284, %v769
      %v771 = vpop.f32.mrf.mxu0
      %772 = vmatprep.mubr.f32.mxu0 0.0
      %773 = vmatmul.mubr.f32.gmra.mxu0 %v423
      %v774 = vpop.f32.mrf.mxu0
      %v775 = vadd.f32 %v284, %v774
      %v776 = vpop.f32.mrf.mxu0
      %777 = vmatprep.mubr.f32.mxu0 0.0
      %778 = vmatmul.mubr.f32.gmra.mxu0 %v426
      %v779 = vpop.f32.mrf.mxu0
      %v780 = vadd.f32 %v284, %v779
      %v781 = vpop.f32.mrf.mxu0
      %782 = vmatprep.mubr.f32.mxu0 0.0
      %783 = vmatmul.mubr.f32.gmra.mxu0 %v429
      %v784 = vpop.f32.mrf.mxu0
      %v785 = vadd.f32 %v284, %v784
      %v786 = vpop.f32.mrf.mxu0
      %787 = vmatprep.mubr.f32.mxu0 0.0
      %788 = vmatmul.mubr.f32.gmra.mxu0 %v432
      %v789 = vpop.f32.mrf.mxu0
      %v790 = vadd.f32 %v284, %v789
      %v791 = vpop.f32.mrf.mxu0
      %792 = vmatprep.mubr.f32.mxu0 0.0
      %793 = vmatmul.mubr.f32.gmra.mxu0 %v435
      %v794 = vpop.f32.mrf.mxu0
      %v795 = vadd.f32 %v284, %v794
      %v796 = vpop.f32.mrf.mxu0
      %797 = vmatprep.mubr.f32.mxu0 0.0
      %798 = vmatmul.mubr.f32.gmra.mxu0 %v438
      %v799 = vpop.f32.mrf.mxu0
      %v800 = vadd.f32 %v284, %v799
      %v801 = vpop.f32.mrf.mxu0
      %802 = vmatprep.mubr.f32.mxu0 0.0
      %803 = vmatmul.mubr.f32.gmra.mxu0 %v441
      %v804 = vpop.f32.mrf.mxu0
      %v805 = vadd.f32 %v284, %v804
      %v806 = vpop.f32.mrf.mxu0
      %807 = vmatprep.mubr.f32.mxu0 0.0
      %808 = vmatmul.mubr.f32.gmra.mxu0 %v444
      %v809 = vpop.f32.mrf.mxu0
      %v810 = vadd.f32 %v284, %v809
      %v811 = vpop.f32.mrf.mxu0
      %812 = vmatprep.mubr.f32.mxu0 0.0
      %813 = vmatmul.mubr.f32.gmra.mxu0 %v447
      %v814 = vpop.f32.mrf.mxu0
      %v815 = vadd.f32 %v284, %v814
      %v816 = vpop.f32.mrf.mxu0
      %817 = vmatprep.mubr.f32.mxu0 0.0
      %818 = vmatmul.mubr.f32.gmra.mxu0 %v450
      %v819 = vpop.f32.mrf.mxu0
      %v820 = vadd.f32 %v284, %v819
      %v821 = vpop.f32.mrf.mxu0
      %822 = vmatprep.mubr.f32.mxu0 0.0
      %823 = vmatmul.mubr.f32.gmra.mxu0 %v453
      %v824 = vpop.f32.mrf.mxu0
      %v825 = vadd.f32 %v284, %v824
      %v826 = vpop.f32.mrf.mxu0
      %827 = vmatprep.mubr.f32.mxu0 0.0
      %828 = vmatmul.mubr.f32.gmra.mxu0 %v456
      %v829 = vpop.f32.mrf.mxu0
      %v830 = vadd.f32 %v284, %v829
      %v831 = vpop.f32.mrf.mxu0
      %832 = vmatprep.mubr.f32.mxu0 0.0
      %833 = vmatmul.mubr.f32.gmra.mxu0 %v459
      %v834 = vpop.f32.mrf.mxu0
      %v835 = vadd.f32 %v284, %v834
      %v836 = vpop.f32.mrf.mxu0
      %837 = vmatprep.mubr.f32.mxu0 0.0
      %838 = vmatmul.mubr.f32.gmra.mxu0 %v462
      %v839 = vpop.f32.mrf.mxu0
      %v840 = vadd.f32 %v284, %v839
      %v841 = vpop.f32.mrf.mxu0
      %842 = vmatprep.mubr.f32.mxu0 0.0
      %843 = vmatmul.mubr.f32.gmra.mxu0 %v465
      %v844 = vpop.f32.mrf.mxu0
      %v845 = vadd.f32 %v284, %v844
      %v846 = vpop.f32.mrf.mxu0
      %847 = vmatprep.mubr.f32.mxu0 0.0
      %848 = vmatmul.mubr.f32.gmra.mxu0 %v468
      %v849 = vpop.f32.mrf.mxu0
      %v850 = vadd.f32 %v284, %v849
      %v851 = vpop.f32.mrf.mxu0
      %852 = vmatprep.mubr.f32.mxu0 0.0
      %853 = vmatmul.mubr.f32.gmra.mxu0 %v471
      %v854 = vpop.f32.mrf.mxu0
      %v855 = vadd.f32 %v284, %v854
      %v856 = vpop.f32.mrf.mxu0
      %857 = vmatprep.mubr.f32.mxu0 0.0
      %858 = vmatmul.mubr.f32.gmra.mxu0 %v474
      %v859 = vpop.f32.mrf.mxu0
      %v860 = vadd.f32 %v284, %v859
      %v861 = vpop.f32.mrf.mxu0
      %862 = vmatprep.mubr.f32.mxu0 0.0
      %863 = vmatmul.mubr.f32.gmra.mxu0 %v477
      %v864 = vpop.f32.mrf.mxu0
      %v865 = vadd.f32 %v284, %v864
      %v866 = vpop.f32.mrf.mxu0
      %867 = vdwg.mxu0
      %vm868 = vcmask 31744
      %869 = vst.msk [vmem:[%s208] sm:$0xff] %vm868, %v550
      %870 = vst.msk [vmem:[%s208 + $0x8] sm:$0xff] %vm868, %v555
      %871 = vst.msk [vmem:[%s208 + $0x10] sm:$0xff] %vm868, %v560
      %872 = vst.msk [vmem:[%s208 + $0x18] sm:$0xff] %vm868, %v565
      %873 = vst.msk [vmem:[%s208 + $0x20] sm:$0xff] %vm868, %v570
      %874 = vst.msk [vmem:[%s208 + $0x28] sm:$0xff] %vm868, %v575
      %875 = vst.msk [vmem:[%s208 + $0x30] sm:$0xff] %vm868, %v580
      %876 = vst.msk [vmem:[%s208 + $0x38] sm:$0xff] %vm868, %v585
      %877 = vst.msk [vmem:[%s208 + $0x40] sm:$0xff] %vm868, %v590
      %878 = vst.msk [vmem:[%s208 + $0x48] sm:$0xff] %vm868, %v595
      %879 = vst.msk [vmem:[%s208 + $0x50] sm:$0xff] %vm868, %v600
      %880 = vst.msk [vmem:[%s208 + $0x58] sm:$0xff] %vm868, %v605
      %881 = vst.msk [vmem:[%s208 + $0x60] sm:$0xff] %vm868, %v610
      %882 = vst.msk [vmem:[%s208 + $0x68] sm:$0xff] %vm868, %v615
      %883 = vst.msk [vmem:[%s208 + $0x70] sm:$0xff] %vm868, %v620
      %884 = vst.msk [vmem:[%s208 + $0x78] sm:$0xff] %vm868, %v625
      %885 = vst.msk [vmem:[%s208 + $0x80] sm:$0xff] %vm868, %v630
      %886 = vst.msk [vmem:[%s208 + $0x88] sm:$0xff] %vm868, %v635
      %887 = vst.msk [vmem:[%s208 + $0x90] sm:$0xff] %vm868, %v640
      %888 = vst.msk [vmem:[%s208 + $0x98] sm:$0xff] %vm868, %v645
      %889 = vst.msk [vmem:[%s208 + $0xa0] sm:$0xff] %vm868, %v650
      %890 = vst.msk [vmem:[%s208 + $0xa8] sm:$0xff] %vm868, %v655
      %891 = vst.msk [vmem:[%s208 + $0xb0] sm:$0xff] %vm868, %v660
      %892 = vst.msk [vmem:[%s208 + $0xb8] sm:$0xff] %vm868, %v665
      %893 = vst.msk [vmem:[%s208 + $0xc0] sm:$0xff] %vm868, %v670
      %894 = vst.msk [vmem:[%s208 + $0xc8] sm:$0xff] %vm868, %v675
      %895 = vst.msk [vmem:[%s208 + $0xd0] sm:$0xff] %vm868, %v680
      %896 = vst.msk [vmem:[%s208 + $0xd8] sm:$0xff] %vm868, %v685
      %897 = vst.msk [vmem:[%s208 + $0xe0] sm:$0xff] %vm868, %v690
      %898 = vst.msk [vmem:[%s208 + $0xe8] sm:$0xff] %vm868, %v695
      %899 = vst.msk [vmem:[%s208 + $0xf0] sm:$0xff] %vm868, %v700
      %900 = vst.msk [vmem:[%s208 + $0xf8] sm:$0xff] %vm868, %v705
      %901 = vst.msk [vmem:[%s208 + $0x100] sm:$0xff] %vm868, %v710
      %902 = vst.msk [vmem:[%s208 + $0x108] sm:$0xff] %vm868, %v715
      %903 = vst.msk [vmem:[%s208 + $0x110] sm:$0xff] %vm868, %v720
      %904 = vst.msk [vmem:[%s208 + $0x118] sm:$0xff] %vm868, %v725
      %905 = vst.msk [vmem:[%s208 + $0x120] sm:$0xff] %vm868, %v730
      %906 = vst.msk [vmem:[%s208 + $0x128] sm:$0xff] %vm868, %v735
      %907 = vst.msk [vmem:[%s208 + $0x130] sm:$0xff] %vm868, %v740
      %908 = vst.msk [vmem:[%s208 + $0x138] sm:$0xff] %vm868, %v745
      %909 = vst.msk [vmem:[%s208 + $0x140] sm:$0xff] %vm868, %v750
      %910 = vst.msk [vmem:[%s208 + $0x148] sm:$0xff] %vm868, %v755
      %911 = vst.msk [vmem:[%s208 + $0x150] sm:$0xff] %vm868, %v760
      %912 = vst.msk [vmem:[%s208 + $0x158] sm:$0xff] %vm868, %v765
      %913 = vst.msk [vmem:[%s208 + $0x160] sm:$0xff] %vm868, %v770
      %914 = vst.msk [vmem:[%s208 + $0x168] sm:$0xff] %vm868, %v775
      %915 = vst.msk [vmem:[%s208 + $0x170] sm:$0xff] %vm868, %v780
      %916 = vst.msk [vmem:[%s208 + $0x178] sm:$0xff] %vm868, %v785
      %917 = vst.msk [vmem:[%s208 + $0x180] sm:$0xff] %vm868, %v790
      %918 = vst.msk [vmem:[%s208 + $0x188] sm:$0xff] %vm868, %v795
      %919 = vst.msk [vmem:[%s208 + $0x190] sm:$0xff] %vm868, %v800
      %920 = vst.msk [vmem:[%s208 + $0x198] sm:$0xff] %vm868, %v805
      %921 = vst.msk [vmem:[%s208 + $0x1a0] sm:$0xff] %vm868, %v810
      %922 = vst.msk [vmem:[%s208 + $0x1a8] sm:$0xff] %vm868, %v815
      %923 = vst.msk [vmem:[%s208 + $0x1b0] sm:$0xff] %vm868, %v820
      %924 = vst.msk [vmem:[%s208 + $0x1b8] sm:$0xff] %vm868, %v825
      %925 = vst.msk [vmem:[%s208 + $0x1c0] sm:$0xff] %vm868, %v830
      %926 = vst.msk [vmem:[%s208 + $0x1c8] sm:$0xff] %vm868, %v835
      %927 = vst.msk [vmem:[%s208 + $0x1d0] sm:$0xff] %vm868, %v840
      %928 = vst.msk [vmem:[%s208 + $0x1d8] sm:$0xff] %vm868, %v845
      %929 = vst.msk [vmem:[%s208 + $0x1e0] sm:$0xff] %vm868, %v850
      %930 = vst.msk [vmem:[%s208 + $0x1e8] sm:$0xff] %vm868, %v855
      %931 = vst.msk [vmem:[%s208 + $0x1f0] sm:$0xff] %vm868, %v860
      %932 = vst.msk [vmem:[%s208 + $0x1f8] sm:$0xff] %vm868, %v865
      %s933 = smul.u32 64, %s19
      %p934 = scmp.lt.s32.totalorder %s18, 1
      %s935 = scalar_select %p934, %s18, 1
      %p936 = scmp.lt.s32.totalorder %s933, 511
      %s937 = scalar_select %p936, %s933, 511
      %s938 = smul.addr %s935, 512
      %s939 = sadd.s32 %s937, %s938
      %s940 = smul.addr %s939, 8
      %s941 = scalar_lea.vmem %s3, %s940
      // Predicated region
      $region33: #{distill_klml3_forward.8} parent=31 // pred_check
        %p942 = pneg %p116
      $region34: #{distill_klml3_forward.8} parent=31 // pred_check_branch
        %944 = sbr.rel (%p942) target = $region36
      $region35: #{distill_klml3_forward.8} parent=31 // pred_region
        %s945 = smul.u32 64, %s19
      $region36: #{distill_klml3_forward.8} parent=31 // pred_fallthru
        _
    $region32: #{distill_klml3_forward.8} parent=5 // pred_fallthru
      _
    %p946 = scmp.le.s32.totalorder 2, %s9
    // Predicated region
    $region37: #{distill_klml3_forward.8} parent=5 // pred_check
      %p947 = pneg %p946
    $region38: #{distill_klml3_forward.8} parent=5 // pred_check_branch
      %949 = sbr.rel (%p947) target = $region40
    $region39: #{distill_klml3_forward.8} parent=5 // pred_region
      %s950 = ssub.s32 %s9, 2
      // Predicated region
      $region41: #{distill_klml3_forward.8} parent=39 // pred_check
        %p951 = pneg %p122
      $region42: #{distill_klml3_forward.8} parent=39 // pred_check_branch
        %953 = sbr.rel (%p951) target = $region44
      $region43: #{distill_klml3_forward.8} parent=39 // pred_region
        %s954 = smul.u32 64, %s21
        %p955 = scmp.lt.s32.totalorder %s20, 1
        %s956 = scalar_select %p955, %s20, 1
        %p957 = scmp.lt.s32.totalorder %s954, 511
        %s958 = scalar_select %p957, %s954, 511
        %s959 = smul.addr %s956, 512
        %s960 = sadd.s32 %s958, %s959
        %s961 = smul.addr %s960, 8
        %s962 = scalar_lea.vmem %s3, %s961
      $region44: #{distill_klml3_forward.8} parent=39 // pred_fallthru
        _
    $region40: #{distill_klml3_forward.8} parent=5 // pred_fallthru
      _
  $region6: #{distill_klml3_forward.8} parent=0 // loop_footer
    %s13 = sadd.s32 1, %s9
  $region7: #{distill_klml3_forward.8} parent=0 // loop_footer_branch
    %8 = sbr.rel target = $region3
  $region8: #{distill_klml3_forward.8} parent=0 // loop_exit
    _

// kernel: distill_klml3_forward.9
$region0: #{distill_klml3_forward.9}
  #allocation0 [shape = 'u32[]', space=smem, size = 0x4, offset = 0x4, fixed_abs, tag = 'smem constant byte address 0x4 - core index']
  #allocation1 [shape = 'u32[144,128]{1,0:T(1,128)}', space=vmem, size = 0x12000, scoped, tag = 'internal scratch']
  %s0 = inlined_call_operand.vmem [shape: f32[4,8192], index: 0, kind: input, shape index: {}]
  %s1 = inlined_call_operand.vmem [shape: f32[4,8192], index: 1, kind: input, shape index: {}]
  %s2 = inlined_call_operand.hbm [shape: f32[1,1], index: 2, kind: output, shape index: {}]
  %s3 = sld [smem:[#allocation0]]
  $region49: #{distill_klml3_forward.9} parent=0
    _
  %s5 = ssub.s32 1, %s3
  %s6 = scalar_select 0, %s5, %s3
  $region1: #{distill_klml3_forward.9} parent=0
    #allocation2 [shape = 'u8[512]{0}', space=vmem, size = 0x400, scoped, tag = 'output window, operand 0, single buffered']
    #allocation3 [shape = 's32[2]{0}', space=sflag, size = 0x8, scoped, tag = 'scoped memory for distill_klml3_forward.9']
    %7 = vsyncpa [#allocation3], 0
    loop: start=0, step=1, limit=6
    $region2: #{distill_klml3_forward.9} parent=1 // loop_pre_header
      _
    $region3: #{distill_klml3_forward.9} parent=1 // loop_header
      %s9 = sphi 0, %s13
      %p10 = scmp.ge.s32.totalorder %s9, 6
      %s19 = sphi 0, %s21
      %s22 = sphi 0, %s19
      %s23 = sphi 0, %s22
      %s39 = sphi 0, %s23
      %s45 = sphi 0, %s47
      %s48 = sphi 0, %s45
      %s49 = sphi 0, %s48
      %s65 = sphi 0, %s49
      %s69 = sphi 0, %s69
      %s71 = sphi 0, %s69
      %s72 = sphi 0, %s71
      %s86 = sphi 0, %s72
    $region4: #{distill_klml3_forward.9} parent=1 // loop_header_branch
      %12 = sbr.rel (%p10) target = $region8
    $region5: #{distill_klml3_forward.9} parent=1 // loop_body
      %s14 = ssub.s32 %s9, 1
      %s15 = ssub.s32 %s9, 2
      %s16 = sadd.s32 %s9, 1
      %s17 = ssub.s32 %s9, %s16
      %p18 = scmp.eq.s32.totalorder %s17, 0
      %s20 = sadd.s32 %s19, 1
      %s21 = scalar_select %p18, %s19, %s20
      %p24 = pneg %p18
      %p25 = scmp.eq.s32.totalorder %s9, 3
      %p26 = por %p24, %p25
      %p27 = scmp.ne.s32.totalorder %s19, %s22
      %p28 = scmp.eq.s32.totalorder %s9, 0
      %p29 = por %p27, %p28
      %p30 = scmp.ne.s32.totalorder %s19, %s22
      %p31 = scmp.eq.s32.totalorder %s14, 3
      %p32 = por %p30, %p31
      %p33 = scmp.ne.s32.totalorder %s22, %s23
      %p34 = scmp.eq.s32.totalorder %s14, 0
      %p35 = por %p33, %p34
      %p36 = scmp.ne.s32.totalorder %s22, %s23
      %p37 = scmp.eq.s32.totalorder %s15, 3
      %p38 = por %p36, %p37
      %p40 = scmp.ne.s32.totalorder %s23, %s39
      %p41 = scmp.eq.s32.totalorder %s15, 0
      %p42 = por %p40, %p41
      %s43 = ssub.s32 %s9, %s16
      %p44 = scmp.eq.s32.totalorder %s43, 0
      %s46 = sadd.s32 %s45, 1
      %s47 = scalar_select %p44, %s45, %s46
      %p50 = pneg %p44
      %p51 = scmp.eq.s32.totalorder %s9, 3
      %p52 = por %p50, %p51
      %p53 = scmp.ne.s32.totalorder %s45, %s48
      %p54 = scmp.eq.s32.totalorder %s9, 0
      %p55 = por %p53, %p54
      %p56 = scmp.ne.s32.totalorder %s45, %s48
      %p57 = scmp.eq.s32.totalorder %s14, 3
      %p58 = por %p56, %p57
      %p59 = scmp.ne.s32.totalorder %s48, %s49
      %p60 = scmp.eq.s32.totalorder %s14, 0
      %p61 = por %p59, %p60
      %p62 = scmp.ne.s32.totalorder %s48, %s49
      %p63 = scmp.eq.s32.totalorder %s15, 3
      %p64 = por %p62, %p63
      %p66 = scmp.ne.s32.totalorder %s49, %s65
      %p67 = scmp.eq.s32.totalorder %s15, 0
      %p68 = por %p66, %p67
      %s70 = sadd.s32 %s69, 1
      %p73 = scmp.eq.s32.totalorder %s9, 3
      %p74 = scmp.ne.s32.totalorder %s69, %s71
      %p75 = scmp.eq.s32.totalorder %s9, 0
      %p76 = por %p74, %p75
      %p77 = scmp.ne.s32.totalorder %s69, %s71
      %p78 = scmp.eq.s32.totalorder %s14, 3
      %p79 = por %p77, %p78
      %p80 = scmp.ne.s32.totalorder %s71, %s72
      %p81 = scmp.eq.s32.totalorder %s14, 0
      %p82 = por %p80, %p81
      %p83 = scmp.ne.s32.totalorder %s71, %s72
      %p84 = scmp.eq.s32.totalorder %s15, 3
      %p85 = por %p83, %p84
      %p87 = scmp.ne.s32.totalorder %s72, %s86
      %p88 = scmp.eq.s32.totalorder %s15, 0
      %p89 = por %p87, %p88
      %p90 = scmp.le.s32.totalorder 1, %s9
      %p91 = scmp.lt.s32.totalorder %s9, 5
      %p92 = pnand %p90, %p91
      %p93 = pneg %p92
      // Predicated region
      $region9: #{distill_klml3_forward.9} parent=5 // pred_check
        _
      $region10: #{distill_klml3_forward.9} parent=5 // pred_check_branch
        %95 = sbr.rel (%p92) target = $region12
      $region11: #{distill_klml3_forward.9} parent=5 // pred_region
        %s96 = ssub.s32 %s9, 1
      $region12: #{distill_klml3_forward.9} parent=5 // pred_fallthru
        _
      %p97 = scmp.lt.s32.totalorder %s9, 4
      // Predicated region
      $region13: #{distill_klml3_forward.9} parent=5 // pred_check
        %p98 = pneg %p97
      $region14: #{distill_klml3_forward.9} parent=5 // pred_check_branch
        %100 = sbr.rel (%p98) target = $region16
      $region15: #{distill_klml3_forward.9} parent=5 // pred_region
        // Predicated region
        $region17: #{distill_klml3_forward.9} parent=15 // pred_check
          %p101 = pneg %p29
        $region18: #{distill_klml3_forward.9} parent=15 // pred_check_branch
          %103 = sbr.rel (%p101) target = $region20
        $region19: #{distill_klml3_forward.9} parent=15 // pred_region
          %s104 = smul.u32 16, %s9
          %p105 = scmp.lt.s32.totalorder %s104, 63
          %s106 = scalar_select %p105, %s104, 63
          %s107 = smul.addr %s106, 4
          %s108 = scalar_lea.vmem %s0, %s107
          %s109 = smul.u32 16, %s9
        $region20: #{distill_klml3_forward.9} parent=15 // pred_fallthru
          _
        // Predicated region
        $region21: #{distill_klml3_forward.9} parent=15 // pred_check
          %p110 = pneg %p55
        $region22: #{distill_klml3_forward.9} parent=15 // pred_check_branch
          %112 = sbr.rel (%p110) target = $region24
        $region23: #{distill_klml3_forward.9} parent=15 // pred_region
          %s113 = smul.u32 16, %s9
          %p114 = scmp.lt.s32.totalorder %s113, 63
          %s115 = scalar_select %p114, %s113, 63
          %s116 = smul.addr %s115, 4
          %s117 = scalar_lea.vmem %s1, %s116
          %s118 = smul.u32 16, %s9
        $region24: #{distill_klml3_forward.9} parent=15 // pred_fallthru
          _
      $region16: #{distill_klml3_forward.9} parent=5 // pred_fallthru
        _
      %p119 = scmp.le.s32.totalorder 1, %s9
      %p120 = scmp.lt.s32.totalorder %s9, 5
      %p121 = pnand %p119, %p120
      %p122 = pneg %p121
      // Predicated region
      $region25: #{distill_klml3_forward.9} parent=5 // pred_check
        _
      $region26: #{distill_klml3_forward.9} parent=5 // pred_check_branch
        %124 = sbr.rel (%p121) target = $region28
      $region27: #{distill_klml3_forward.9} parent=5 // pred_region
        %s125 = ssub.s32 %s9, 1
        %s126 = smul.u32 16, %s14
        %p127 = scmp.lt.s32.totalorder %s126, 63
        %s128 = scalar_select %p127, %s126, 63
        %s129 = smul.addr %s128, 4
        %s130 = scalar_lea.vmem %s0, %s129
        %p131 = pneg %p35
        %p132 = pneg %p32
        %s133 = smul.u32 16, %s14
        %p134 = scmp.lt.s32.totalorder %s133, 63
        %s135 = scalar_select %p134, %s133, 63
        %s136 = smul.addr %s135, 4
        %s137 = scalar_lea.vmem %s1, %s136
        %p138 = pneg %p61
        %p139 = pneg %p58
        %p140 = pneg %p82
        %p141 = pneg %p79
        %s142 = smul.u32 16, %s14
        %p143 = scmp.lt.s32.totalorder %s142, 63
        %s144 = scalar_select %p143, %s142, 63
        %s145 = smul.addr %s144, 4
        %s146 = scalar_lea.vmem %s0, %s145
        %s147 = smul.u32 16, %s14
        %s148 = smul.u32 16, %s14
        %p149 = scmp.lt.s32.totalorder %s148, 63
        %s150 = scalar_select %p149, %s148, 63
        %s151 = smul.addr %s150, 4
        %s152 = scalar_lea.vmem %s1, %s151
        %s153 = smul.u32 16, %s14
        %p154 = scmp.eq.s32.totalorder %s14, 0
        // Predicated region
        $region29: #{distill_klml3_forward.9} parent=27 // pred_check
          %p155 = pneg %p154
        $region30: #{distill_klml3_forward.9} parent=27 // pred_check_branch
          %157 = sbr.rel (%p155) target = $region32
        $region31: #{distill_klml3_forward.9} parent=27 // pred_region
          %vm158 = vcmask 0
          %159 = vst.msk [vmem:[#allocation2] sm:$0x1] %vm158, 0.0
        $region32: #{distill_klml3_forward.9} parent=27 // pred_fallthru
          _
        %v160 = vld [vmem:[%s146] sm:$0xff]
        %v161 = vld [vmem:[%s146 + $0x8] sm:$0xff]
        %v162 = vld [vmem:[%s146 + $0x10] sm:$0xff]
        %v163 = vld [vmem:[%s146 + $0x18] sm:$0xff]
        %v164 = vld [vmem:[%s146 + $0x20] sm:$0xff]
        %v165 = vld [vmem:[%s146 + $0x28] sm:$0xff]
        %v166 = vld [vmem:[%s146 + $0x30] sm:$0xff]
        %v167 = vld [vmem:[%s146 + $0x38] sm:$0xff]
        %v168 = vsub.f32 0.0, %v160
        %v169 = vsub.f32 0.0, %v161
        %v170 = vsub.f32 0.0, %v162
        %v171 = vsub.f32 0.0, %v163
        %v172 = vsub.f32 0.0, %v164
        %v173 = vsub.f32 0.0, %v165
        %v174 = vsub.f32 0.0, %v166
        %v175 = vsub.f32 0.0, %v167
        %v176 = vmul.f32 %v168, 0.25
        %v177 = vmul.f32 %v169, 0.25
        %v178 = vmul.f32 %v170, 0.25
        %v179 = vmul.f32 %v171, 0.25
        %v180 = vmul.f32 %v172, 0.25
        %v181 = vmul.f32 %v173, 0.25
        %v182 = vmul.f32 %v174, 0.25
        %v183 = vmul.f32 %v175, 0.25
        %v184 = vmul.f32 %v176, 1.442695
        %v185 = vpow.pop %v184
        %v186 = vmul.f32 %v177, 1.442695
        %v187 = vpow.pop %v186
        %v188 = vmul.f32 %v178, 1.442695
        %v189 = vpow.pop %v188
        %v190 = vmul.f32 %v179, 1.442695
        %v191 = vpow.pop %v190
        %v192 = vmul.f32 %v180, 1.442695
        %v193 = vpow.pop %v192
        %v194 = vmul.f32 %v181, 1.442695
        %v195 = vpow.pop %v194
        %v196 = vmul.f32 %v182, 1.442695
        %v197 = vpow.pop %v196
        %v198 = vmul.f32 %v183, 1.442695
        %v199 = vpow.pop %v198
        %v200 = vadd.f32 %v185, 1.0
        %v201 = vadd.f32 %v187, 1.0
        %v202 = vadd.f32 %v189, 1.0
        %v203 = vadd.f32 %v191, 1.0
        %v204 = vadd.f32 %v193, 1.0
        %v205 = vadd.f32 %v195, 1.0
        %v206 = vadd.f32 %v197, 1.0
        %v207 = vadd.f32 %v199, 1.0
        %v208 = vrcp.pop %v200
        %v209 = vrcp.pop %v201
        %v210 = vrcp.pop %v202
        %v211 = vrcp.pop %v203
        %v212 = vrcp.pop %v204
        %v213 = vrcp.pop %v205
        %v214 = vrcp.pop %v206
        %v215 = vrcp.pop %v207
        %v216 = vld [vmem:[%s152] sm:$0xff]
        %v217 = vld [vmem:[%s152 + $0x8] sm:$0xff]
        %v218 = vld [vmem:[%s152 + $0x10] sm:$0xff]
        %v219 = vld [vmem:[%s152 + $0x18] sm:$0xff]
        %v220 = vld [vmem:[%s152 + $0x20] sm:$0xff]
        %v221 = vld [vmem:[%s152 + $0x28] sm:$0xff]
        %v222 = vld [vmem:[%s152 + $0x30] sm:$0xff]
        %v223 = vld [vmem:[%s152 + $0x38] sm:$0xff]
        %v224 = vsub.f32 0.0, %v216
        %v225 = vsub.f32 0.0, %v217
        %v226 = vsub.f32 0.0, %v218
        %v227 = vsub.f32 0.0, %v219
        %v228 = vsub.f32 0.0, %v220
        %v229 = vsub.f32 0.0, %v221
        %v230 = vsub.f32 0.0, %v222
        %v231 = vsub.f32 0.0, %v223
        %v232 = vmul.f32 %v224, 0.25
        %v233 = vmul.f32 %v225, 0.25
        %v234 = vmul.f32 %v226, 0.25
        %v235 = vmul.f32 %v227, 0.25
        %v236 = vmul.f32 %v228, 0.25
        %v237 = vmul.f32 %v229, 0.25
        %v238 = vmul.f32 %v230, 0.25
        %v239 = vmul.f32 %v231, 0.25
        %v240 = vmul.f32 %v232, 1.442695
        %v241 = vpow.pop %v240
        %v242 = vmul.f32 %v233, 1.442695
        %v243 = vpow.pop %v242
        %v244 = vmul.f32 %v234, 1.442695
        %v245 = vpow.pop %v244
        %v246 = vmul.f32 %v235, 1.442695
        %v247 = vpow.pop %v246
        %v248 = vmul.f32 %v236, 1.442695
        %v249 = vpow.pop %v248
        %v250 = vmul.f32 %v237, 1.442695
        %v251 = vpow.pop %v250
        %v252 = vmul.f32 %v238, 1.442695
        %v253 = vpow.pop %v252
        %v254 = vmul.f32 %v239, 1.442695
        %v255 = vpow.pop %v254
        %v256 = vadd.f32 %v241, 1.0
        %v257 = vadd.f32 %v243, 1.0
        %v258 = vadd.f32 %v245, 1.0
        %v259 = vadd.f32 %v247, 1.0
        %v260 = vadd.f32 %v249, 1.0
        %v261 = vadd.f32 %v251, 1.0
        %v262 = vadd.f32 %v253, 1.0
        %v263 = vadd.f32 %v255, 1.0
        %v264 = vrcp.pop %v256
        %v265 = vrcp.pop %v257
        %v266 = vrcp.pop %v258
        %v267 = vrcp.pop %v259
        %v268 = vrcp.pop %v260
        %v269 = vrcp.pop %v261
        %v270 = vrcp.pop %v262
        %v271 = vrcp.pop %v263
        %v280 = vrot.slane %v208, 5
        %v281 = vrot.slane %v280, 4
        %v282 = vrot.slane %v209, 5
        %v283 = vrot.slane %v282, 4
        %v284 = vrot.slane %v210, 5
        %v285 = vrot.slane %v284, 4
        %v286 = vrot.slane %v211, 5
        %v287 = vrot.slane %v286, 4
        %v288 = vrot.slane %v212, 5
        %v289 = vrot.slane %v288, 4
        %v290 = vrot.slane %v213, 5
        %v291 = vrot.slane %v290, 4
        %v292 = vrot.slane %v214, 5
        %v293 = vrot.slane %v292, 4
        %v294 = vrot.slane %v215, 5
        %v295 = vrot.slane %v294, 4
        %v304 = vadd.f32 %v208, %v281
        %v305 = vadd.f32 %v209, %v283
        %v306 = vadd.f32 %v210, %v285
        %v307 = vadd.f32 %v211, %v287
        %v308 = vadd.f32 %v212, %v289
        %v309 = vadd.f32 %v213, %v291
        %v310 = vadd.f32 %v214, %v293
        %v311 = vadd.f32 %v215, %v295
        %v320 = vrot.slane %v264, 5
        %v321 = vrot.slane %v320, 4
        %v322 = vrot.slane %v265, 5
        %v323 = vrot.slane %v322, 4
        %v324 = vrot.slane %v266, 5
        %v325 = vrot.slane %v324, 4
        %v326 = vrot.slane %v267, 5
        %v327 = vrot.slane %v326, 4
        %v328 = vrot.slane %v268, 5
        %v329 = vrot.slane %v328, 4
        %v330 = vrot.slane %v269, 5
        %v331 = vrot.slane %v330, 4
        %v332 = vrot.slane %v270, 5
        %v333 = vrot.slane %v332, 4
        %v334 = vrot.slane %v271, 5
        %v335 = vrot.slane %v334, 4
        %v344 = vadd.f32 %v264, %v321
        %v345 = vadd.f32 %v265, %v323
        %v346 = vadd.f32 %v266, %v325
        %v347 = vadd.f32 %v267, %v327
        %v348 = vadd.f32 %v268, %v329
        %v349 = vadd.f32 %v269, %v331
        %v350 = vadd.f32 %v270, %v333
        %v351 = vadd.f32 %v271, %v335
        %v352 = vmax.f32 %v208, %v281
        %v353 = vmax.f32 %v209, %v283
        %v354 = vmax.f32 %v210, %v285
        %v355 = vmax.f32 %v211, %v287
        %v356 = vmax.f32 %v212, %v289
        %v357 = vmax.f32 %v213, %v291
        %v358 = vmax.f32 %v214, %v293
        %v359 = vmax.f32 %v215, %v295
        %v360 = vmax.f32 %v264, %v321
        %v361 = vmax.f32 %v265, %v323
        %v362 = vmax.f32 %v266, %v325
        %v363 = vmax.f32 %v267, %v327
        %v364 = vmax.f32 %v268, %v329
        %v365 = vmax.f32 %v269, %v331
        %v366 = vmax.f32 %v270, %v333
        %v367 = vmax.f32 %v271, %v335
        %v368 = vrot.slane %v208, 6
        %v369 = vrot.slane %v368, 4
        %v370 = vrot.slane %v209, 6
        %v371 = vrot.slane %v370, 4
        %v372 = vrot.slane %v210, 6
        %v373 = vrot.slane %v372, 4
        %v374 = vrot.slane %v211, 6
        %v375 = vrot.slane %v374, 4
        %v376 = vrot.slane %v212, 6
        %v377 = vrot.slane %v376, 4
        %v378 = vrot.slane %v213, 6
        %v379 = vrot.slane %v378, 4
        %v380 = vrot.slane %v214, 6
        %v381 = vrot.slane %v380, 4
        %v382 = vrot.slane %v215, 6
        %v383 = vrot.slane %v382, 4
        %v392 = vadd.f32 %v304, %v369
        %v393 = vadd.f32 %v305, %v371
        %v394 = vadd.f32 %v306, %v373
        %v395 = vadd.f32 %v307, %v375
        %v396 = vadd.f32 %v308, %v377
        %v397 = vadd.f32 %v309, %v379
        %v398 = vadd.f32 %v310, %v381
        %v399 = vadd.f32 %v311, %v383
        %v400 = vrot.slane %v264, 6
        %v401 = vrot.slane %v400, 4
        %v402 = vrot.slane %v265, 6
        %v403 = vrot.slane %v402, 4
        %v404 = vrot.slane %v266, 6
        %v405 = vrot.slane %v404, 4
        %v406 = vrot.slane %v267, 6
        %v407 = vrot.slane %v406, 4
        %v408 = vrot.slane %v268, 6
        %v409 = vrot.slane %v408, 4
        %v410 = vrot.slane %v269, 6
        %v411 = vrot.slane %v410, 4
        %v412 = vrot.slane %v270, 6
        %v413 = vrot.slane %v412, 4
        %v414 = vrot.slane %v271, 6
        %v415 = vrot.slane %v414, 4
        %v424 = vadd.f32 %v344, %v401
        %v425 = vadd.f32 %v345, %v403
        %v426 = vadd.f32 %v346, %v405
        %v427 = vadd.f32 %v347, %v407
        %v428 = vadd.f32 %v348, %v409
        %v429 = vadd.f32 %v349, %v411
        %v430 = vadd.f32 %v350, %v413
        %v431 = vadd.f32 %v351, %v415
        %v432 = vmax.f32 %v352, %v369
        %v433 = vmax.f32 %v353, %v371
        %v434 = vmax.f32 %v354, %v373
        %v435 = vmax.f32 %v355, %v375
        %v436 = vmax.f32 %v356, %v377
        %v437 = vmax.f32 %v357, %v379
        %v438 = vmax.f32 %v358, %v381
        %v439 = vmax.f32 %v359, %v383
        %v440 = vmax.f32 %v360, %v401
        %v441 = vmax.f32 %v361, %v403
        %v442 = vmax.f32 %v362, %v405
        %v443 = vmax.f32 %v363, %v407
        %v444 = vmax.f32 %v364, %v409
        %v445 = vmax.f32 %v365, %v411
        %v446 = vmax.f32 %v366, %v413
        %v447 = vmax.f32 %v367, %v415
        %v448 = vrot.slane %v208, 7
        %v449 = vrot.slane %v448, 4
        %v450 = vrot.slane %v209, 7
        %v451 = vrot.slane %v450, 4
        %v452 = vrot.slane %v210, 7
        %v453 = vrot.slane %v452, 4
        %v454 = vrot.slane %v211, 7
        %v455 = vrot.slane %v454, 4
        %v456 = vrot.slane %v212, 7
        %v457 = vrot.slane %v456, 4
        %v458 = vrot.slane %v213, 7
        %v459 = vrot.slane %v458, 4
        %v460 = vrot.slane %v214, 7
        %v461 = vrot.slane %v460, 4
        %v462 = vrot.slane %v215, 7
        %v463 = vrot.slane %v462, 4
        %v472 = vadd.f32 %v392, %v449
        %v473 = vadd.f32 %v393, %v451
        %v474 = vadd.f32 %v394, %v453
        %v475 = vadd.f32 %v395, %v455
        %v476 = vadd.f32 %v396, %v457
        %v477 = vadd.f32 %v397, %v459
        %v478 = vadd.f32 %v398, %v461
        %v479 = vadd.f32 %v399, %v463
        %v480 = vrot.slane %v264, 7
        %v481 = vrot.slane %v480, 4
        %v482 = vrot.slane %v265, 7
        %v483 = vrot.slane %v482, 4
        %v484 = vrot.slane %v266, 7
        %v485 = vrot.slane %v484, 4
        %v486 = vrot.slane %v267, 7
        %v487 = vrot.slane %v486, 4
        %v488 = vrot.slane %v268, 7
        %v489 = vrot.slane %v488, 4
        %v490 = vrot.slane %v269, 7
        %v491 = vrot.slane %v490, 4
        %v492 = vrot.slane %v270, 7
        %v493 = vrot.slane %v492, 4
        %v494 = vrot.slane %v271, 7
        %v495 = vrot.slane %v494, 4
        %v504 = vadd.f32 %v424, %v481
        %v505 = vadd.f32 %v425, %v483
        %v506 = vadd.f32 %v426, %v485
        %v507 = vadd.f32 %v427, %v487
        %v508 = vadd.f32 %v428, %v489
        %v509 = vadd.f32 %v429, %v491
        %v510 = vadd.f32 %v430, %v493
        %v511 = vadd.f32 %v431, %v495
        %v512 = vmax.f32 %v432, %v449
        %v513 = vmax.f32 %v433, %v451
        %v514 = vmax.f32 %v434, %v453
        %v515 = vmax.f32 %v435, %v455
        %v516 = vmax.f32 %v436, %v457
        %v517 = vmax.f32 %v437, %v459
        %v518 = vmax.f32 %v438, %v461
        %v519 = vmax.f32 %v439, %v463
        %v520 = vmax.f32 %v440, %v481
        %v521 = vmax.f32 %v441, %v483
        %v522 = vmax.f32 %v442, %v485
        %v523 = vmax.f32 %v443, %v487
        %v524 = vmax.f32 %v444, %v489
        %v525 = vmax.f32 %v445, %v491
        %v526 = vmax.f32 %v446, %v493
        %v527 = vmax.f32 %v447, %v495
        %v528 = vsub.f32 %v472, %v504
        %v529 = vsub.f32 %v473, %v505
        %v530 = vsub.f32 %v474, %v506
        %v531 = vsub.f32 %v475, %v507
        %v532 = vsub.f32 %v476, %v508
        %v533 = vsub.f32 %v477, %v509
        %v534 = vsub.f32 %v478, %v510
        %v535 = vsub.f32 %v479, %v511
        %v536 = vmul.f32 %v528, 0.25
        %v537 = vmul.f32 %v529, 0.25
        %v538 = vmul.f32 %v530, 0.25
        %v539 = vmul.f32 %v531, 0.25
        %v540 = vmul.f32 %v532, 0.25
        %v541 = vmul.f32 %v533, 0.25
        %v542 = vmul.f32 %v534, 0.25
        %v543 = vmul.f32 %v535, 0.25
        %v544 = vmul.f32 %v536, %v536
        %v545 = vmul.f32 %v537, %v537
        %v546 = vmul.f32 %v538, %v538
        %v547 = vmul.f32 %v539, %v539
        %v548 = vmul.f32 %v540, %v540
        %v549 = vmul.f32 %v541, %v541
        %v550 = vmul.f32 %v542, %v542
        %v551 = vmul.f32 %v543, %v543
        %v560 = vlaneseq
        %v561 = vshrl.u32 %v560, 7
        %v562 = vsub.s32 0, %v561
        %v563 = vrot.slane %v544, %v562
        %v564 = vlaneseq
        %v565 = vshrl.u32 %v564, 7
        %v566 = vsub.s32 4, %v565
        %v567 = vrot.slane %v544, %v566
        %v568 = vlaneseq
        %v569 = vshrl.u32 %v568, 7
        %v570 = vsub.s32 0, %v569
        %v571 = vrot.slane %v545, %v570
        %v572 = vlaneseq
        %v573 = vshrl.u32 %v572, 7
        %v574 = vsub.s32 4, %v573
        %v575 = vrot.slane %v545, %v574
        %v576 = vlaneseq
        %v577 = vshrl.u32 %v576, 7
        %v578 = vsub.s32 0, %v577
        %v579 = vrot.slane %v546, %v578
        %v580 = vlaneseq
        %v581 = vshrl.u32 %v580, 7
        %v582 = vsub.s32 4, %v581
        %v583 = vrot.slane %v546, %v582
        %v584 = vlaneseq
        %v585 = vshrl.u32 %v584, 7
        %v586 = vsub.s32 0, %v585
        %v587 = vrot.slane %v547, %v586
        %v588 = vlaneseq
        %v589 = vshrl.u32 %v588, 7
        %v590 = vsub.s32 4, %v589
        %v591 = vrot.slane %v547, %v590
        %v592 = vlaneseq
        %v593 = vshrl.u32 %v592, 7
        %v594 = vsub.s32 0, %v593
        %v595 = vrot.slane %v548, %v594
        %v596 = vlaneseq
        %v597 = vshrl.u32 %v596, 7
        %v598 = vsub.s32 4, %v597
        %v599 = vrot.slane %v548, %v598
        %v600 = vlaneseq
        %v601 = vshrl.u32 %v600, 7
        %v602 = vsub.s32 0, %v601
        %v603 = vrot.slane %v549, %v602
        %v604 = vlaneseq
        %v605 = vshrl.u32 %v604, 7
        %v606 = vsub.s32 4, %v605
        %v607 = vrot.slane %v549, %v606
        %v608 = vlaneseq
        %v609 = vshrl.u32 %v608, 7
        %v610 = vsub.s32 0, %v609
        %v611 = vrot.slane %v550, %v610
        %v612 = vlaneseq
        %v613 = vshrl.u32 %v612, 7
        %v614 = vsub.s32 4, %v613
        %v615 = vrot.slane %v550, %v614
        %v616 = vlaneseq
        %v617 = vshrl.u32 %v616, 7
        %v618 = vsub.s32 0, %v617
        %v619 = vrot.slane %v551, %v618
        %v620 = vlaneseq
        %v621 = vshrl.u32 %v620, 7
        %v622 = vsub.s32 4, %v621
        %v623 = vrot.slane %v551, %v622
        %vm640 = vcmask 1040384
        %v641 = vsel %vm640, %v563, 0.0
        %v642 = vsel %vm640, %v567, 0.0
        %v643 = vadd.f32 %v641, %v642
        %v644 = vsel %vm640, %v571, 0.0
        %v645 = vadd.f32 %v643, %v644
        %v646 = vsel %vm640, %v575, 0.0
        %v647 = vadd.f32 %v645, %v646
        %v648 = vsel %vm640, %v579, 0.0
        %v649 = vadd.f32 %v647, %v648
        %v650 = vsel %vm640, %v583, 0.0
        %v651 = vadd.f32 %v649, %v650
        %v652 = vsel %vm640, %v587, 0.0
        %v653 = vadd.f32 %v651, %v652
        %v654 = vsel %vm640, %v591, 0.0
        %v655 = vadd.f32 %v653, %v654
        %v656 = vsel %vm640, %v595, 0.0
        %v657 = vadd.f32 %v655, %v656
        %v658 = vsel %vm640, %v599, 0.0
        %v659 = vadd.f32 %v657, %v658
        %v660 = vsel %vm640, %v603, 0.0
        %v661 = vadd.f32 %v659, %v660
        %v662 = vsel %vm640, %v607, 0.0
        %v663 = vadd.f32 %v661, %v662
        %v664 = vsel %vm640, %v611, 0.0
        %v665 = vadd.f32 %v663, %v664
        %v666 = vsel %vm640, %v615, 0.0
        %v667 = vadd.f32 %v665, %v666
        %v668 = vsel %vm640, %v619, 0.0
        %v669 = vadd.f32 %v667, %v668
        %v670 = vsel %vm640, %v623, 0.0
        %v671 = vadd.f32 %v669, %v670
        %672 = vadd.xlane.f32.xlu0 %v671
        %v673 = vpop.xlane.xlu0 %672
        %v674 = vrot.slane %v673, 4
        %v675 = vadd.f32 %v673, %v674
        %v676 = vrot.slane %v675, 2
        %v677 = vadd.f32 %v675, %v676
        %v678 = vrot.slane %v677, 1
        %v679 = vadd.f32 %v677, %v678
        %s680 = vtos %v679
        %v681 = vstv %s680
        %v690 = vlaneseq
        %v691 = vshrl.u32 %v690, 7
        %v692 = vsub.s32 0, %v691
        %v693 = vrot.slane %v512, %v692
        %v694 = vlaneseq
        %v695 = vshrl.u32 %v694, 7
        %v696 = vsub.s32 4, %v695
        %v697 = vrot.slane %v512, %v696
        %v698 = vlaneseq
        %v699 = vshrl.u32 %v698, 7
        %v700 = vsub.s32 0, %v699
        %v701 = vrot.slane %v513, %v700
        %v702 = vlaneseq
        %v703 = vshrl.u32 %v702, 7
        %v704 = vsub.s32 4, %v703
        %v705 = vrot.slane %v513, %v704
        %v706 = vlaneseq
        %v707 = vshrl.u32 %v706, 7
        %v708 = vsub.s32 0, %v707
        %v709 = vrot.slane %v514, %v708
        %v710 = vlaneseq
        %v711 = vshrl.u32 %v710, 7
        %v712 = vsub.s32 4, %v711
        %v713 = vrot.slane %v514, %v712
        %v714 = vlaneseq
        %v715 = vshrl.u32 %v714, 7
        %v716 = vsub.s32 0, %v715
        %v717 = vrot.slane %v515, %v716
        %v718 = vlaneseq
        %v719 = vshrl.u32 %v718, 7
        %v720 = vsub.s32 4, %v719
        %v721 = vrot.slane %v515, %v720
        %v722 = vlaneseq
        %v723 = vshrl.u32 %v722, 7
        %v724 = vsub.s32 0, %v723
        %v725 = vrot.slane %v516, %v724
        %v726 = vlaneseq
        %v727 = vshrl.u32 %v726, 7
        %v728 = vsub.s32 4, %v727
        %v729 = vrot.slane %v516, %v728
        %v730 = vlaneseq
        %v731 = vshrl.u32 %v730, 7
        %v732 = vsub.s32 0, %v731
        %v733 = vrot.slane %v517, %v732
        %v734 = vlaneseq
        %v735 = vshrl.u32 %v734, 7
        %v736 = vsub.s32 4, %v735
        %v737 = vrot.slane %v517, %v736
        %v738 = vlaneseq
        %v739 = vshrl.u32 %v738, 7
        %v740 = vsub.s32 0, %v739
        %v741 = vrot.slane %v518, %v740
        %v742 = vlaneseq
        %v743 = vshrl.u32 %v742, 7
        %v744 = vsub.s32 4, %v743
        %v745 = vrot.slane %v518, %v744
        %v746 = vlaneseq
        %v747 = vshrl.u32 %v746, 7
        %v748 = vsub.s32 0, %v747
        %v749 = vrot.slane %v519, %v748
        %v750 = vlaneseq
        %v751 = vshrl.u32 %v750, 7
        %v752 = vsub.s32 4, %v751
        %v753 = vrot.slane %v519, %v752
        %v770 = vlaneseq
        %v771 = vshrl.u32 %v770, 7
        %v772 = vsub.s32 0, %v771
        %v773 = vrot.slane %v693, %v772
        %v774 = vlaneseq
        %v775 = vshrl.u32 %v774, 7
        %v776 = vsub.s32 0, %v775
        %v777 = vrot.slane %v697, %v776
        %v778 = vlaneseq
        %v779 = vshrl.u32 %v778, 7
        %v780 = vsub.s32 0, %v779
        %v781 = vrot.slane %v701, %v780
        %v782 = vlaneseq
        %v783 = vshrl.u32 %v782, 7
        %v784 = vsub.s32 0, %v783
        %v785 = vrot.slane %v705, %v784
        %v786 = vlaneseq
        %v787 = vshrl.u32 %v786, 7
        %v788 = vsub.s32 0, %v787
        %v789 = vrot.slane %v709, %v788
        %v790 = vlaneseq
        %v791 = vshrl.u32 %v790, 7
        %v792 = vsub.s32 0, %v791
        %v793 = vrot.slane %v713, %v792
        %v794 = vlaneseq
        %v795 = vshrl.u32 %v794, 7
        %v796 = vsub.s32 0, %v795
        %v797 = vrot.slane %v717, %v796
        %v798 = vlaneseq
        %v799 = vshrl.u32 %v798, 7
        %v800 = vsub.s32 0, %v799
        %v801 = vrot.slane %v721, %v800
        %v802 = vlaneseq
        %v803 = vshrl.u32 %v802, 7
        %v804 = vsub.s32 0, %v803
        %v805 = vrot.slane %v725, %v804
        %v806 = vlaneseq
        %v807 = vshrl.u32 %v806, 7
        %v808 = vsub.s32 0, %v807
        %v809 = vrot.slane %v729, %v808
        %v810 = vlaneseq
        %v811 = vshrl.u32 %v810, 7
        %v812 = vsub.s32 0, %v811
        %v813 = vrot.slane %v733, %v812
        %v814 = vlaneseq
        %v815 = vshrl.u32 %v814, 7
        %v816 = vsub.s32 0, %v815
        %v817 = vrot.slane %v737, %v816
        %v818 = vlaneseq
        %v819 = vshrl.u32 %v818, 7
        %v820 = vsub.s32 0, %v819
        %v821 = vrot.slane %v741, %v820
        %v822 = vlaneseq
        %v823 = vshrl.u32 %v822, 7
        %v824 = vsub.s32 0, %v823
        %v825 = vrot.slane %v745, %v824
        %v826 = vlaneseq
        %v827 = vshrl.u32 %v826, 7
        %v828 = vsub.s32 0, %v827
        %v829 = vrot.slane %v749, %v828
        %v830 = vlaneseq
        %v831 = vshrl.u32 %v830, 7
        %v832 = vsub.s32 0, %v831
        %v833 = vrot.slane %v753, %v832
        %v850 = vcombine.low %v773, %v777
        %v851 = vcombine.low %v781, %v785
        %v852 = vcombine.low %v789, %v793
        %v853 = vcombine.low %v797, %v801
        %v854 = vcombine.low %v805, %v809
        %v855 = vcombine.low %v813, %v817
        %v856 = vcombine.low %v821, %v825
        %v857 = vcombine.low %v829, %v833
        %v866 = vsub.f32 %v208, %v850
        %v867 = vsub.f32 %v209, %v851
        %v868 = vsub.f32 %v210, %v852
        %v869 = vsub.f32 %v211, %v853
        %v870 = vsub.f32 %v212, %v854
        %v871 = vsub.f32 %v213, %v855
        %v872 = vsub.f32 %v214, %v856
        %v873 = vsub.f32 %v215, %v857
        %v882 = vlaneseq
        %v883 = vshrl.u32 %v882, 7
        %v884 = vsub.s32 0, %v883
        %v885 = vrot.slane %v520, %v884
        %v886 = vlaneseq
        %v887 = vshrl.u32 %v886, 7
        %v888 = vsub.s32 4, %v887
        %v889 = vrot.slane %v520, %v888
        %v890 = vlaneseq
        %v891 = vshrl.u32 %v890, 7
        %v892 = vsub.s32 0, %v891
        %v893 = vrot.slane %v521, %v892
        %v894 = vlaneseq
        %v895 = vshrl.u32 %v894, 7
        %v896 = vsub.s32 4, %v895
        %v897 = vrot.slane %v521, %v896
        %v898 = vlaneseq
        %v899 = vshrl.u32 %v898, 7
        %v900 = vsub.s32 0, %v899
        %v901 = vrot.slane %v522, %v900
        %v902 = vlaneseq
        %v903 = vshrl.u32 %v902, 7
        %v904 = vsub.s32 4, %v903
        %v905 = vrot.slane %v522, %v904
        %v906 = vlaneseq
        %v907 = vshrl.u32 %v906, 7
        %v908 = vsub.s32 0, %v907
        %v909 = vrot.slane %v523, %v908
        %v910 = vlaneseq
        %v911 = vshrl.u32 %v910, 7
        %v912 = vsub.s32 4, %v911
        %v913 = vrot.slane %v523, %v912
        %v914 = vlaneseq
        %v915 = vshrl.u32 %v914, 7
        %v916 = vsub.s32 0, %v915
        %v917 = vrot.slane %v524, %v916
        %v918 = vlaneseq
        %v919 = vshrl.u32 %v918, 7
        %v920 = vsub.s32 4, %v919
        %v921 = vrot.slane %v524, %v920
        %v922 = vlaneseq
        %v923 = vshrl.u32 %v922, 7
        %v924 = vsub.s32 0, %v923
        %v925 = vrot.slane %v525, %v924
        %v926 = vlaneseq
        %v927 = vshrl.u32 %v926, 7
        %v928 = vsub.s32 4, %v927
        %v929 = vrot.slane %v525, %v928
        %v930 = vlaneseq
        %v931 = vshrl.u32 %v930, 7
        %v932 = vsub.s32 0, %v931
        %v933 = vrot.slane %v526, %v932
        %v934 = vlaneseq
        %v935 = vshrl.u32 %v934, 7
        %v936 = vsub.s32 4, %v935
        %v937 = vrot.slane %v526, %v936
        %v938 = vlaneseq
        %v939 = vshrl.u32 %v938, 7
        %v940 = vsub.s32 0, %v939
        %v941 = vrot.slane %v527, %v940
        %v942 = vlaneseq
        %v943 = vshrl.u32 %v942, 7
        %v944 = vsub.s32 4, %v943
        %v945 = vrot.slane %v527, %v944
        %v962 = vlaneseq
        %v963 = vshrl.u32 %v962, 7
        %v964 = vsub.s32 0, %v963
        %v965 = vrot.slane %v885, %v964
        %v966 = vlaneseq
        %v967 = vshrl.u32 %v966, 7
        %v968 = vsub.s32 0, %v967
        %v969 = vrot.slane %v889, %v968
        %v970 = vlaneseq
        %v971 = vshrl.u32 %v970, 7
        %v972 = vsub.s32 0, %v971
        %v973 = vrot.slane %v893, %v972
        %v974 = vlaneseq
        %v975 = vshrl.u32 %v974, 7
        %v976 = vsub.s32 0, %v975
        %v977 = vrot.slane %v897, %v976
        %v978 = vlaneseq
        %v979 = vshrl.u32 %v978, 7
        %v980 = vsub.s32 0, %v979
        %v981 = vrot.slane %v901, %v980
        %v982 = vlaneseq
        %v983 = vshrl.u32 %v982, 7
        %v984 = vsub.s32 0, %v983
        %v985 = vrot.slane %v905, %v984
        %v986 = vlaneseq
        %v987 = vshrl.u32 %v986, 7
        %v988 = vsub.s32 0, %v987
        %v989 = vrot.slane %v909, %v988
        %v990 = vlaneseq
        %v991 = vshrl.u32 %v990, 7
        %v992 = vsub.s32 0, %v991
        %v993 = vrot.slane %v913, %v992
        %v994 = vlaneseq
        %v995 = vshrl.u32 %v994, 7
        %v996 = vsub.s32 0, %v995
        %v997 = vrot.slane %v917, %v996
        %v998 = vlaneseq
        %v999 = vshrl.u32 %v998, 7
        %v1000 = vsub.s32 0, %v999
        %v1001 = vrot.slane %v921, %v1000
        %v1002 = vlaneseq
        %v1003 = vshrl.u32 %v1002, 7
        %v1004 = vsub.s32 0, %v1003
        %v1005 = vrot.slane %v925, %v1004
        %v1006 = vlaneseq
        %v1007 = vshrl.u32 %v1006, 7
        %v1008 = vsub.s32 0, %v1007
        %v1009 = vrot.slane %v929, %v1008
        %v1010 = vlaneseq
        %v1011 = vshrl.u32 %v1010, 7
        %v1012 = vsub.s32 0, %v1011
        %v1013 = vrot.slane %v933, %v1012
        %v1014 = vlaneseq
        %v1015 = vshrl.u32 %v1014, 7
        %v1016 = vsub.s32 0, %v1015
        %v1017 = vrot.slane %v937, %v1016
        %v1018 = vlaneseq
        %v1019 = vshrl.u32 %v1018, 7
        %v1020 = vsub.s32 0, %v1019
        %v1021 = vrot.slane %v941, %v1020
        %v1022 = vlaneseq
        %v1023 = vshrl.u32 %v1022, 7
        %v1024 = vsub.s32 0, %v1023
        %v1025 = vrot.slane %v945, %v1024
        %v1042 = vcombine.low %v965, %v969
        %v1043 = vcombine.low %v973, %v977
        %v1044 = vcombine.low %v981, %v985
        %v1045 = vcombine.low %v989, %v993
        %v1046 = vcombine.low %v997, %v1001
        %v1047 = vcombine.low %v1005, %v1009
        %v1048 = vcombine.low %v1013, %v1017
        %v1049 = vcombine.low %v1021, %v1025
        %v1058 = vsub.f32 %v264, %v1042
        %v1059 = vsub.f32 %v265, %v1043
        %v1060 = vsub.f32 %v266, %v1044
        %v1061 = vsub.f32 %v267, %v1045
        %v1062 = vsub.f32 %v268, %v1046
        %v1063 = vsub.f32 %v269, %v1047
        %v1064 = vsub.f32 %v270, %v1048
        %v1065 = vsub.f32 %v271, %v1049
        %v1066 = vmul.f32 %v866, 1.442695
        %v1067 = vpow.pop %v1066
        %v1068 = vmul.f32 %v867, 1.442695
        %v1069 = vpow.pop %v1068
        %v1070 = vmul.f32 %v868, 1.442695
        %v1071 = vpow.pop %v1070
        %v1072 = vmul.f32 %v869, 1.442695
        %v1073 = vpow.pop %v1072
        %v1074 = vmul.f32 %v870, 1.442695
        %v1075 = vpow.pop %v1074
        %v1076 = vmul.f32 %v871, 1.442695
        %v1077 = vpow.pop %v1076
        %v1078 = vmul.f32 %v872, 1.442695
        %v1079 = vpow.pop %v1078
        %v1080 = vmul.f32 %v873, 1.442695
        %v1081 = vpow.pop %v1080
        %v1082 = vmul.f32 %v1058, 1.442695
        %v1083 = vpow.pop %v1082
        %v1084 = vmul.f32 %v1059, 1.442695
        %v1085 = vpow.pop %v1084
        %v1086 = vmul.f32 %v1060, 1.442695
        %v1087 = vpow.pop %v1086
        %v1088 = vmul.f32 %v1061, 1.442695
        %v1089 = vpow.pop %v1088
        %v1090 = vmul.f32 %v1062, 1.442695
        %v1091 = vpow.pop %v1090
        %v1092 = vmul.f32 %v1063, 1.442695
        %v1093 = vpow.pop %v1092
        %v1094 = vmul.f32 %v1064, 1.442695
        %v1095 = vpow.pop %v1094
        %v1096 = vmul.f32 %v1065, 1.442695
        %v1097 = vpow.pop %v1096
        %v1106 = vrot.slane %v1067, 5
        %v1107 = vrot.slane %v1106, 4
        %v1108 = vrot.slane %v1069, 5
        %v1109 = vrot.slane %v1108, 4
        %v1110 = vrot.slane %v1071, 5
        %v1111 = vrot.slane %v1110, 4
        %v1112 = vrot.slane %v1073, 5
        %v1113 = vrot.slane %v1112, 4
        %v1114 = vrot.slane %v1075, 5
        %v1115 = vrot.slane %v1114, 4
        %v1116 = vrot.slane %v1077, 5
        %v1117 = vrot.slane %v1116, 4
        %v1118 = vrot.slane %v1079, 5
        %v1119 = vrot.slane %v1118, 4
        %v1120 = vrot.slane %v1081, 5
        %v1121 = vrot.slane %v1120, 4
        %v1130 = vadd.f32 %v1067, %v1107
        %v1131 = vadd.f32 %v1069, %v1109
        %v1132 = vadd.f32 %v1071, %v1111
        %v1133 = vadd.f32 %v1073, %v1113
        %v1134 = vadd.f32 %v1075, %v1115
        %v1135 = vadd.f32 %v1077, %v1117
        %v1136 = vadd.f32 %v1079, %v1119
        %v1137 = vadd.f32 %v1081, %v1121
        %v1146 = vrot.slane %v1083, 5
        %v1147 = vrot.slane %v1146, 4
        %v1148 = vrot.slane %v1085, 5
        %v1149 = vrot.slane %v1148, 4
        %v1150 = vrot.slane %v1087, 5
        %v1151 = vrot.slane %v1150, 4
        %v1152 = vrot.slane %v1089, 5
        %v1153 = vrot.slane %v1152, 4
        %v1154 = vrot.slane %v1091, 5
        %v1155 = vrot.slane %v1154, 4
        %v1156 = vrot.slane %v1093, 5
        %v1157 = vrot.slane %v1156, 4
        %v1158 = vrot.slane %v1095, 5
        %v1159 = vrot.slane %v1158, 4
        %v1160 = vrot.slane %v1097, 5
        %v1161 = vrot.slane %v1160, 4
        %v1170 = vadd.f32 %v1083, %v1147
        %v1171 = vadd.f32 %v1085, %v1149
        %v1172 = vadd.f32 %v1087, %v1151
        %v1173 = vadd.f32 %v1089, %v1153
        %v1174 = vadd.f32 %v1091, %v1155
        %v1175 = vadd.f32 %v1093, %v1157
        %v1176 = vadd.f32 %v1095, %v1159
        %v1177 = vadd.f32 %v1097, %v1161
        %v1178 = vrot.slane %v1067, 6
        %v1179 = vrot.slane %v1178, 4
        %v1180 = vrot.slane %v1069, 6
        %v1181 = vrot.slane %v1180, 4
        %v1182 = vrot.slane %v1071, 6
        %v1183 = vrot.slane %v1182, 4
        %v1184 = vrot.slane %v1073, 6
        %v1185 = vrot.slane %v1184, 4
        %v1186 = vrot.slane %v1075, 6
        %v1187 = vrot.slane %v1186, 4
        %v1188 = vrot.slane %v1077, 6
        %v1189 = vrot.slane %v1188, 4
        %v1190 = vrot.slane %v1079, 6
        %v1191 = vrot.slane %v1190, 4
        %v1192 = vrot.slane %v1081, 6
        %v1193 = vrot.slane %v1192, 4
        %v1202 = vadd.f32 %v1130, %v1179
        %v1203 = vadd.f32 %v1131, %v1181
        %v1204 = vadd.f32 %v1132, %v1183
        %v1205 = vadd.f32 %v1133, %v1185
        %v1206 = vadd.f32 %v1134, %v1187
        %v1207 = vadd.f32 %v1135, %v1189
        %v1208 = vadd.f32 %v1136, %v1191
        %v1209 = vadd.f32 %v1137, %v1193
        %v1210 = vrot.slane %v1083, 6
        %v1211 = vrot.slane %v1210, 4
        %v1212 = vrot.slane %v1085, 6
        %v1213 = vrot.slane %v1212, 4
        %v1214 = vrot.slane %v1087, 6
        %v1215 = vrot.slane %v1214, 4
        %v1216 = vrot.slane %v1089, 6
        %v1217 = vrot.slane %v1216, 4
        %v1218 = vrot.slane %v1091, 6
        %v1219 = vrot.slane %v1218, 4
        %v1220 = vrot.slane %v1093, 6
        %v1221 = vrot.slane %v1220, 4
        %v1222 = vrot.slane %v1095, 6
        %v1223 = vrot.slane %v1222, 4
        %v1224 = vrot.slane %v1097, 6
        %v1225 = vrot.slane %v1224, 4
        %v1234 = vadd.f32 %v1170, %v1211
        %v1235 = vadd.f32 %v1171, %v1213
        %v1236 = vadd.f32 %v1172, %v1215
        %v1237 = vadd.f32 %v1173, %v1217
        %v1238 = vadd.f32 %v1174, %v1219
        %v1239 = vadd.f32 %v1175, %v1221
        %v1240 = vadd.f32 %v1176, %v1223
        %v1241 = vadd.f32 %v1177, %v1225
        %v1242 = vrot.slane %v1067, 7
        %v1243 = vrot.slane %v1242, 4
        %v1244 = vrot.slane %v1069, 7
        %v1245 = vrot.slane %v1244, 4
        %v1246 = vrot.slane %v1071, 7
        %v1247 = vrot.slane %v1246, 4
        %v1248 = vrot.slane %v1073, 7
        %v1249 = vrot.slane %v1248, 4
        %v1250 = vrot.slane %v1075, 7
        %v1251 = vrot.slane %v1250, 4
        %v1252 = vrot.slane %v1077, 7
        %v1253 = vrot.slane %v1252, 4
        %v1254 = vrot.slane %v1079, 7
        %v1255 = vrot.slane %v1254, 4
        %v1256 = vrot.slane %v1081, 7
        %v1257 = vrot.slane %v1256, 4
        %v1266 = vadd.f32 %v1202, %v1243
        %v1267 = vadd.f32 %v1203, %v1245
        %v1268 = vadd.f32 %v1204, %v1247
        %v1269 = vadd.f32 %v1205, %v1249
        %v1270 = vadd.f32 %v1206, %v1251
        %v1271 = vadd.f32 %v1207, %v1253
        %v1272 = vadd.f32 %v1208, %v1255
        %v1273 = vadd.f32 %v1209, %v1257
        %v1274 = vrot.slane %v1083, 7
        %v1275 = vrot.slane %v1274, 4
        %v1276 = vrot.slane %v1085, 7
        %v1277 = vrot.slane %v1276, 4
        %v1278 = vrot.slane %v1087, 7
        %v1279 = vrot.slane %v1278, 4
        %v1280 = vrot.slane %v1089, 7
        %v1281 = vrot.slane %v1280, 4
        %v1282 = vrot.slane %v1091, 7
        %v1283 = vrot.slane %v1282, 4
        %v1284 = vrot.slane %v1093, 7
        %v1285 = vrot.slane %v1284, 4
        %v1286 = vrot.slane %v1095, 7
        %v1287 = vrot.slane %v1286, 4
        %v1288 = vrot.slane %v1097, 7
        %v1289 = vrot.slane %v1288, 4
        %v1298 = vadd.f32 %v1234, %v1275
        %v1299 = vadd.f32 %v1235, %v1277
        %v1300 = vadd.f32 %v1236, %v1279
        %v1301 = vadd.f32 %v1237, %v1281
        %v1302 = vadd.f32 %v1238, %v1283
        %v1303 = vadd.f32 %v1239, %v1285
        %v1304 = vadd.f32 %v1240, %v1287
        %v1305 = vadd.f32 %v1241, %v1289
        %v1306 = vlog2.pop %v1266
        %v1307 = vmul.f32 %v1306, 0.6931472
        %v1308 = vlog2.pop %v1267
        %v1309 = vmul.f32 %v1308, 0.6931472
        %v1310 = vlog2.pop %v1268
        %v1311 = vmul.f32 %v1310, 0.6931472
        %v1312 = vlog2.pop %v1269
        %v1313 = vmul.f32 %v1312, 0.6931472
        %v1314 = vlog2.pop %v1270
        %v1315 = vmul.f32 %v1314, 0.6931472
        %v1316 = vlog2.pop %v1271
        %v1317 = vmul.f32 %v1316, 0.6931472
        %v1318 = vlog2.pop %v1272
        %v1319 = vmul.f32 %v1318, 0.6931472
        %v1320 = vlog2.pop %v1273
        %v1321 = vmul.f32 %v1320, 0.6931472
        %v1330 = vlaneseq
        %v1331 = vshrl.u32 %v1330, 7
        %v1332 = vsub.s32 0, %v1331
        %v1333 = vrot.slane %v1307, %v1332
        %v1334 = vlaneseq
        %v1335 = vshrl.u32 %v1334, 7
        %v1336 = vsub.s32 4, %v1335
        %v1337 = vrot.slane %v1307, %v1336
        %v1338 = vlaneseq
        %v1339 = vshrl.u32 %v1338, 7
        %v1340 = vsub.s32 0, %v1339
        %v1341 = vrot.slane %v1309, %v1340
        %v1342 = vlaneseq
        %v1343 = vshrl.u32 %v1342, 7
        %v1344 = vsub.s32 4, %v1343
        %v1345 = vrot.slane %v1309, %v1344
        %v1346 = vlaneseq
        %v1347 = vshrl.u32 %v1346, 7
        %v1348 = vsub.s32 0, %v1347
        %v1349 = vrot.slane %v1311, %v1348
        %v1350 = vlaneseq
        %v1351 = vshrl.u32 %v1350, 7
        %v1352 = vsub.s32 4, %v1351
        %v1353 = vrot.slane %v1311, %v1352
        %v1354 = vlaneseq
        %v1355 = vshrl.u32 %v1354, 7
        %v1356 = vsub.s32 0, %v1355
        %v1357 = vrot.slane %v1313, %v1356
        %v1358 = vlaneseq
        %v1359 = vshrl.u32 %v1358, 7
        %v1360 = vsub.s32 4, %v1359
        %v1361 = vrot.slane %v1313, %v1360
        %v1362 = vlaneseq
        %v1363 = vshrl.u32 %v1362, 7
        %v1364 = vsub.s32 0, %v1363
        %v1365 = vrot.slane %v1315, %v1364
        %v1366 = vlaneseq
        %v1367 = vshrl.u32 %v1366, 7
        %v1368 = vsub.s32 4, %v1367
        %v1369 = vrot.slane %v1315, %v1368
        %v1370 = vlaneseq
        %v1371 = vshrl.u32 %v1370, 7
        %v1372 = vsub.s32 0, %v1371
        %v1373 = vrot.slane %v1317, %v1372
        %v1374 = vlaneseq
        %v1375 = vshrl.u32 %v1374, 7
        %v1376 = vsub.s32 4, %v1375
        %v1377 = vrot.slane %v1317, %v1376
        %v1378 = vlaneseq
        %v1379 = vshrl.u32 %v1378, 7
        %v1380 = vsub.s32 0, %v1379
        %v1381 = vrot.slane %v1319, %v1380
        %v1382 = vlaneseq
        %v1383 = vshrl.u32 %v1382, 7
        %v1384 = vsub.s32 4, %v1383
        %v1385 = vrot.slane %v1319, %v1384
        %v1386 = vlaneseq
        %v1387 = vshrl.u32 %v1386, 7
        %v1388 = vsub.s32 0, %v1387
        %v1389 = vrot.slane %v1321, %v1388
        %v1390 = vlaneseq
        %v1391 = vshrl.u32 %v1390, 7
        %v1392 = vsub.s32 4, %v1391
        %v1393 = vrot.slane %v1321, %v1392
        %v1410 = vlaneseq
        %v1411 = vshrl.u32 %v1410, 7
        %v1412 = vsub.s32 0, %v1411
        %v1413 = vrot.slane %v1333, %v1412
        %v1414 = vlaneseq
        %v1415 = vshrl.u32 %v1414, 7
        %v1416 = vsub.s32 0, %v1415
        %v1417 = vrot.slane %v1337, %v1416
        %v1418 = vlaneseq
        %v1419 = vshrl.u32 %v1418, 7
        %v1420 = vsub.s32 0, %v1419
        %v1421 = vrot.slane %v1341, %v1420
        %v1422 = vlaneseq
        %v1423 = vshrl.u32 %v1422, 7
        %v1424 = vsub.s32 0, %v1423
        %v1425 = vrot.slane %v1345, %v1424
        %v1426 = vlaneseq
        %v1427 = vshrl.u32 %v1426, 7
        %v1428 = vsub.s32 0, %v1427
        %v1429 = vrot.slane %v1349, %v1428
        %v1430 = vlaneseq
        %v1431 = vshrl.u32 %v1430, 7
        %v1432 = vsub.s32 0, %v1431
        %v1433 = vrot.slane %v1353, %v1432
        %v1434 = vlaneseq
        %v1435 = vshrl.u32 %v1434, 7
        %v1436 = vsub.s32 0, %v1435
        %v1437 = vrot.slane %v1357, %v1436
        %v1438 = vlaneseq
        %v1439 = vshrl.u32 %v1438, 7
        %v1440 = vsub.s32 0, %v1439
        %v1441 = vrot.slane %v1361, %v1440
        %v1442 = vlaneseq
        %v1443 = vshrl.u32 %v1442, 7
        %v1444 = vsub.s32 0, %v1443
        %v1445 = vrot.slane %v1365, %v1444
        %v1446 = vlaneseq
        %v1447 = vshrl.u32 %v1446, 7
        %v1448 = vsub.s32 0, %v1447
        %v1449 = vrot.slane %v1369, %v1448
        %v1450 = vlaneseq
        %v1451 = vshrl.u32 %v1450, 7
        %v1452 = vsub.s32 0, %v1451
        %v1453 = vrot.slane %v1373, %v1452
        %v1454 = vlaneseq
        %v1455 = vshrl.u32 %v1454, 7
        %v1456 = vsub.s32 0, %v1455
        %v1457 = vrot.slane %v1377, %v1456
        %v1458 = vlaneseq
        %v1459 = vshrl.u32 %v1458, 7
        %v1460 = vsub.s32 0, %v1459
        %v1461 = vrot.slane %v1381, %v1460
        %v1462 = vlaneseq
        %v1463 = vshrl.u32 %v1462, 7
        %v1464 = vsub.s32 0, %v1463
        %v1465 = vrot.slane %v1385, %v1464
        %v1466 = vlaneseq
        %v1467 = vshrl.u32 %v1466, 7
        %v1468 = vsub.s32 0, %v1467
        %v1469 = vrot.slane %v1389, %v1468
        %v1470 = vlaneseq
        %v1471 = vshrl.u32 %v1470, 7
        %v1472 = vsub.s32 0, %v1471
        %v1473 = vrot.slane %v1393, %v1472
        %v1490 = vcombine.low %v1413, %v1417
        %v1491 = vcombine.low %v1421, %v1425
        %v1492 = vcombine.low %v1429, %v1433
        %v1493 = vcombine.low %v1437, %v1441
        %v1494 = vcombine.low %v1445, %v1449
        %v1495 = vcombine.low %v1453, %v1457
        %v1496 = vcombine.low %v1461, %v1465
        %v1497 = vcombine.low %v1469, %v1473
        %v1506 = vsub.f32 %v866, %v1490
        %v1507 = vsub.f32 %v867, %v1491
        %v1508 = vsub.f32 %v868, %v1492
        %v1509 = vsub.f32 %v869, %v1493
        %v1510 = vsub.f32 %v870, %v1494
        %v1511 = vsub.f32 %v871, %v1495
        %v1512 = vsub.f32 %v872, %v1496
        %v1513 = vsub.f32 %v873, %v1497
        %v1514 = vlog2.pop %v1298
        %v1515 = vmul.f32 %v1514, 0.6931472
        %v1516 = vlog2.pop %v1299
        %v1517 = vmul.f32 %v1516, 0.6931472
        %v1518 = vlog2.pop %v1300
        %v1519 = vmul.f32 %v1518, 0.6931472
        %v1520 = vlog2.pop %v1301
        %v1521 = vmul.f32 %v1520, 0.6931472
        %v1522 = vlog2.pop %v1302
        %v1523 = vmul.f32 %v1522, 0.6931472
        %v1524 = vlog2.pop %v1303
        %v1525 = vmul.f32 %v1524, 0.6931472
        %v1526 = vlog2.pop %v1304
        %v1527 = vmul.f32 %v1526, 0.6931472
        %v1528 = vlog2.pop %v1305
        %v1529 = vmul.f32 %v1528, 0.6931472
        %v1538 = vlaneseq
        %v1539 = vshrl.u32 %v1538, 7
        %v1540 = vsub.s32 0, %v1539
        %v1541 = vrot.slane %v1515, %v1540
        %v1542 = vlaneseq
        %v1543 = vshrl.u32 %v1542, 7
        %v1544 = vsub.s32 4, %v1543
        %v1545 = vrot.slane %v1515, %v1544
        %v1546 = vlaneseq
        %v1547 = vshrl.u32 %v1546, 7
        %v1548 = vsub.s32 0, %v1547
        %v1549 = vrot.slane %v1517, %v1548
        %v1550 = vlaneseq
        %v1551 = vshrl.u32 %v1550, 7
        %v1552 = vsub.s32 4, %v1551
        %v1553 = vrot.slane %v1517, %v1552
        %v1554 = vlaneseq
        %v1555 = vshrl.u32 %v1554, 7
        %v1556 = vsub.s32 0, %v1555
        %v1557 = vrot.slane %v1519, %v1556
        %v1558 = vlaneseq
        %v1559 = vshrl.u32 %v1558, 7
        %v1560 = vsub.s32 4, %v1559
        %v1561 = vrot.slane %v1519, %v1560
        %v1562 = vlaneseq
        %v1563 = vshrl.u32 %v1562, 7
        %v1564 = vsub.s32 0, %v1563
        %v1565 = vrot.slane %v1521, %v1564
        %v1566 = vlaneseq
        %v1567 = vshrl.u32 %v1566, 7
        %v1568 = vsub.s32 4, %v1567
        %v1569 = vrot.slane %v1521, %v1568
        %v1570 = vlaneseq
        %v1571 = vshrl.u32 %v1570, 7
        %v1572 = vsub.s32 0, %v1571
        %v1573 = vrot.slane %v1523, %v1572
        %v1574 = vlaneseq
        %v1575 = vshrl.u32 %v1574, 7
        %v1576 = vsub.s32 4, %v1575
        %v1577 = vrot.slane %v1523, %v1576
        %v1578 = vlaneseq
        %v1579 = vshrl.u32 %v1578, 7
        %v1580 = vsub.s32 0, %v1579
        %v1581 = vrot.slane %v1525, %v1580
        %v1582 = vlaneseq
        %v1583 = vshrl.u32 %v1582, 7
        %v1584 = vsub.s32 4, %v1583
        %v1585 = vrot.slane %v1525, %v1584
        %v1586 = vlaneseq
        %v1587 = vshrl.u32 %v1586, 7
        %v1588 = vsub.s32 0, %v1587
        %v1589 = vrot.slane %v1527, %v1588
        %v1590 = vlaneseq
        %v1591 = vshrl.u32 %v1590, 7
        %v1592 = vsub.s32 4, %v1591
        %v1593 = vrot.slane %v1527, %v1592
        %v1594 = vlaneseq
        %v1595 = vshrl.u32 %v1594, 7
        %v1596 = vsub.s32 0, %v1595
        %v1597 = vrot.slane %v1529, %v1596
        %v1598 = vlaneseq
        %v1599 = vshrl.u32 %v1598, 7
        %v1600 = vsub.s32 4, %v1599
        %v1601 = vrot.slane %v1529, %v1600
        %v1618 = vlaneseq
        %v1619 = vshrl.u32 %v1618, 7
        %v1620 = vsub.s32 0, %v1619
        %v1621 = vrot.slane %v1541, %v1620
        %v1622 = vlaneseq
        %v1623 = vshrl.u32 %v1622, 7
        %v1624 = vsub.s32 0, %v1623
        %v1625 = vrot.slane %v1545, %v1624
        %v1626 = vlaneseq
        %v1627 = vshrl.u32 %v1626, 7
        %v1628 = vsub.s32 0, %v1627
        %v1629 = vrot.slane %v1549, %v1628
        %v1630 = vlaneseq
        %v1631 = vshrl.u32 %v1630, 7
        %v1632 = vsub.s32 0, %v1631
        %v1633 = vrot.slane %v1553, %v1632
        %v1634 = vlaneseq
        %v1635 = vshrl.u32 %v1634, 7
        %v1636 = vsub.s32 0, %v1635
        %v1637 = vrot.slane %v1557, %v1636
        %v1638 = vlaneseq
        %v1639 = vshrl.u32 %v1638, 7
        %v1640 = vsub.s32 0, %v1639
        %v1641 = vrot.slane %v1561, %v1640
        %v1642 = vlaneseq
        %v1643 = vshrl.u32 %v1642, 7
        %v1644 = vsub.s32 0, %v1643
        %v1645 = vrot.slane %v1565, %v1644
        %v1646 = vlaneseq
        %v1647 = vshrl.u32 %v1646, 7
        %v1648 = vsub.s32 0, %v1647
        %v1649 = vrot.slane %v1569, %v1648
        %v1650 = vlaneseq
        %v1651 = vshrl.u32 %v1650, 7
        %v1652 = vsub.s32 0, %v1651
        %v1653 = vrot.slane %v1573, %v1652
        %v1654 = vlaneseq
        %v1655 = vshrl.u32 %v1654, 7
        %v1656 = vsub.s32 0, %v1655
        %v1657 = vrot.slane %v1577, %v1656
        %v1658 = vlaneseq
        %v1659 = vshrl.u32 %v1658, 7
        %v1660 = vsub.s32 0, %v1659
        %v1661 = vrot.slane %v1581, %v1660
        %v1662 = vlaneseq
        %v1663 = vshrl.u32 %v1662, 7
        %v1664 = vsub.s32 0, %v1663
        %v1665 = vrot.slane %v1585, %v1664
        %v1666 = vlaneseq
        %v1667 = vshrl.u32 %v1666, 7
        %v1668 = vsub.s32 0, %v1667
        %v1669 = vrot.slane %v1589, %v1668
        %v1670 = vlaneseq
        %v1671 = vshrl.u32 %v1670, 7
        %v1672 = vsub.s32 0, %v1671
        %v1673 = vrot.slane %v1593, %v1672
        %v1674 = vlaneseq
        %v1675 = vshrl.u32 %v1674, 7
        %v1676 = vsub.s32 0, %v1675
        %v1677 = vrot.slane %v1597, %v1676
        %v1678 = vlaneseq
        %v1679 = vshrl.u32 %v1678, 7
        %v1680 = vsub.s32 0, %v1679
        %v1681 = vrot.slane %v1601, %v1680
        %v1698 = vcombine.low %v1621, %v1625
        %v1699 = vcombine.low %v1629, %v1633
        %v1700 = vcombine.low %v1637, %v1641
        %v1701 = vcombine.low %v1645, %v1649
        %v1702 = vcombine.low %v1653, %v1657
        %v1703 = vcombine.low %v1661, %v1665
        %v1704 = vcombine.low %v1669, %v1673
        %v1705 = vcombine.low %v1677, %v1681
        %v1714 = vsub.f32 %v1058, %v1698
        %v1715 = vsub.f32 %v1059, %v1699
        %v1716 = vsub.f32 %v1060, %v1700
        %v1717 = vsub.f32 %v1061, %v1701
        %v1718 = vsub.f32 %v1062, %v1702
        %v1719 = vsub.f32 %v1063, %v1703
        %v1720 = vsub.f32 %v1064, %v1704
        %v1721 = vsub.f32 %v1065, %v1705
        %v1722 = vsub.f32 %v1714, %v1506
        %v1723 = vsub.f32 %v1715, %v1507
        %v1724 = vsub.f32 %v1716, %v1508
        %v1725 = vsub.f32 %v1717, %v1509
        %v1726 = vsub.f32 %v1718, %v1510
        %v1727 = vsub.f32 %v1719, %v1511
        %v1728 = vsub.f32 %v1720, %v1512
        %v1729 = vsub.f32 %v1721, %v1513
        %v1730 = vmul.f32 %v1083, %v1722
        %v1731 = vmul.f32 %v1085, %v1723
        %v1732 = vmul.f32 %v1087, %v1724
        %v1733 = vmul.f32 %v1089, %v1725
        %v1734 = vmul.f32 %v1091, %v1726
        %v1735 = vmul.f32 %v1093, %v1727
        %v1736 = vmul.f32 %v1095, %v1728
        %v1737 = vmul.f32 %v1097, %v1729
        %v1746 = vrot.slane %v1730, 5
        %v1747 = vrot.slane %v1746, 4
        %v1748 = vrot.slane %v1731, 5
        %v1749 = vrot.slane %v1748, 4
        %v1750 = vrot.slane %v1732, 5
        %v1751 = vrot.slane %v1750, 4
        %v1752 = vrot.slane %v1733, 5
        %v1753 = vrot.slane %v1752, 4
        %v1754 = vrot.slane %v1734, 5
        %v1755 = vrot.slane %v1754, 4
        %v1756 = vrot.slane %v1735, 5
        %v1757 = vrot.slane %v1756, 4
        %v1758 = vrot.slane %v1736, 5
        %v1759 = vrot.slane %v1758, 4
        %v1760 = vrot.slane %v1737, 5
        %v1761 = vrot.slane %v1760, 4
        %v1770 = vadd.f32 %v1730, %v1747
        %v1771 = vadd.f32 %v1731, %v1749
        %v1772 = vadd.f32 %v1732, %v1751
        %v1773 = vadd.f32 %v1733, %v1753
        %v1774 = vadd.f32 %v1734, %v1755
        %v1775 = vadd.f32 %v1735, %v1757
        %v1776 = vadd.f32 %v1736, %v1759
        %v1777 = vadd.f32 %v1737, %v1761
        %v1778 = vrot.slane %v1730, 6
        %v1779 = vrot.slane %v1778, 4
        %v1780 = vrot.slane %v1731, 6
        %v1781 = vrot.slane %v1780, 4
        %v1782 = vrot.slane %v1732, 6
        %v1783 = vrot.slane %v1782, 4
        %v1784 = vrot.slane %v1733, 6
        %v1785 = vrot.slane %v1784, 4
        %v1786 = vrot.slane %v1734, 6
        %v1787 = vrot.slane %v1786, 4
        %v1788 = vrot.slane %v1735, 6
        %v1789 = vrot.slane %v1788, 4
        %v1790 = vrot.slane %v1736, 6
        %v1791 = vrot.slane %v1790, 4
        %v1792 = vrot.slane %v1737, 6
        %v1793 = vrot.slane %v1792, 4
        %v1802 = vadd.f32 %v1770, %v1779
        %v1803 = vadd.f32 %v1771, %v1781
        %v1804 = vadd.f32 %v1772, %v1783
        %v1805 = vadd.f32 %v1773, %v1785
        %v1806 = vadd.f32 %v1774, %v1787
        %v1807 = vadd.f32 %v1775, %v1789
        %v1808 = vadd.f32 %v1776, %v1791
        %v1809 = vadd.f32 %v1777, %v1793
        %v1810 = vrot.slane %v1730, 7
        %v1811 = vrot.slane %v1810, 4
        %v1812 = vrot.slane %v1731, 7
        %v1813 = vrot.slane %v1812, 4
        %v1814 = vrot.slane %v1732, 7
        %v1815 = vrot.slane %v1814, 4
        %v1816 = vrot.slane %v1733, 7
        %v1817 = vrot.slane %v1816, 4
        %v1818 = vrot.slane %v1734, 7
        %v1819 = vrot.slane %v1818, 4
        %v1820 = vrot.slane %v1735, 7
        %v1821 = vrot.slane %v1820, 4
        %v1822 = vrot.slane %v1736, 7
        %v1823 = vrot.slane %v1822, 4
        %v1824 = vrot.slane %v1737, 7
        %v1825 = vrot.slane %v1824, 4
        %v1834 = vadd.f32 %v1802, %v1811
        %v1835 = vadd.f32 %v1803, %v1813
        %v1836 = vadd.f32 %v1804, %v1815
        %v1837 = vadd.f32 %v1805, %v1817
        %v1838 = vadd.f32 %v1806, %v1819
        %v1839 = vadd.f32 %v1807, %v1821
        %v1840 = vadd.f32 %v1808, %v1823
        %v1841 = vadd.f32 %v1809, %v1825
        %v1842 = vrcp.pop %v1298
        %v1843 = vrcp.pop %v1299
        %v1844 = vrcp.pop %v1300
        %v1845 = vrcp.pop %v1301
        %v1846 = vrcp.pop %v1302
        %v1847 = vrcp.pop %v1303
        %v1848 = vrcp.pop %v1304
        %v1849 = vrcp.pop %v1305
        %v1850 = vmul.f32 %v1834, %v1842
        %v1851 = vmul.f32 %v1835, %v1843
        %v1852 = vmul.f32 %v1836, %v1844
        %v1853 = vmul.f32 %v1837, %v1845
        %v1854 = vmul.f32 %v1838, %v1846
        %v1855 = vmul.f32 %v1839, %v1847
        %v1856 = vmul.f32 %v1840, %v1848
        %v1857 = vmul.f32 %v1841, %v1849
        %v1866 = vlaneseq
        %v1867 = vshrl.u32 %v1866, 7
        %v1868 = vsub.s32 0, %v1867
        %v1869 = vrot.slane %v1850, %v1868
        %v1870 = vlaneseq
        %v1871 = vshrl.u32 %v1870, 7
        %v1872 = vsub.s32 4, %v1871
        %v1873 = vrot.slane %v1850, %v1872
        %v1874 = vlaneseq
        %v1875 = vshrl.u32 %v1874, 7
        %v1876 = vsub.s32 0, %v1875
        %v1877 = vrot.slane %v1851, %v1876
        %v1878 = vlaneseq
        %v1879 = vshrl.u32 %v1878, 7
        %v1880 = vsub.s32 4, %v1879
        %v1881 = vrot.slane %v1851, %v1880
        %v1882 = vlaneseq
        %v1883 = vshrl.u32 %v1882, 7
        %v1884 = vsub.s32 0, %v1883
        %v1885 = vrot.slane %v1852, %v1884
        %v1886 = vlaneseq
        %v1887 = vshrl.u32 %v1886, 7
        %v1888 = vsub.s32 4, %v1887
        %v1889 = vrot.slane %v1852, %v1888
        %v1890 = vlaneseq
        %v1891 = vshrl.u32 %v1890, 7
        %v1892 = vsub.s32 0, %v1891
        %v1893 = vrot.slane %v1853, %v1892
        %v1894 = vlaneseq
        %v1895 = vshrl.u32 %v1894, 7
        %v1896 = vsub.s32 4, %v1895
        %v1897 = vrot.slane %v1853, %v1896
        %v1898 = vlaneseq
        %v1899 = vshrl.u32 %v1898, 7
        %v1900 = vsub.s32 0, %v1899
        %v1901 = vrot.slane %v1854, %v1900
        %v1902 = vlaneseq
        %v1903 = vshrl.u32 %v1902, 7
        %v1904 = vsub.s32 4, %v1903
        %v1905 = vrot.slane %v1854, %v1904
        %v1906 = vlaneseq
        %v1907 = vshrl.u32 %v1906, 7
        %v1908 = vsub.s32 0, %v1907
        %v1909 = vrot.slane %v1855, %v1908
        %v1910 = vlaneseq
        %v1911 = vshrl.u32 %v1910, 7
        %v1912 = vsub.s32 4, %v1911
        %v1913 = vrot.slane %v1855, %v1912
        %v1914 = vlaneseq
        %v1915 = vshrl.u32 %v1914, 7
        %v1916 = vsub.s32 0, %v1915
        %v1917 = vrot.slane %v1856, %v1916
        %v1918 = vlaneseq
        %v1919 = vshrl.u32 %v1918, 7
        %v1920 = vsub.s32 4, %v1919
        %v1921 = vrot.slane %v1856, %v1920
        %v1922 = vlaneseq
        %v1923 = vshrl.u32 %v1922, 7
        %v1924 = vsub.s32 0, %v1923
        %v1925 = vrot.slane %v1857, %v1924
        %v1926 = vlaneseq
        %v1927 = vshrl.u32 %v1926, 7
        %v1928 = vsub.s32 4, %v1927
        %v1929 = vrot.slane %v1857, %v1928
        %v1946 = vsel %vm640, %v1869, 0.0
        %v1947 = vsel %vm640, %v1873, 0.0
        %v1948 = vadd.f32 %v1946, %v1947
        %v1949 = vsel %vm640, %v1877, 0.0
        %v1950 = vadd.f32 %v1948, %v1949
        %v1951 = vsel %vm640, %v1881, 0.0
        %v1952 = vadd.f32 %v1950, %v1951
        %v1953 = vsel %vm640, %v1885, 0.0
        %v1954 = vadd.f32 %v1952, %v1953
        %v1955 = vsel %vm640, %v1889, 0.0
        %v1956 = vadd.f32 %v1954, %v1955
        %v1957 = vsel %vm640, %v1893, 0.0
        %v1958 = vadd.f32 %v1956, %v1957
        %v1959 = vsel %vm640, %v1897, 0.0
        %v1960 = vadd.f32 %v1958, %v1959
        %v1961 = vsel %vm640, %v1901, 0.0
        %v1962 = vadd.f32 %v1960, %v1961
        %v1963 = vsel %vm640, %v1905, 0.0
        %v1964 = vadd.f32 %v1962, %v1963
        %v1965 = vsel %vm640, %v1909, 0.0
        %v1966 = vadd.f32 %v1964, %v1965
        %v1967 = vsel %vm640, %v1913, 0.0
        %v1968 = vadd.f32 %v1966, %v1967
        %v1969 = vsel %vm640, %v1917, 0.0
        %v1970 = vadd.f32 %v1968, %v1969
        %v1971 = vsel %vm640, %v1921, 0.0
        %v1972 = vadd.f32 %v1970, %v1971
        %v1973 = vsel %vm640, %v1925, 0.0
        %v1974 = vadd.f32 %v1972, %v1973
        %v1975 = vsel %vm640, %v1929, 0.0
        %v1976 = vadd.f32 %v1974, %v1975
        %1977 = vadd.xlane.f32.xlu0 %v1976
        %v1978 = vpop.xlane.xlu0 %1977
        %v1979 = vrot.slane %v1978, 4
        %v1980 = vadd.f32 %v1978, %v1979
        %v1981 = vrot.slane %v1980, 2
        %v1982 = vadd.f32 %v1980, %v1981
        %v1983 = vrot.slane %v1982, 1
        %v1984 = vadd.f32 %v1982, %v1983
        %s1985 = vtos %v1984
        %v1986 = vstv %s1985
        %v1987 = vld [vmem:[#allocation2] sm:$0x1]
        %v1988 = vadd.f32 %v681, %v1986
        %v1989 = vadd.f32 %v1987, %v1988
        %vm1990 = vcmask 0
        %1991 = vst.msk [vmem:[#allocation2] sm:$0x1] %vm1990, %v1989
        %p1992 = scmp.eq.s32.totalorder %s14, 3
        // Predicated region
        $region33: #{distill_klml3_forward.9} parent=27 // pred_check
          %p1993 = pneg %p1992
        $region34: #{distill_klml3_forward.9} parent=27 // pred_check_branch
          %1995 = sbr.rel (%p1993) target = $region36
        $region35: #{distill_klml3_forward.9} parent=27 // pred_region
          %v1996 = vld [vmem:[#allocation2] sm:$0x1]
          %v1997 = vmul.f32 %v1996, 0.00012207031
          %1998 = vst.msk [vmem:[#allocation2] sm:$0x1] %vm1990, %v1997
        $region36: #{distill_klml3_forward.9} parent=27 // pred_fallthru
          _
        // Predicated region
        $region37: #{distill_klml3_forward.9} parent=27 // pred_check
          %p1999 = pneg %p79
        $region38: #{distill_klml3_forward.9} parent=27 // pred_check_branch
          %2001 = sbr.rel (%p1999) target = $region40
        $region39: #{distill_klml3_forward.9} parent=27 // pred_region
          %s2003 = ssub.s32 16, 16
          %2004 = vsyncadd [#allocation3], %s2003
          %s2006 = sshll.u32 [#allocation2], 4
          %s2007 = int_to_ptr.vmem [resolvable:$true] %s2006
          %2009 = dma.vmem_to_hbm [thread:$0]  %s2007, 16, %s2, [#allocation3]
        $region40: #{distill_klml3_forward.9} parent=27 // pred_fallthru
          _
        // Predicated region
        $region41: #{distill_klml3_forward.9} parent=27 // pred_check
          %p2010 = pneg %p79
        $region42: #{distill_klml3_forward.9} parent=27 // pred_check_branch
          %2012 = sbr.rel (%p2010) target = $region44
        $region43: #{distill_klml3_forward.9} parent=27 // pred_region
          %2013 = dma.done [#allocation3], 16
        $region44: #{distill_klml3_forward.9} parent=27 // pred_fallthru
          _
      $region28: #{distill_klml3_forward.9} parent=5 // pred_fallthru
        _
      %p2014 = scmp.le.s32.totalorder 2, %s9
      // Predicated region
      $region45: #{distill_klml3_forward.9} parent=5 // pred_check
        %p2015 = pneg %p2014
      $region46: #{distill_klml3_forward.9} parent=5 // pred_check_branch
        %2017 = sbr.rel (%p2015) target = $region48
      $region47: #{distill_klml3_forward.9} parent=5 // pred_region
        %s2018 = ssub.s32 %s9, 2
      $region48: #{distill_klml3_forward.9} parent=5 // pred_fallthru
        _
    $region6: #{distill_klml3_forward.9} parent=1 // loop_footer
      %s13 = sadd.s32 1, %s9
    $region7: #{distill_klml3_forward.9} parent=1 // loop_footer_branch
      %8 = sbr.rel target = $region3
    $region8: #{distill_klml3_forward.9} parent=1 // loop_exit
      _
    %2019 = vsyncpa [#allocation3], 1
    %s2020 = scalar_lea.sflag [#allocation3], 1
    %2021 = vsyncpa %s2020, 1

</llo_original>
